<compile_context>
chip_gen: v7x
topology: tpu7x:2x2x1
jax: 0.10.0
libtpu: 0.0.40
codegen_flags: <defaults>
</compile_context>

<pallas_src>
import functools

import jax
import jax.numpy as jnp
import numpy as np
from jax.experimental import pallas as pl
from jax.experimental.pallas import tpu as pltpu


def _lstm_kernel(n_layers, hid, tt_block,
                 maxlen_ref,                      # SMEM (1,) scalar prefetch
                 len_ref, gx_ref, whh_ref, wih_ref, b_ref,
                 out_ref, hN_ref, cN_ref,
                 h_scr, c_scr):
    """One grid step == one block of `tt_block` time steps of the masked LSTM."""
    tb = pl.program_id(0)

    @pl.when(tb == 0)
    def _init():
        h_scr[...] = jnp.zeros_like(h_scr)
        c_scr[...] = jnp.zeros_like(c_scr)

    t0 = tb * tt_block

    @pl.when(t0 >= maxlen_ref[0])
    def _skip():
        # every sequence already ended: padded output is all zeros, state frozen
        out_ref[...] = jnp.zeros_like(out_ref)

    @pl.when(t0 < maxlen_ref[0])
    def _compute():
        lengths = len_ref[...]                                    # (B, 1) int32
        whh = [whh_ref[l] for l in range(n_layers)]               # (H, 4H) each
        wih = [wih_ref[l - 1] for l in range(1, n_layers)]        # (H, 4H) each
        bias = [b_ref[l - 1] for l in range(1, n_layers)]         # (1, 4H) each

        # Load state once per block; carry in vregs across the unrolled steps.
        hs = [h_scr[l] for l in range(n_layers)]                  # (B, H) each
        cs = [c_scr[l] for l in range(n_layers)]

        def cell(gates, l, active):
            """Standard LSTM cell + packed-sequence (frozen-state) masking."""
            i_g = jax.nn.sigmoid(gates[:, 0 * hid:1 * hid])
            f_g = jax.nn.sigmoid(gates[:, 1 * hid:2 * hid])
            g_g = jnp.tanh(gates[:, 2 * hid:3 * hid])
            o_g = jax.nn.sigmoid(gates[:, 3 * hid:4 * hid])
            c_new = f_g * cs[l] + i_g * g_g
            h_new = o_g * jnp.tanh(c_new)
            hs[l] = jnp.where(active, h_new, hs[l])
            cs[l] = jnp.where(active, c_new, cs[l])
            return hs[l]

        for tt in range(tt_block):                # static, fully unrolled
            active = lengths > (t0 + tt)          # (B, 1) bool mask

            # layer 0: x @ W_ih[0] + bias was hoisted out of the kernel, only
            # the recurrent matmul remains per step.
            gates0 = gx_ref[:, tt, :] + jnp.dot(
                hs[0], whh[0], preferred_element_type=jnp.float32)
            h_top = cell(gates0, 0, active)

            # layers 1..L-1: two lane-aligned matmuls on register-resident h.
            for l in range(1, n_layers):
                gates = (jnp.dot(h_top, wih[l - 1],
                                 preferred_element_type=jnp.float32)
                         + jnp.dot(hs[l], whh[l],
                                   preferred_element_type=jnp.float32)
                         + bias[l - 1])
                h_top = cell(gates, l, active)

            # padded (unpacked) output: zeros past each sequence end
            out_ref[:, tt, :] = jnp.where(active, h_top, 0.0)

        # write state back to scratch once per block
        for l in range(n_layers):
            h_scr[l] = hs[l]
            c_scr[l] = cs[l]

    @pl.when(tb == pl.num_programs(0) - 1)
    def _finalize():
        hN_ref[...] = h_scr[...]
        cN_ref[...] = c_scr[...]


def encoder_forward(tokens, emb_table, w_ih, w_hh, bias, time_block=8):
    """tokens: (B, T) int32 (0 = pad).  emb_table: (V, H).
    w_ih / w_hh: (L, H, 4H) (torch weights pre-transposed).  bias: (L, 1, 4H)
    (b_ih + b_hh).  Returns (output (B, T, H), (h_n (L, B, H), c_n (L, B, H)))."""
    B, T = tokens.shape
    L, H, H4 = w_ih.shape

    # inputs_length = sum(x > 0) along seq dim (same as the torch module)
    lengths = jnp.sum(tokens > 0, axis=1).astype(jnp.int32)          # (B,)
    maxlen = jnp.max(lengths).astype(jnp.int32).reshape(1)           # (1,) -> SMEM
    len2d = lengths.reshape(B, 1)

    # embedding lookup; dropout == identity in eval mode
    x = jnp.take(emb_table, tokens, axis=0).astype(jnp.float32)      # (B, T, H)

    # Hoisted layer-0 input projection: one (B*T, H) x (H, 4H) MXU GEMM with
    # the bias pre-added, so the recurrence only needs h @ W_hh[0] per step.
    gx = jnp.dot(x.reshape(B * T, H), w_ih[0],
                 precision=jax.lax.Precision.HIGHEST)
    gx = gx.reshape(B, T, H4) + bias[0]                              # (B, T, 4H)

    TT = time_block
    n_blk = pl.cdiv(T, TT)
    T_pad = n_blk * TT
    if T_pad != T:                     # padded steps are masked off in-kernel
        gx = jnp.pad(gx, ((0, 0), (0, T_pad - T), (0, 0)))

    # Recurrent-layer (>=1) input weights / biases; dummy block if L == 1
    if L > 1:
        wih_rest = w_ih[1:]                                          # (L-1, H, 4H)
        b_rest = bias[1:]                                            # (L-1, 1, 4H)
    else:
        wih_rest = jnp.zeros((1, H, H4), jnp.float32)
        b_rest = jnp.zeros((1, 1, H4), jnp.float32)
    Lw = wih_rest.shape[0]

    kernel = functools.partial(_lstm_kernel, L, H, TT)
    out, h_n, c_n = pl.pallas_call(
        kernel,
        out_shape=(jax.ShapeDtypeStruct((B, T_pad, H), jnp.float32),
                   jax.ShapeDtypeStruct((L, B, H), jnp.float32),
                   jax.ShapeDtypeStruct((L, B, H), jnp.float32)),
        grid_spec=pltpu.PrefetchScalarGridSpec(
            num_scalar_prefetch=1,                 # max(lengths) -> SMEM
            grid=(n_blk,),
            in_specs=[
                pl.BlockSpec((B, 1), lambda tb, ml: (0, 0)),              # lengths
                pl.BlockSpec((B, TT, H4), lambda tb, ml: (0, tb, 0)),     # layer-0 gates blk
                pl.BlockSpec((L, H, H4), lambda tb, ml: (0, 0, 0)),       # W_hh, all layers
                pl.BlockSpec((Lw, H, H4), lambda tb, ml: (0, 0, 0)),      # W_ih, layers>=1
                pl.BlockSpec((Lw, 1, H4), lambda tb, ml: (0, 0, 0)),      # bias, layers>=1
            ],
            out_specs=[
                pl.BlockSpec((B, TT, H), lambda tb, ml: (0, tb, 0)),      # output, batch-major
                pl.BlockSpec((L, B, H), lambda tb, ml: (0, 0, 0)),        # h_n
                pl.BlockSpec((L, B, H), lambda tb, ml: (0, 0, 0)),        # c_n
            ],
            scratch_shapes=[pltpu.VMEM((L, B, H), jnp.float32),           # h state
                            pltpu.VMEM((L, B, H), jnp.float32)]),         # c state
        compiler_params=pltpu.CompilerParams(
            dimension_semantics=("arbitrary",)),   # time recurrence
    )(maxlen, len2d, gx, w_hh, wih_rest, b_rest)

    if T_pad != T:
        out = out[:, :T, :]
    return out, (h_n, c_n)


def _sigmoid(x):
    return 1.0 / (1.0 + np.exp(-x))


def ref_encoder(tokens, emb_table, w_ih, w_hh, bias):
    """Pure numpy reference of the same semantics (masked packed LSTM)."""
    tokens = np.asarray(tokens)
    emb_table = np.asarray(emb_table)
    w_ih = np.asarray(w_ih); w_hh = np.asarray(w_hh); bias = np.asarray(bias)
    B, T = tokens.shape
    L, H, _ = w_ih.shape
    lengths = (tokens > 0).sum(axis=1)
    x = emb_table[tokens].astype(np.float32)
    h = np.zeros((L, B, H), np.float32)
    c = np.zeros((L, B, H), np.float32)
    out = np.zeros((B, T, H), np.float32)
    for t in range(T):
        mask = (lengths > t).astype(np.float32)[:, None]
        inp = x[:, t, :]
        for l in range(L):
            gates = inp @ w_ih[l] + h[l] @ w_hh[l] + bias[l]
            i = _sigmoid(gates[:, :H]); f = _sigmoid(gates[:, H:2 * H])
            g = np.tanh(gates[:, 2 * H:3 * H]); o = _sigmoid(gates[:, 3 * H:])
            cn = f * c[l] + i * g
            hn = o * np.tanh(cn)
            h[l] = mask * hn + (1.0 - mask) * h[l]
            c[l] = mask * cn + (1.0 - mask) * c[l]
            inp = h[l]
        out[:, t, :] = mask * h[L - 1]
    return out, h, c


if __name__ == "__main__":
    vocab_size, hid_dim, n_layers = 50, 32, 2
    B, T = 2, 24

    key = jax.random.PRNGKey(0)
    k_emb, k_tok, k_wih, k_whh, k_bih, k_bhh = jax.random.split(key, 6)

    # deterministic parameter init (PyTorch-style shapes, then glue-transposed)
    emb_table = jax.random.normal(k_emb, (vocab_size, hid_dim), jnp.float32)
    bound = 1.0 / np.sqrt(hid_dim)
    # torch LSTMCell weight_ih: (4H, in), weight_hh: (4H, H); transpose to (in, 4H)
    w_ih_t = jax.random.uniform(k_wih, (n_layers, 4 * hid_dim, hid_dim),
                                jnp.float32, -bound, bound)
    w_hh_t = jax.random.uniform(k_whh, (n_layers, 4 * hid_dim, hid_dim),
                                jnp.float32, -bound, bound)
    b_ih = jax.random.uniform(k_bih, (n_layers, 4 * hid_dim), jnp.float32, -bound, bound)
    b_hh = jax.random.uniform(k_bhh, (n_layers, 4 * hid_dim), jnp.float32, -bound, bound)

    w_ih = jnp.transpose(w_ih_t, (0, 2, 1))                 # (L, H, 4H)
    w_hh = jnp.transpose(w_hh_t, (0, 2, 1))                 # (L, H, 4H)
    bias = (b_ih + b_hh).reshape(n_layers, 1, 4 * hid_dim)  # (L, 1, 4H)

    # tokens: 0 is the padding id.  Lengths 12 and 5 with T=24 / TT=8 exercise
    # the per-step mask, the frozen-state carry across time blocks, and the
    # fully-skipped final time block (t >= max length).
    tokens = jax.random.randint(k_tok, (B, T), 1, vocab_size, dtype=jnp.int32)
    tokens = tokens.at[0, 12:].set(0)   # row 0 has length 12
    tokens = tokens.at[1, 5:].set(0)    # row 1 has length 5

    output, (h_n, c_n) = encoder_forward(tokens, emb_table, w_ih, w_hh, bias)
    output = jax.block_until_ready(output)
    h_n = jax.block_until_ready(h_n)
    c_n = jax.block_until_ready(c_n)

    ref_out, ref_h, ref_c = ref_encoder(tokens, emb_table, w_ih, w_hh, bias)
    assert np.allclose(np.asarray(output), ref_out, atol=1e-4, rtol=1e-4)
    assert np.allclose(np.asarray(h_n), ref_h, atol=1e-4, rtol=1e-4)
    assert np.allclose(np.asarray(c_n), ref_c, atol=1e-4, rtol=1e-4)

    print("KERNEL_OK")
</pallas_src>

<mosaic_0001>
module attributes {stable_mosaic.version = 11 : i64} {
  func.func @_lstm_kernel(%arg0: i32, %arg1: memref<1xi32, #tpu.memory_space<smem>>, %arg2: memref<2x1xi32, #tpu.memory_space<vmem>>, %arg3: memref<2x8x128xf32, #tpu.memory_space<vmem>>, %arg4: memref<2x32x128xf32, #tpu.memory_space<vmem>>, %arg5: memref<1x32x128xf32, #tpu.memory_space<vmem>>, %arg6: memref<1x1x128xf32, #tpu.memory_space<vmem>>, %arg7: memref<2x8x32xf32, #tpu.memory_space<vmem>>, %arg8: memref<2x2x32xf32, #tpu.memory_space<vmem>>, %arg9: memref<2x2x32xf32, #tpu.memory_space<vmem>>, %arg10: memref<2x2x32xf32, #tpu.memory_space<vmem>>, %arg11: memref<2x2x32xf32, #tpu.memory_space<vmem>>) attributes {dimension_semantics = [#tpu.dimension_semantics<arbitrary>], iteration_bounds = array<i64: 3>, scalar_prefetch = 1 : i64, scratch_operands = 2 : i64, tpu.core_type = #tpu.core_type<tc>, window_params = [{pipeline_mode = #tpu.pipeline_mode<synchronous>, transform_indices = @transform_0, window_bounds = array<i64: 2, 1>}, {transform_indices = @transform_1, window_bounds = array<i64: 2, 8, 128>}, {pipeline_mode = #tpu.pipeline_mode<synchronous>, transform_indices = @transform_2, window_bounds = array<i64: 2, 32, 128>}, {pipeline_mode = #tpu.pipeline_mode<synchronous>, transform_indices = @transform_3, window_bounds = array<i64: 1, 32, 128>}, {pipeline_mode = #tpu.pipeline_mode<synchronous>, transform_indices = @transform_4, window_bounds = array<i64: 1, 1, 128>}, {transform_indices = @transform_5, window_bounds = array<i64: 2, 8, 32>}, {pipeline_mode = #tpu.pipeline_mode<synchronous>, transform_indices = @transform_6, window_bounds = array<i64: 2, 2, 32>}, {pipeline_mode = #tpu.pipeline_mode<synchronous>, transform_indices = @transform_7, window_bounds = array<i64: 2, 2, 32>}]} {
    %c0_i32 = arith.constant 0 : i32
    %0 = arith.cmpi eq, %arg0, %c0_i32 : i32
    %1 = arith.extui %0 : i1 to i32
    %c0_i32_0 = arith.constant 0 : i32
    %2 = arith.cmpi ne, %1, %c0_i32_0 : i32
    scf.if %2 {
      %cst = arith.constant 0.000000e+00 : f32
      %15 = vector.broadcast %cst : f32 to vector<2x2x32xf32>
      %c0_5 = arith.constant 0 : index
      %c0_6 = arith.constant 0 : index
      %c0_7 = arith.constant 0 : index
      %16 = vector.load %arg10[%c0_5, %c0_6, %c0_7] : memref<2x2x32xf32, #tpu.memory_space<vmem>>, vector<2x2x32xf32>
      tpu.vector_store %arg10[%c0_5, %c0_6, %c0_7], %15 {strides = array<i32>} : memref<2x2x32xf32, #tpu.memory_space<vmem>>, vector<2x2x32xf32>,
      %cst_8 = arith.constant 0.000000e+00 : f32
      %17 = vector.broadcast %cst_8 : f32 to vector<2x2x32xf32>
      %c0_9 = arith.constant 0 : index
      %c0_10 = arith.constant 0 : index
      %c0_11 = arith.constant 0 : index
      %18 = vector.load %arg11[%c0_9, %c0_10, %c0_11] : memref<2x2x32xf32, #tpu.memory_space<vmem>>, vector<2x2x32xf32>
      tpu.vector_store %arg11[%c0_9, %c0_10, %c0_11], %17 {strides = array<i32>} : memref<2x2x32xf32, #tpu.memory_space<vmem>>, vector<2x2x32xf32>,
    } else {
    }
    %c8_i32 = arith.constant 8 : i32
    %3 = arith.muli %arg0, %c8_i32 : i32
    %c0 = arith.constant 0 : index
    %4 = memref.load %arg1[%c0] : memref<1xi32, #tpu.memory_space<smem>>
    %5 = arith.cmpi sge, %3, %4 : i32
    %6 = arith.extui %5 : i1 to i32
    %c0_i32_1 = arith.constant 0 : i32
    %7 = arith.cmpi ne, %6, %c0_i32_1 : i32
    scf.if %7 {
      %cst = arith.constant 0.000000e+00 : f32
      %15 = vector.broadcast %cst : f32 to vector<2x8x32xf32>
      %c0_5 = arith.constant 0 : index
      %c0_6 = arith.constant 0 : index
      %c0_7 = arith.constant 0 : index
      %16 = vector.load %arg7[%c0_5, %c0_6, %c0_7] : memref<2x8x32xf32, #tpu.memory_space<vmem>>, vector<2x8x32xf32>
      tpu.vector_store %arg7[%c0_5, %c0_6, %c0_7], %15 {strides = array<i32>} : memref<2x8x32xf32, #tpu.memory_space<vmem>>, vector<2x8x32xf32>,
    } else {
    }
    %c0_2 = arith.constant 0 : index
    %8 = memref.load %arg1[%c0_2] : memref<1xi32, #tpu.memory_space<smem>>
    %9 = arith.cmpi slt, %3, %8 : i32
    %10 = arith.extui %9 : i1 to i32
    %c0_i32_3 = arith.constant 0 : i32
    %11 = arith.cmpi ne, %10, %c0_i32_3 : i32
    scf.if %11 {
      %c0_5 = arith.constant 0 : index
      %c0_6 = arith.constant 0 : index
      %15 = vector.load %arg2[%c0_5, %c0_6] : memref<2x1xi32, #tpu.memory_space<vmem>>, vector<2x1xi32>
      %c0_7 = arith.constant 0 : index
      %c0_8 = arith.constant 0 : index
      %c0_9 = arith.constant 0 : index
      %16 = vector.load %arg4[%c0_7, %c0_8, %c0_9] : memref<2x32x128xf32, #tpu.memory_space<vmem>>, vector<1x32x128xf32>
      %17 = vector.shape_cast %16 : vector<1x32x128xf32> to vector<32x128xf32>
      %c1 = arith.constant 1 : index
      %c0_10 = arith.constant 0 : index
      %c0_11 = arith.constant 0 : index
      %18 = vector.load %arg4[%c1, %c0_10, %c0_11] : memref<2x32x128xf32, #tpu.memory_space<vmem>>, vector<1x32x128xf32>
      %19 = vector.shape_cast %18 : vector<1x32x128xf32> to vector<32x128xf32>
      %c0_12 = arith.constant 0 : index
      %c0_13 = arith.constant 0 : index
      %c0_14 = arith.constant 0 : index
      %20 = vector.load %arg5[%c0_12, %c0_13, %c0_14] : memref<1x32x128xf32, #tpu.memory_space<vmem>>, vector<1x32x128xf32>
      %21 = vector.shape_cast %20 : vector<1x32x128xf32> to vector<32x128xf32>
      %c0_15 = arith.constant 0 : index
      %c0_16 = arith.constant 0 : index
      %c0_17 = arith.constant 0 : index
      %22 = vector.load %arg6[%c0_15, %c0_16, %c0_17] : memref<1x1x128xf32, #tpu.memory_space<vmem>>, vector<1x1x128xf32>
      %23 = vector.shape_cast %22 : vector<1x1x128xf32> to vector<1x128xf32>
      %c0_18 = arith.constant 0 : index
      %c0_19 = arith.constant 0 : index
      %c0_20 = arith.constant 0 : index
      %24 = vector.load %arg10[%c0_18, %c0_19, %c0_20] : memref<2x2x32xf32, #tpu.memory_space<vmem>>, vector<1x2x32xf32>
      %25 = vector.shape_cast %24 : vector<1x2x32xf32> to vector<2x32xf32>
      %c1_21 = arith.constant 1 : index
      %c0_22 = arith.constant 0 : index
      %c0_23 = arith.constant 0 : index
      %26 = vector.load %arg10[%c1_21, %c0_22, %c0_23] : memref<2x2x32xf32, #tpu.memory_space<vmem>>, vector<1x2x32xf32>
      %27 = vector.shape_cast %26 : vector<1x2x32xf32> to vector<2x32xf32>
      %c0_24 = arith.constant 0 : index
      %c0_25 = arith.constant 0 : index
      %c0_26 = arith.constant 0 : index
      %28 = vector.load %arg11[%c0_24, %c0_25, %c0_26] : memref<2x2x32xf32, #tpu.memory_space<vmem>>, vector<1x2x32xf32>
      %29 = vector.shape_cast %28 : vector<1x2x32xf32> to vector<2x32xf32>
      %c1_27 = arith.constant 1 : index
      %c0_28 = arith.constant 0 : index
      %c0_29 = arith.constant 0 : index
      %30 = vector.load %arg11[%c1_27, %c0_28, %c0_29] : memref<2x2x32xf32, #tpu.memory_space<vmem>>, vector<1x2x32xf32>
      %31 = vector.shape_cast %30 : vector<1x2x32xf32> to vector<2x32xf32>
      %c0_i32_30 = arith.constant 0 : i32
      %32 = arith.addi %3, %c0_i32_30 : i32
      %33 = vector.broadcast %32 : i32 to vector<2x1xi32>
      %34 = arith.cmpi sgt, %15, %33 : vector<2x1xi32>
      %c0_31 = arith.constant 0 : index
      %c0_32 = arith.constant 0 : index
      %c0_33 = arith.constant 0 : index
      %35 = vector.load %arg3[%c0_31, %c0_32, %c0_33] : memref<2x8x128xf32, #tpu.memory_space<vmem>>, vector<2x1x128xf32>
      %36 = vector.shape_cast %35 : vector<2x1x128xf32> to vector<2x128xf32>
      %cst = arith.constant dense<0.000000e+00> : vector<2x128xf32>
      %37 = tpu.matmul %25, %17, %cst {dimension_numbers = #tpu.dot_dimension_numbers<[1], [0], [0], [1], [0, 0, 1, 1], [], []>} : vector<2x32xf32>, vector<32x128xf32>, vector<2x128xf32> -> vector<2x128xf32>
      %38 = arith.addf %36, %37 : vector<2x128xf32>
      %39 = vector.extract_strided_slice %38 {offsets = [0, 0], sizes = [2, 32], strides = [1, 1]} : vector<2x128xf32> to vector<2x32xf32>
      %40 = arith.negf %39 : vector<2x32xf32>
      %41 = math.exp %40 : vector<2x32xf32>
      %cst_34 = arith.constant 1.000000e+00 : f32
      %42 = vector.broadcast %cst_34 : f32 to vector<2x32xf32>
      %43 = arith.addf %42, %41 : vector<2x32xf32>
      %44 = arith.divf %42, %43 : vector<2x32xf32>
      %45 = vector.extract_strided_slice %38 {offsets = [0, 32], sizes = [2, 32], strides = [1, 1]} : vector<2x128xf32> to vector<2x32xf32>
      %46 = arith.negf %45 : vector<2x32xf32>
      %47 = math.exp %46 : vector<2x32xf32>
      %cst_35 = arith.constant 1.000000e+00 : f32
      %48 = vector.broadcast %cst_35 : f32 to vector<2x32xf32>
      %49 = arith.addf %48, %47 : vector<2x32xf32>
      %50 = arith.divf %48, %49 : vector<2x32xf32>
      %51 = vector.extract_strided_slice %38 {offsets = [0, 64], sizes = [2, 32], strides = [1, 1]} : vector<2x128xf32> to vector<2x32xf32>
      %52 = math.tanh %51 : vector<2x32xf32>
      %53 = vector.extract_strided_slice %38 {offsets = [0, 96], sizes = [2, 32], strides = [1, 1]} : vector<2x128xf32> to vector<2x32xf32>
      %54 = arith.negf %53 : vector<2x32xf32>
      %55 = math.exp %54 : vector<2x32xf32>
      %cst_36 = arith.constant 1.000000e+00 : f32
      %56 = vector.broadcast %cst_36 : f32 to vector<2x32xf32>
      %57 = arith.addf %56, %55 : vector<2x32xf32>
      %58 = arith.divf %56, %57 : vector<2x32xf32>
      %59 = arith.mulf %50, %29 : vector<2x32xf32>
      %60 = arith.mulf %44, %52 : vector<2x32xf32>
      %61 = arith.addf %59, %60 : vector<2x32xf32>
      %62 = math.tanh %61 : vector<2x32xf32>
      %63 = arith.mulf %58, %62 : vector<2x32xf32>
      %64 = vector.shape_cast %34 : vector<2x1xi1> to vector<2x1xi1>
      %65 = vector.broadcast %64 : vector<2x1xi1> to vector<2x32xi1>
      %66 = arith.select %65, %63, %25 : vector<2x32xi1>, vector<2x32xf32>
      %67 = vector.shape_cast %34 : vector<2x1xi1> to vector<2x1xi1>
      %68 = vector.broadcast %67 : vector<2x1xi1> to vector<2x32xi1>
      %69 = arith.select %68, %61, %29 : vector<2x32xi1>, vector<2x32xf32>
      %cst_37 = arith.constant dense<0.000000e+00> : vector<2x128xf32>
      %70 = tpu.matmul %66, %21, %cst_37 {dimension_numbers = #tpu.dot_dimension_numbers<[1], [0], [0], [1], [0, 0, 1, 1], [], []>} : vector<2x32xf32>, vector<32x128xf32>, vector<2x128xf32> -> vector<2x128xf32>
      %cst_38 = arith.constant dense<0.000000e+00> : vector<2x128xf32>
      %71 = tpu.matmul %27, %19, %cst_38 {dimension_numbers = #tpu.dot_dimension_numbers<[1], [0], [0], [1], [0, 0, 1, 1], [], []>} : vector<2x32xf32>, vector<32x128xf32>, vector<2x128xf32> -> vector<2x128xf32>
      %72 = arith.addf %70, %71 : vector<2x128xf32>
      %73 = vector.broadcast %23 : vector<1x128xf32> to vector<2x128xf32>
      %74 = arith.addf %72, %73 : vector<2x128xf32>
      %75 = vector.extract_strided_slice %74 {offsets = [0, 0], sizes = [2, 32], strides = [1, 1]} : vector<2x128xf32> to vector<2x32xf32>
      %76 = arith.negf %75 : vector<2x32xf32>
      %77 = math.exp %76 : vector<2x32xf32>
      %cst_39 = arith.constant 1.000000e+00 : f32
      %78 = vector.broadcast %cst_39 : f32 to vector<2x32xf32>
      %79 = arith.addf %78, %77 : vector<2x32xf32>
      %80 = arith.divf %78, %79 : vector<2x32xf32>
      %81 = vector.extract_strided_slice %74 {offsets = [0, 32], sizes = [2, 32], strides = [1, 1]} : vector<2x128xf32> to vector<2x32xf32>
      %82 = arith.negf %81 : vector<2x32xf32>
      %83 = math.exp %82 : vector<2x32xf32>
      %cst_40 = arith.constant 1.000000e+00 : f32
      %84 = vector.broadcast %cst_40 : f32 to vector<2x32xf32>
      %85 = arith.addf %84, %83 : vector<2x32xf32>
      %86 = arith.divf %84, %85 : vector<2x32xf32>
      %87 = vector.extract_strided_slice %74 {offsets = [0, 64], sizes = [2, 32], strides = [1, 1]} : vector<2x128xf32> to vector<2x32xf32>
      %88 = math.tanh %87 : vector<2x32xf32>
      %89 = vector.extract_strided_slice %74 {offsets = [0, 96], sizes = [2, 32], strides = [1, 1]} : vector<2x128xf32> to vector<2x32xf32>
      %90 = arith.negf %89 : vector<2x32xf32>
      %91 = math.exp %90 : vector<2x32xf32>
      %cst_41 = arith.constant 1.000000e+00 : f32
      %92 = vector.broadcast %cst_41 : f32 to vector<2x32xf32>
      %93 = arith.addf %92, %91 : vector<2x32xf32>
      %94 = arith.divf %92, %93 : vector<2x32xf32>
      %95 = arith.mulf %86, %31 : vector<2x32xf32>
      %96 = arith.mulf %80, %88 : vector<2x32xf32>
      %97 = arith.addf %95, %96 : vector<2x32xf32>
      %98 = math.tanh %97 : vector<2x32xf32>
      %99 = arith.mulf %94, %98 : vector<2x32xf32>
      %100 = vector.shape_cast %34 : vector<2x1xi1> to vector<2x1xi1>
      %101 = vector.broadcast %100 : vector<2x1xi1> to vector<2x32xi1>
      %102 = arith.select %101, %99, %27 : vector<2x32xi1>, vector<2x32xf32>
      %103 = vector.shape_cast %34 : vector<2x1xi1> to vector<2x1xi1>
      %104 = vector.broadcast %103 : vector<2x1xi1> to vector<2x32xi1>
      %105 = arith.select %104, %97, %31 : vector<2x32xi1>, vector<2x32xf32>
      %cst_42 = arith.constant 0.000000e+00 : f32
      %106 = vector.shape_cast %34 : vector<2x1xi1> to vector<2x1xi1>
      %107 = vector.broadcast %106 : vector<2x1xi1> to vector<2x32xi1>
      %108 = vector.broadcast %cst_42 : f32 to vector<2x32xf32>
      %109 = arith.select %107, %102, %108 : vector<2x32xi1>, vector<2x32xf32>
      %c0_43 = arith.constant 0 : index
      %c0_44 = arith.constant 0 : index
      %c0_45 = arith.constant 0 : index
      %110 = vector.load %arg7[%c0_43, %c0_44, %c0_45] : memref<2x8x32xf32, #tpu.memory_space<vmem>>, vector<2x1x32xf32>
      %111 = vector.shape_cast %110 : vector<2x1x32xf32> to vector<2x32xf32>
      %112 = vector.shape_cast %109 : vector<2x32xf32> to vector<2x1x32xf32>
      tpu.vector_store %arg7[%c0_43, %c0_44, %c0_45], %112 {strides = array<i32>} : memref<2x8x32xf32, #tpu.memory_space<vmem>>, vector<2x1x32xf32>,
      %c1_i32 = arith.constant 1 : i32
      %113 = arith.addi %3, %c1_i32 : i32
      %114 = vector.broadcast %113 : i32 to vector<2x1xi32>
      %115 = arith.cmpi sgt, %15, %114 : vector<2x1xi32>
      %c0_46 = arith.constant 0 : index
      %c1_47 = arith.constant 1 : index
      %c0_48 = arith.constant 0 : index
      %116 = vector.load %arg3[%c0_46, %c1_47, %c0_48] : memref<2x8x128xf32, #tpu.memory_space<vmem>>, vector<2x1x128xf32>
      %117 = vector.shape_cast %116 : vector<2x1x128xf32> to vector<2x128xf32>
      %cst_49 = arith.constant dense<0.000000e+00> : vector<2x128xf32>
      %118 = tpu.matmul %66, %17, %cst_49 {dimension_numbers = #tpu.dot_dimension_numbers<[1], [0], [0], [1], [0, 0, 1, 1], [], []>} : vector<2x32xf32>, vector<32x128xf32>, vector<2x128xf32> -> vector<2x128xf32>
      %119 = arith.addf %117, %118 : vector<2x128xf32>
      %120 = vector.extract_strided_slice %119 {offsets = [0, 0], sizes = [2, 32], strides = [1, 1]} : vector<2x128xf32> to vector<2x32xf32>
      %121 = arith.negf %120 : vector<2x32xf32>
      %122 = math.exp %121 : vector<2x32xf32>
      %cst_50 = arith.constant 1.000000e+00 : f32
      %123 = vector.broadcast %cst_50 : f32 to vector<2x32xf32>
      %124 = arith.addf %123, %122 : vector<2x32xf32>
      %125 = arith.divf %123, %124 : vector<2x32xf32>
      %126 = vector.extract_strided_slice %119 {offsets = [0, 32], sizes = [2, 32], strides = [1, 1]} : vector<2x128xf32> to vector<2x32xf32>
      %127 = arith.negf %126 : vector<2x32xf32>
      %128 = math.exp %127 : vector<2x32xf32>
      %cst_51 = arith.constant 1.000000e+00 : f32
      %129 = vector.broadcast %cst_51 : f32 to vector<2x32xf32>
      %130 = arith.addf %129, %128 : vector<2x32xf32>
      %131 = arith.divf %129, %130 : vector<2x32xf32>
      %132 = vector.extract_strided_slice %119 {offsets = [0, 64], sizes = [2, 32], strides = [1, 1]} : vector<2x128xf32> to vector<2x32xf32>
      %133 = math.tanh %132 : vector<2x32xf32>
      %134 = vector.extract_strided_slice %119 {offsets = [0, 96], sizes = [2, 32], strides = [1, 1]} : vector<2x128xf32> to vector<2x32xf32>
      %135 = arith.negf %134 : vector<2x32xf32>
      %136 = math.exp %135 : vector<2x32xf32>
      %cst_52 = arith.constant 1.000000e+00 : f32
      %137 = vector.broadcast %cst_52 : f32 to vector<2x32xf32>
      %138 = arith.addf %137, %136 : vector<2x32xf32>
      %139 = arith.divf %137, %138 : vector<2x32xf32>
      %140 = arith.mulf %131, %69 : vector<2x32xf32>
      %141 = arith.mulf %125, %133 : vector<2x32xf32>
      %142 = arith.addf %140, %141 : vector<2x32xf32>
      %143 = math.tanh %142 : vector<2x32xf32>
      %144 = arith.mulf %139, %143 : vector<2x32xf32>
      %145 = vector.shape_cast %115 : vector<2x1xi1> to vector<2x1xi1>
      %146 = vector.broadcast %145 : vector<2x1xi1> to vector<2x32xi1>
      %147 = arith.select %146, %144, %66 : vector<2x32xi1>, vector<2x32xf32>
      %148 = vector.shape_cast %115 : vector<2x1xi1> to vector<2x1xi1>
      %149 = vector.broadcast %148 : vector<2x1xi1> to vector<2x32xi1>
      %150 = arith.select %149, %142, %69 : vector<2x32xi1>, vector<2x32xf32>
      %cst_53 = arith.constant dense<0.000000e+00> : vector<2x128xf32>
      %151 = tpu.matmul %147, %21, %cst_53 {dimension_numbers = #tpu.dot_dimension_numbers<[1], [0], [0], [1], [0, 0, 1, 1], [], []>} : vector<2x32xf32>, vector<32x128xf32>, vector<2x128xf32> -> vector<2x128xf32>
      %cst_54 = arith.constant dense<0.000000e+00> : vector<2x128xf32>
      %152 = tpu.matmul %102, %19, %cst_54 {dimension_numbers = #tpu.dot_dimension_numbers<[1], [0], [0], [1], [0, 0, 1, 1], [], []>} : vector<2x32xf32>, vector<32x128xf32>, vector<2x128xf32> -> vector<2x128xf32>
      %153 = arith.addf %151, %152 : vector<2x128xf32>
      %154 = vector.broadcast %23 : vector<1x128xf32> to vector<2x128xf32>
      %155 = arith.addf %153, %154 : vector<2x128xf32>
      %156 = vector.extract_strided_slice %155 {offsets = [0, 0], sizes = [2, 32], strides = [1, 1]} : vector<2x128xf32> to vector<2x32xf32>
      %157 = arith.negf %156 : vector<2x32xf32>
      %158 = math.exp %157 : vector<2x32xf32>
      %cst_55 = arith.constant 1.000000e+00 : f32
      %159 = vector.broadcast %cst_55 : f32 to vector<2x32xf32>
      %160 = arith.addf %159, %158 : vector<2x32xf32>
      %161 = arith.divf %159, %160 : vector<2x32xf32>
      %162 = vector.extract_strided_slice %155 {offsets = [0, 32], sizes = [2, 32], strides = [1, 1]} : vector<2x128xf32> to vector<2x32xf32>
      %163 = arith.negf %162 : vector<2x32xf32>
      %164 = math.exp %163 : vector<2x32xf32>
      %cst_56 = arith.constant 1.000000e+00 : f32
      %165 = vector.broadcast %cst_56 : f32 to vector<2x32xf32>
      %166 = arith.addf %165, %164 : vector<2x32xf32>
      %167 = arith.divf %165, %166 : vector<2x32xf32>
      %168 = vector.extract_strided_slice %155 {offsets = [0, 64], sizes = [2, 32], strides = [1, 1]} : vector<2x128xf32> to vector<2x32xf32>
      %169 = math.tanh %168 : vector<2x32xf32>
      %170 = vector.extract_strided_slice %155 {offsets = [0, 96], sizes = [2, 32], strides = [1, 1]} : vector<2x128xf32> to vector<2x32xf32>
      %171 = arith.negf %170 : vector<2x32xf32>
      %172 = math.exp %171 : vector<2x32xf32>
      %cst_57 = arith.constant 1.000000e+00 : f32
      %173 = vector.broadcast %cst_57 : f32 to vector<2x32xf32>
      %174 = arith.addf %173, %172 : vector<2x32xf32>
      %175 = arith.divf %173, %174 : vector<2x32xf32>
      %176 = arith.mulf %167, %105 : vector<2x32xf32>
      %177 = arith.mulf %161, %169 : vector<2x32xf32>
      %178 = arith.addf %176, %177 : vector<2x32xf32>
      %179 = math.tanh %178 : vector<2x32xf32>
      %180 = arith.mulf %175, %179 : vector<2x32xf32>
      %181 = vector.shape_cast %115 : vector<2x1xi1> to vector<2x1xi1>
      %182 = vector.broadcast %181 : vector<2x1xi1> to vector<2x32xi1>
      %183 = arith.select %182, %180, %102 : vector<2x32xi1>, vector<2x32xf32>
      %184 = vector.shape_cast %115 : vector<2x1xi1> to vector<2x1xi1>
      %185 = vector.broadcast %184 : vector<2x1xi1> to vector<2x32xi1>
      %186 = arith.select %185, %178, %105 : vector<2x32xi1>, vector<2x32xf32>
      %cst_58 = arith.constant 0.000000e+00 : f32
      %187 = vector.shape_cast %115 : vector<2x1xi1> to vector<2x1xi1>
      %188 = vector.broadcast %187 : vector<2x1xi1> to vector<2x32xi1>
      %189 = vector.broadcast %cst_58 : f32 to vector<2x32xf32>
      %190 = arith.select %188, %183, %189 : vector<2x32xi1>, vector<2x32xf32>
      %c0_59 = arith.constant 0 : index
      %c1_60 = arith.constant 1 : index
      %c0_61 = arith.constant 0 : index
      %191 = vector.load %arg7[%c0_59, %c1_60, %c0_61] : memref<2x8x32xf32, #tpu.memory_space<vmem>>, vector<2x1x32xf32>
      %192 = vector.shape_cast %191 : vector<2x1x32xf32> to vector<2x32xf32>
      %193 = vector.shape_cast %190 : vector<2x32xf32> to vector<2x1x32xf32>
      tpu.vector_store %arg7[%c0_59, %c1_60, %c0_61], %193 {strides = array<i32>} : memref<2x8x32xf32, #tpu.memory_space<vmem>>, vector<2x1x32xf32>,
      %c2_i32_62 = arith.constant 2 : i32
      %194 = arith.addi %3, %c2_i32_62 : i32
      %195 = vector.broadcast %194 : i32 to vector<2x1xi32>
      %196 = arith.cmpi sgt, %15, %195 : vector<2x1xi32>
      %c0_63 = arith.constant 0 : index
      %c2 = arith.constant 2 : index
      %c0_64 = arith.constant 0 : index
      %197 = vector.load %arg3[%c0_63, %c2, %c0_64] : memref<2x8x128xf32, #tpu.memory_space<vmem>>, vector<2x1x128xf32>
      %198 = vector.shape_cast %197 : vector<2x1x128xf32> to vector<2x128xf32>
      %cst_65 = arith.constant dense<0.000000e+00> : vector<2x128xf32>
      %199 = tpu.matmul %147, %17, %cst_65 {dimension_numbers = #tpu.dot_dimension_numbers<[1], [0], [0], [1], [0, 0, 1, 1], [], []>} : vector<2x32xf32>, vector<32x128xf32>, vector<2x128xf32> -> vector<2x128xf32>
      %200 = arith.addf %198, %199 : vector<2x128xf32>
      %201 = vector.extract_strided_slice %200 {offsets = [0, 0], sizes = [2, 32], strides = [1, 1]} : vector<2x128xf32> to vector<2x32xf32>
      %202 = arith.negf %201 : vector<2x32xf32>
      %203 = math.exp %202 : vector<2x32xf32>
      %cst_66 = arith.constant 1.000000e+00 : f32
      %204 = vector.broadcast %cst_66 : f32 to vector<2x32xf32>
      %205 = arith.addf %204, %203 : vector<2x32xf32>
      %206 = arith.divf %204, %205 : vector<2x32xf32>
      %207 = vector.extract_strided_slice %200 {offsets = [0, 32], sizes = [2, 32], strides = [1, 1]} : vector<2x128xf32> to vector<2x32xf32>
      %208 = arith.negf %207 : vector<2x32xf32>
      %209 = math.exp %208 : vector<2x32xf32>
      %cst_67 = arith.constant 1.000000e+00 : f32
      %210 = vector.broadcast %cst_67 : f32 to vector<2x32xf32>
      %211 = arith.addf %210, %209 : vector<2x32xf32>
      %212 = arith.divf %210, %211 : vector<2x32xf32>
      %213 = vector.extract_strided_slice %200 {offsets = [0, 64], sizes = [2, 32], strides = [1, 1]} : vector<2x128xf32> to vector<2x32xf32>
      %214 = math.tanh %213 : vector<2x32xf32>
      %215 = vector.extract_strided_slice %200 {offsets = [0, 96], sizes = [2, 32], strides = [1, 1]} : vector<2x128xf32> to vector<2x32xf32>
      %216 = arith.negf %215 : vector<2x32xf32>
      %217 = math.exp %216 : vector<2x32xf32>
      %cst_68 = arith.constant 1.000000e+00 : f32
      %218 = vector.broadcast %cst_68 : f32 to vector<2x32xf32>
      %219 = arith.addf %218, %217 : vector<2x32xf32>
      %220 = arith.divf %218, %219 : vector<2x32xf32>
      %221 = arith.mulf %212, %150 : vector<2x32xf32>
      %222 = arith.mulf %206, %214 : vector<2x32xf32>
      %223 = arith.addf %221, %222 : vector<2x32xf32>
      %224 = math.tanh %223 : vector<2x32xf32>
      %225 = arith.mulf %220, %224 : vector<2x32xf32>
      %226 = vector.shape_cast %196 : vector<2x1xi1> to vector<2x1xi1>
      %227 = vector.broadcast %226 : vector<2x1xi1> to vector<2x32xi1>
      %228 = arith.select %227, %225, %147 : vector<2x32xi1>, vector<2x32xf32>
      %229 = vector.shape_cast %196 : vector<2x1xi1> to vector<2x1xi1>
      %230 = vector.broadcast %229 : vector<2x1xi1> to vector<2x32xi1>
      %231 = arith.select %230, %223, %150 : vector<2x32xi1>, vector<2x32xf32>
      %cst_69 = arith.constant dense<0.000000e+00> : vector<2x128xf32>
      %232 = tpu.matmul %228, %21, %cst_69 {dimension_numbers = #tpu.dot_dimension_numbers<[1], [0], [0], [1], [0, 0, 1, 1], [], []>} : vector<2x32xf32>, vector<32x128xf32>, vector<2x128xf32> -> vector<2x128xf32>
      %cst_70 = arith.constant dense<0.000000e+00> : vector<2x128xf32>
      %233 = tpu.matmul %183, %19, %cst_70 {dimension_numbers = #tpu.dot_dimension_numbers<[1], [0], [0], [1], [0, 0, 1, 1], [], []>} : vector<2x32xf32>, vector<32x128xf32>, vector<2x128xf32> -> vector<2x128xf32>
      %234 = arith.addf %232, %233 : vector<2x128xf32>
      %235 = vector.broadcast %23 : vector<1x128xf32> to vector<2x128xf32>
      %236 = arith.addf %234, %235 : vector<2x128xf32>
      %237 = vector.extract_strided_slice %236 {offsets = [0, 0], sizes = [2, 32], strides = [1, 1]} : vector<2x128xf32> to vector<2x32xf32>
      %238 = arith.negf %237 : vector<2x32xf32>
      %239 = math.exp %238 : vector<2x32xf32>
      %cst_71 = arith.constant 1.000000e+00 : f32
      %240 = vector.broadcast %cst_71 : f32 to vector<2x32xf32>
      %241 = arith.addf %240, %239 : vector<2x32xf32>
      %242 = arith.divf %240, %241 : vector<2x32xf32>
      %243 = vector.extract_strided_slice %236 {offsets = [0, 32], sizes = [2, 32], strides = [1, 1]} : vector<2x128xf32> to vector<2x32xf32>
      %244 = arith.negf %243 : vector<2x32xf32>
      %245 = math.exp %244 : vector<2x32xf32>
      %cst_72 = arith.constant 1.000000e+00 : f32
      %246 = vector.broadcast %cst_72 : f32 to vector<2x32xf32>
      %247 = arith.addf %246, %245 : vector<2x32xf32>
      %248 = arith.divf %246, %247 : vector<2x32xf32>
      %249 = vector.extract_strided_slice %236 {offsets = [0, 64], sizes = [2, 32], strides = [1, 1]} : vector<2x128xf32> to vector<2x32xf32>
      %250 = math.tanh %249 : vector<2x32xf32>
      %251 = vector.extract_strided_slice %236 {offsets = [0, 96], sizes = [2, 32], strides = [1, 1]} : vector<2x128xf32> to vector<2x32xf32>
      %252 = arith.negf %251 : vector<2x32xf32>
      %253 = math.exp %252 : vector<2x32xf32>
      %cst_73 = arith.constant 1.000000e+00 : f32
      %254 = vector.broadcast %cst_73 : f32 to vector<2x32xf32>
      %255 = arith.addf %254, %253 : vector<2x32xf32>
      %256 = arith.divf %254, %255 : vector<2x32xf32>
      %257 = arith.mulf %248, %186 : vector<2x32xf32>
      %258 = arith.mulf %242, %250 : vector<2x32xf32>
      %259 = arith.addf %257, %258 : vector<2x32xf32>
      %260 = math.tanh %259 : vector<2x32xf32>
      %261 = arith.mulf %256, %260 : vector<2x32xf32>
      %262 = vector.shape_cast %196 : vector<2x1xi1> to vector<2x1xi1>
      %263 = vector.broadcast %262 : vector<2x1xi1> to vector<2x32xi1>
      %264 = arith.select %263, %261, %183 : vector<2x32xi1>, vector<2x32xf32>
      %265 = vector.shape_cast %196 : vector<2x1xi1> to vector<2x1xi1>
      %266 = vector.broadcast %265 : vector<2x1xi1> to vector<2x32xi1>
      %267 = arith.select %266, %259, %186 : vector<2x32xi1>, vector<2x32xf32>
      %cst_74 = arith.constant 0.000000e+00 : f32
      %268 = vector.shape_cast %196 : vector<2x1xi1> to vector<2x1xi1>
      %269 = vector.broadcast %268 : vector<2x1xi1> to vector<2x32xi1>
      %270 = vector.broadcast %cst_74 : f32 to vector<2x32xf32>
      %271 = arith.select %269, %264, %270 : vector<2x32xi1>, vector<2x32xf32>
      %c0_75 = arith.constant 0 : index
      %c2_76 = arith.constant 2 : index
      %c0_77 = arith.constant 0 : index
      %272 = vector.load %arg7[%c0_75, %c2_76, %c0_77] : memref<2x8x32xf32, #tpu.memory_space<vmem>>, vector<2x1x32xf32>
      %273 = vector.shape_cast %272 : vector<2x1x32xf32> to vector<2x32xf32>
      %274 = vector.shape_cast %271 : vector<2x32xf32> to vector<2x1x32xf32>
      tpu.vector_store %arg7[%c0_75, %c2_76, %c0_77], %274 {strides = array<i32>} : memref<2x8x32xf32, #tpu.memory_space<vmem>>, vector<2x1x32xf32>,
      %c3_i32 = arith.constant 3 : i32
      %275 = arith.addi %3, %c3_i32 : i32
      %276 = vector.broadcast %275 : i32 to vector<2x1xi32>
      %277 = arith.cmpi sgt, %15, %276 : vector<2x1xi32>
      %c0_78 = arith.constant 0 : index
      %c3 = arith.constant 3 : index
      %c0_79 = arith.constant 0 : index
      %278 = vector.load %arg3[%c0_78, %c3, %c0_79] : memref<2x8x128xf32, #tpu.memory_space<vmem>>, vector<2x1x128xf32>
      %279 = vector.shape_cast %278 : vector<2x1x128xf32> to vector<2x128xf32>
      %cst_80 = arith.constant dense<0.000000e+00> : vector<2x128xf32>
      %280 = tpu.matmul %228, %17, %cst_80 {dimension_numbers = #tpu.dot_dimension_numbers<[1], [0], [0], [1], [0, 0, 1, 1], [], []>} : vector<2x32xf32>, vector<32x128xf32>, vector<2x128xf32> -> vector<2x128xf32>
      %281 = arith.addf %279, %280 : vector<2x128xf32>
      %282 = vector.extract_strided_slice %281 {offsets = [0, 0], sizes = [2, 32], strides = [1, 1]} : vector<2x128xf32> to vector<2x32xf32>
      %283 = arith.negf %282 : vector<2x32xf32>
      %284 = math.exp %283 : vector<2x32xf32>
      %cst_81 = arith.constant 1.000000e+00 : f32
      %285 = vector.broadcast %cst_81 : f32 to vector<2x32xf32>
      %286 = arith.addf %285, %284 : vector<2x32xf32>
      %287 = arith.divf %285, %286 : vector<2x32xf32>
      %288 = vector.extract_strided_slice %281 {offsets = [0, 32], sizes = [2, 32], strides = [1, 1]} : vector<2x128xf32> to vector<2x32xf32>
      %289 = arith.negf %288 : vector<2x32xf32>
      %290 = math.exp %289 : vector<2x32xf32>
      %cst_82 = arith.constant 1.000000e+00 : f32
      %291 = vector.broadcast %cst_82 : f32 to vector<2x32xf32>
      %292 = arith.addf %291, %290 : vector<2x32xf32>
      %293 = arith.divf %291, %292 : vector<2x32xf32>
      %294 = vector.extract_strided_slice %281 {offsets = [0, 64], sizes = [2, 32], strides = [1, 1]} : vector<2x128xf32> to vector<2x32xf32>
      %295 = math.tanh %294 : vector<2x32xf32>
      %296 = vector.extract_strided_slice %281 {offsets = [0, 96], sizes = [2, 32], strides = [1, 1]} : vector<2x128xf32> to vector<2x32xf32>
      %297 = arith.negf %296 : vector<2x32xf32>
      %298 = math.exp %297 : vector<2x32xf32>
      %cst_83 = arith.constant 1.000000e+00 : f32
      %299 = vector.broadcast %cst_83 : f32 to vector<2x32xf32>
      %300 = arith.addf %299, %298 : vector<2x32xf32>
      %301 = arith.divf %299, %300 : vector<2x32xf32>
      %302 = arith.mulf %293, %231 : vector<2x32xf32>
      %303 = arith.mulf %287, %295 : vector<2x32xf32>
      %304 = arith.addf %302, %303 : vector<2x32xf32>
      %305 = math.tanh %304 : vector<2x32xf32>
      %306 = arith.mulf %301, %305 : vector<2x32xf32>
      %307 = vector.shape_cast %277 : vector<2x1xi1> to vector<2x1xi1>
      %308 = vector.broadcast %307 : vector<2x1xi1> to vector<2x32xi1>
      %309 = arith.select %308, %306, %228 : vector<2x32xi1>, vector<2x32xf32>
      %310 = vector.shape_cast %277 : vector<2x1xi1> to vector<2x1xi1>
      %311 = vector.broadcast %310 : vector<2x1xi1> to vector<2x32xi1>
      %312 = arith.select %311, %304, %231 : vector<2x32xi1>, vector<2x32xf32>
      %cst_84 = arith.constant dense<0.000000e+00> : vector<2x128xf32>
      %313 = tpu.matmul %309, %21, %cst_84 {dimension_numbers = #tpu.dot_dimension_numbers<[1], [0], [0], [1], [0, 0, 1, 1], [], []>} : vector<2x32xf32>, vector<32x128xf32>, vector<2x128xf32> -> vector<2x128xf32>
      %cst_85 = arith.constant dense<0.000000e+00> : vector<2x128xf32>
      %314 = tpu.matmul %264, %19, %cst_85 {dimension_numbers = #tpu.dot_dimension_numbers<[1], [0], [0], [1], [0, 0, 1, 1], [], []>} : vector<2x32xf32>, vector<32x128xf32>, vector<2x128xf32> -> vector<2x128xf32>
      %315 = arith.addf %313, %314 : vector<2x128xf32>
      %316 = vector.broadcast %23 : vector<1x128xf32> to vector<2x128xf32>
      %317 = arith.addf %315, %316 : vector<2x128xf32>
      %318 = vector.extract_strided_slice %317 {offsets = [0, 0], sizes = [2, 32], strides = [1, 1]} : vector<2x128xf32> to vector<2x32xf32>
      %319 = arith.negf %318 : vector<2x32xf32>
      %320 = math.exp %319 : vector<2x32xf32>
      %cst_86 = arith.constant 1.000000e+00 : f32
      %321 = vector.broadcast %cst_86 : f32 to vector<2x32xf32>
      %322 = arith.addf %321, %320 : vector<2x32xf32>
      %323 = arith.divf %321, %322 : vector<2x32xf32>
      %324 = vector.extract_strided_slice %317 {offsets = [0, 32], sizes = [2, 32], strides = [1, 1]} : vector<2x128xf32> to vector<2x32xf32>
      %325 = arith.negf %324 : vector<2x32xf32>
      %326 = math.exp %325 : vector<2x32xf32>
      %cst_87 = arith.constant 1.000000e+00 : f32
      %327 = vector.broadcast %cst_87 : f32 to vector<2x32xf32>
      %328 = arith.addf %327, %326 : vector<2x32xf32>
      %329 = arith.divf %327, %328 : vector<2x32xf32>
      %330 = vector.extract_strided_slice %317 {offsets = [0, 64], sizes = [2, 32], strides = [1, 1]} : vector<2x128xf32> to vector<2x32xf32>
      %331 = math.tanh %330 : vector<2x32xf32>
      %332 = vector.extract_strided_slice %317 {offsets = [0, 96], sizes = [2, 32], strides = [1, 1]} : vector<2x128xf32> to vector<2x32xf32>
      %333 = arith.negf %332 : vector<2x32xf32>
      %334 = math.exp %333 : vector<2x32xf32>
      %cst_88 = arith.constant 1.000000e+00 : f32
      %335 = vector.broadcast %cst_88 : f32 to vector<2x32xf32>
      %336 = arith.addf %335, %334 : vector<2x32xf32>
      %337 = arith.divf %335, %336 : vector<2x32xf32>
      %338 = arith.mulf %329, %267 : vector<2x32xf32>
      %339 = arith.mulf %323, %331 : vector<2x32xf32>
      %340 = arith.addf %338, %339 : vector<2x32xf32>
      %341 = math.tanh %340 : vector<2x32xf32>
      %342 = arith.mulf %337, %341 : vector<2x32xf32>
      %343 = vector.shape_cast %277 : vector<2x1xi1> to vector<2x1xi1>
      %344 = vector.broadcast %343 : vector<2x1xi1> to vector<2x32xi1>
      %345 = arith.select %344, %342, %264 : vector<2x32xi1>, vector<2x32xf32>
      %346 = vector.shape_cast %277 : vector<2x1xi1> to vector<2x1xi1>
      %347 = vector.broadcast %346 : vector<2x1xi1> to vector<2x32xi1>
      %348 = arith.select %347, %340, %267 : vector<2x32xi1>, vector<2x32xf32>
      %cst_89 = arith.constant 0.000000e+00 : f32
      %349 = vector.shape_cast %277 : vector<2x1xi1> to vector<2x1xi1>
      %350 = vector.broadcast %349 : vector<2x1xi1> to vector<2x32xi1>
      %351 = vector.broadcast %cst_89 : f32 to vector<2x32xf32>
      %352 = arith.select %350, %345, %351 : vector<2x32xi1>, vector<2x32xf32>
      %c0_90 = arith.constant 0 : index
      %c3_91 = arith.constant 3 : index
      %c0_92 = arith.constant 0 : index
      %353 = vector.load %arg7[%c0_90, %c3_91, %c0_92] : memref<2x8x32xf32, #tpu.memory_space<vmem>>, vector<2x1x32xf32>
      %354 = vector.shape_cast %353 : vector<2x1x32xf32> to vector<2x32xf32>
      %355 = vector.shape_cast %352 : vector<2x32xf32> to vector<2x1x32xf32>
      tpu.vector_store %arg7[%c0_90, %c3_91, %c0_92], %355 {strides = array<i32>} : memref<2x8x32xf32, #tpu.memory_space<vmem>>, vector<2x1x32xf32>,
      %c4_i32 = arith.constant 4 : i32
      %356 = arith.addi %3, %c4_i32 : i32
      %357 = vector.broadcast %356 : i32 to vector<2x1xi32>
      %358 = arith.cmpi sgt, %15, %357 : vector<2x1xi32>
      %c0_93 = arith.constant 0 : index
      %c4 = arith.constant 4 : index
      %c0_94 = arith.constant 0 : index
      %359 = vector.load %arg3[%c0_93, %c4, %c0_94] : memref<2x8x128xf32, #tpu.memory_space<vmem>>, vector<2x1x128xf32>
      %360 = vector.shape_cast %359 : vector<2x1x128xf32> to vector<2x128xf32>
      %cst_95 = arith.constant dense<0.000000e+00> : vector<2x128xf32>
      %361 = tpu.matmul %309, %17, %cst_95 {dimension_numbers = #tpu.dot_dimension_numbers<[1], [0], [0], [1], [0, 0, 1, 1], [], []>} : vector<2x32xf32>, vector<32x128xf32>, vector<2x128xf32> -> vector<2x128xf32>
      %362 = arith.addf %360, %361 : vector<2x128xf32>
      %363 = vector.extract_strided_slice %362 {offsets = [0, 0], sizes = [2, 32], strides = [1, 1]} : vector<2x128xf32> to vector<2x32xf32>
      %364 = arith.negf %363 : vector<2x32xf32>
      %365 = math.exp %364 : vector<2x32xf32>
      %cst_96 = arith.constant 1.000000e+00 : f32
      %366 = vector.broadcast %cst_96 : f32 to vector<2x32xf32>
      %367 = arith.addf %366, %365 : vector<2x32xf32>
      %368 = arith.divf %366, %367 : vector<2x32xf32>
      %369 = vector.extract_strided_slice %362 {offsets = [0, 32], sizes = [2, 32], strides = [1, 1]} : vector<2x128xf32> to vector<2x32xf32>
      %370 = arith.negf %369 : vector<2x32xf32>
      %371 = math.exp %370 : vector<2x32xf32>
      %cst_97 = arith.constant 1.000000e+00 : f32
      %372 = vector.broadcast %cst_97 : f32 to vector<2x32xf32>
      %373 = arith.addf %372, %371 : vector<2x32xf32>
      %374 = arith.divf %372, %373 : vector<2x32xf32>
      %375 = vector.extract_strided_slice %362 {offsets = [0, 64], sizes = [2, 32], strides = [1, 1]} : vector<2x128xf32> to vector<2x32xf32>
      %376 = math.tanh %375 : vector<2x32xf32>
      %377 = vector.extract_strided_slice %362 {offsets = [0, 96], sizes = [2, 32], strides = [1, 1]} : vector<2x128xf32> to vector<2x32xf32>
      %378 = arith.negf %377 : vector<2x32xf32>
      %379 = math.exp %378 : vector<2x32xf32>
      %cst_98 = arith.constant 1.000000e+00 : f32
      %380 = vector.broadcast %cst_98 : f32 to vector<2x32xf32>
      %381 = arith.addf %380, %379 : vector<2x32xf32>
      %382 = arith.divf %380, %381 : vector<2x32xf32>
      %383 = arith.mulf %374, %312 : vector<2x32xf32>
      %384 = arith.mulf %368, %376 : vector<2x32xf32>
      %385 = arith.addf %383, %384 : vector<2x32xf32>
      %386 = math.tanh %385 : vector<2x32xf32>
      %387 = arith.mulf %382, %386 : vector<2x32xf32>
      %388 = vector.shape_cast %358 : vector<2x1xi1> to vector<2x1xi1>
      %389 = vector.broadcast %388 : vector<2x1xi1> to vector<2x32xi1>
      %390 = arith.select %389, %387, %309 : vector<2x32xi1>, vector<2x32xf32>
      %391 = vector.shape_cast %358 : vector<2x1xi1> to vector<2x1xi1>
      %392 = vector.broadcast %391 : vector<2x1xi1> to vector<2x32xi1>
      %393 = arith.select %392, %385, %312 : vector<2x32xi1>, vector<2x32xf32>
      %cst_99 = arith.constant dense<0.000000e+00> : vector<2x128xf32>
      %394 = tpu.matmul %390, %21, %cst_99 {dimension_numbers = #tpu.dot_dimension_numbers<[1], [0], [0], [1], [0, 0, 1, 1], [], []>} : vector<2x32xf32>, vector<32x128xf32>, vector<2x128xf32> -> vector<2x128xf32>
      %cst_100 = arith.constant dense<0.000000e+00> : vector<2x128xf32>
      %395 = tpu.matmul %345, %19, %cst_100 {dimension_numbers = #tpu.dot_dimension_numbers<[1], [0], [0], [1], [0, 0, 1, 1], [], []>} : vector<2x32xf32>, vector<32x128xf32>, vector<2x128xf32> -> vector<2x128xf32>
      %396 = arith.addf %394, %395 : vector<2x128xf32>
      %397 = vector.broadcast %23 : vector<1x128xf32> to vector<2x128xf32>
      %398 = arith.addf %396, %397 : vector<2x128xf32>
      %399 = vector.extract_strided_slice %398 {offsets = [0, 0], sizes = [2, 32], strides = [1, 1]} : vector<2x128xf32> to vector<2x32xf32>
      %400 = arith.negf %399 : vector<2x32xf32>
      %401 = math.exp %400 : vector<2x32xf32>
      %cst_101 = arith.constant 1.000000e+00 : f32
      %402 = vector.broadcast %cst_101 : f32 to vector<2x32xf32>
      %403 = arith.addf %402, %401 : vector<2x32xf32>
      %404 = arith.divf %402, %403 : vector<2x32xf32>
      %405 = vector.extract_strided_slice %398 {offsets = [0, 32], sizes = [2, 32], strides = [1, 1]} : vector<2x128xf32> to vector<2x32xf32>
      %406 = arith.negf %405 : vector<2x32xf32>
      %407 = math.exp %406 : vector<2x32xf32>
      %cst_102 = arith.constant 1.000000e+00 : f32
      %408 = vector.broadcast %cst_102 : f32 to vector<2x32xf32>
      %409 = arith.addf %408, %407 : vector<2x32xf32>
      %410 = arith.divf %408, %409 : vector<2x32xf32>
      %411 = vector.extract_strided_slice %398 {offsets = [0, 64], sizes = [2, 32], strides = [1, 1]} : vector<2x128xf32> to vector<2x32xf32>
      %412 = math.tanh %411 : vector<2x32xf32>
      %413 = vector.extract_strided_slice %398 {offsets = [0, 96], sizes = [2, 32], strides = [1, 1]} : vector<2x128xf32> to vector<2x32xf32>
      %414 = arith.negf %413 : vector<2x32xf32>
      %415 = math.exp %414 : vector<2x32xf32>
      %cst_103 = arith.constant 1.000000e+00 : f32
      %416 = vector.broadcast %cst_103 : f32 to vector<2x32xf32>
      %417 = arith.addf %416, %415 : vector<2x32xf32>
      %418 = arith.divf %416, %417 : vector<2x32xf32>
      %419 = arith.mulf %410, %348 : vector<2x32xf32>
      %420 = arith.mulf %404, %412 : vector<2x32xf32>
      %421 = arith.addf %419, %420 : vector<2x32xf32>
      %422 = math.tanh %421 : vector<2x32xf32>
      %423 = arith.mulf %418, %422 : vector<2x32xf32>
      %424 = vector.shape_cast %358 : vector<2x1xi1> to vector<2x1xi1>
      %425 = vector.broadcast %424 : vector<2x1xi1> to vector<2x32xi1>
      %426 = arith.select %425, %423, %345 : vector<2x32xi1>, vector<2x32xf32>
      %427 = vector.shape_cast %358 : vector<2x1xi1> to vector<2x1xi1>
      %428 = vector.broadcast %427 : vector<2x1xi1> to vector<2x32xi1>
      %429 = arith.select %428, %421, %348 : vector<2x32xi1>, vector<2x32xf32>
      %cst_104 = arith.constant 0.000000e+00 : f32
      %430 = vector.shape_cast %358 : vector<2x1xi1> to vector<2x1xi1>
      %431 = vector.broadcast %430 : vector<2x1xi1> to vector<2x32xi1>
      %432 = vector.broadcast %cst_104 : f32 to vector<2x32xf32>
      %433 = arith.select %431, %426, %432 : vector<2x32xi1>, vector<2x32xf32>
      %c0_105 = arith.constant 0 : index
      %c4_106 = arith.constant 4 : index
      %c0_107 = arith.constant 0 : index
      %434 = vector.load %arg7[%c0_105, %c4_106, %c0_107] : memref<2x8x32xf32, #tpu.memory_space<vmem>>, vector<2x1x32xf32>
      %435 = vector.shape_cast %434 : vector<2x1x32xf32> to vector<2x32xf32>
      %436 = vector.shape_cast %433 : vector<2x32xf32> to vector<2x1x32xf32>
      tpu.vector_store %arg7[%c0_105, %c4_106, %c0_107], %436 {strides = array<i32>} : memref<2x8x32xf32, #tpu.memory_space<vmem>>, vector<2x1x32xf32>,
      %c5_i32 = arith.constant 5 : i32
      %437 = arith.addi %3, %c5_i32 : i32
      %438 = vector.broadcast %437 : i32 to vector<2x1xi32>
      %439 = arith.cmpi sgt, %15, %438 : vector<2x1xi32>
      %c0_108 = arith.constant 0 : index
      %c5 = arith.constant 5 : index
      %c0_109 = arith.constant 0 : index
      %440 = vector.load %arg3[%c0_108, %c5, %c0_109] : memref<2x8x128xf32, #tpu.memory_space<vmem>>, vector<2x1x128xf32>
      %441 = vector.shape_cast %440 : vector<2x1x128xf32> to vector<2x128xf32>
      %cst_110 = arith.constant dense<0.000000e+00> : vector<2x128xf32>
      %442 = tpu.matmul %390, %17, %cst_110 {dimension_numbers = #tpu.dot_dimension_numbers<[1], [0], [0], [1], [0, 0, 1, 1], [], []>} : vector<2x32xf32>, vector<32x128xf32>, vector<2x128xf32> -> vector<2x128xf32>
      %443 = arith.addf %441, %442 : vector<2x128xf32>
      %444 = vector.extract_strided_slice %443 {offsets = [0, 0], sizes = [2, 32], strides = [1, 1]} : vector<2x128xf32> to vector<2x32xf32>
      %445 = arith.negf %444 : vector<2x32xf32>
      %446 = math.exp %445 : vector<2x32xf32>
      %cst_111 = arith.constant 1.000000e+00 : f32
      %447 = vector.broadcast %cst_111 : f32 to vector<2x32xf32>
      %448 = arith.addf %447, %446 : vector<2x32xf32>
      %449 = arith.divf %447, %448 : vector<2x32xf32>
      %450 = vector.extract_strided_slice %443 {offsets = [0, 32], sizes = [2, 32], strides = [1, 1]} : vector<2x128xf32> to vector<2x32xf32>
      %451 = arith.negf %450 : vector<2x32xf32>
      %452 = math.exp %451 : vector<2x32xf32>
      %cst_112 = arith.constant 1.000000e+00 : f32
      %453 = vector.broadcast %cst_112 : f32 to vector<2x32xf32>
      %454 = arith.addf %453, %452 : vector<2x32xf32>
      %455 = arith.divf %453, %454 : vector<2x32xf32>
      %456 = vector.extract_strided_slice %443 {offsets = [0, 64], sizes = [2, 32], strides = [1, 1]} : vector<2x128xf32> to vector<2x32xf32>
      %457 = math.tanh %456 : vector<2x32xf32>
      %458 = vector.extract_strided_slice %443 {offsets = [0, 96], sizes = [2, 32], strides = [1, 1]} : vector<2x128xf32> to vector<2x32xf32>
      %459 = arith.negf %458 : vector<2x32xf32>
      %460 = math.exp %459 : vector<2x32xf32>
      %cst_113 = arith.constant 1.000000e+00 : f32
      %461 = vector.broadcast %cst_113 : f32 to vector<2x32xf32>
      %462 = arith.addf %461, %460 : vector<2x32xf32>
      %463 = arith.divf %461, %462 : vector<2x32xf32>
      %464 = arith.mulf %455, %393 : vector<2x32xf32>
      %465 = arith.mulf %449, %457 : vector<2x32xf32>
      %466 = arith.addf %464, %465 : vector<2x32xf32>
      %467 = math.tanh %466 : vector<2x32xf32>
      %468 = arith.mulf %463, %467 : vector<2x32xf32>
      %469 = vector.shape_cast %439 : vector<2x1xi1> to vector<2x1xi1>
      %470 = vector.broadcast %469 : vector<2x1xi1> to vector<2x32xi1>
      %471 = arith.select %470, %468, %390 : vector<2x32xi1>, vector<2x32xf32>
      %472 = vector.shape_cast %439 : vector<2x1xi1> to vector<2x1xi1>
      %473 = vector.broadcast %472 : vector<2x1xi1> to vector<2x32xi1>
      %474 = arith.select %473, %466, %393 : vector<2x32xi1>, vector<2x32xf32>
      %cst_114 = arith.constant dense<0.000000e+00> : vector<2x128xf32>
      %475 = tpu.matmul %471, %21, %cst_114 {dimension_numbers = #tpu.dot_dimension_numbers<[1], [0], [0], [1], [0, 0, 1, 1], [], []>} : vector<2x32xf32>, vector<32x128xf32>, vector<2x128xf32> -> vector<2x128xf32>
      %cst_115 = arith.constant dense<0.000000e+00> : vector<2x128xf32>
      %476 = tpu.matmul %426, %19, %cst_115 {dimension_numbers = #tpu.dot_dimension_numbers<[1], [0], [0], [1], [0, 0, 1, 1], [], []>} : vector<2x32xf32>, vector<32x128xf32>, vector<2x128xf32> -> vector<2x128xf32>
      %477 = arith.addf %475, %476 : vector<2x128xf32>
      %478 = vector.broadcast %23 : vector<1x128xf32> to vector<2x128xf32>
      %479 = arith.addf %477, %478 : vector<2x128xf32>
      %480 = vector.extract_strided_slice %479 {offsets = [0, 0], sizes = [2, 32], strides = [1, 1]} : vector<2x128xf32> to vector<2x32xf32>
      %481 = arith.negf %480 : vector<2x32xf32>
      %482 = math.exp %481 : vector<2x32xf32>
      %cst_116 = arith.constant 1.000000e+00 : f32
      %483 = vector.broadcast %cst_116 : f32 to vector<2x32xf32>
      %484 = arith.addf %483, %482 : vector<2x32xf32>
      %485 = arith.divf %483, %484 : vector<2x32xf32>
      %486 = vector.extract_strided_slice %479 {offsets = [0, 32], sizes = [2, 32], strides = [1, 1]} : vector<2x128xf32> to vector<2x32xf32>
      %487 = arith.negf %486 : vector<2x32xf32>
      %488 = math.exp %487 : vector<2x32xf32>
      %cst_117 = arith.constant 1.000000e+00 : f32
      %489 = vector.broadcast %cst_117 : f32 to vector<2x32xf32>
      %490 = arith.addf %489, %488 : vector<2x32xf32>
      %491 = arith.divf %489, %490 : vector<2x32xf32>
      %492 = vector.extract_strided_slice %479 {offsets = [0, 64], sizes = [2, 32], strides = [1, 1]} : vector<2x128xf32> to vector<2x32xf32>
      %493 = math.tanh %492 : vector<2x32xf32>
      %494 = vector.extract_strided_slice %479 {offsets = [0, 96], sizes = [2, 32], strides = [1, 1]} : vector<2x128xf32> to vector<2x32xf32>
      %495 = arith.negf %494 : vector<2x32xf32>
      %496 = math.exp %495 : vector<2x32xf32>
      %cst_118 = arith.constant 1.000000e+00 : f32
      %497 = vector.broadcast %cst_118 : f32 to vector<2x32xf32>
      %498 = arith.addf %497, %496 : vector<2x32xf32>
      %499 = arith.divf %497, %498 : vector<2x32xf32>
      %500 = arith.mulf %491, %429 : vector<2x32xf32>
      %501 = arith.mulf %485, %493 : vector<2x32xf32>
      %502 = arith.addf %500, %501 : vector<2x32xf32>
      %503 = math.tanh %502 : vector<2x32xf32>
      %504 = arith.mulf %499, %503 : vector<2x32xf32>
      %505 = vector.shape_cast %439 : vector<2x1xi1> to vector<2x1xi1>
      %506 = vector.broadcast %505 : vector<2x1xi1> to vector<2x32xi1>
      %507 = arith.select %506, %504, %426 : vector<2x32xi1>, vector<2x32xf32>
      %508 = vector.shape_cast %439 : vector<2x1xi1> to vector<2x1xi1>
      %509 = vector.broadcast %508 : vector<2x1xi1> to vector<2x32xi1>
      %510 = arith.select %509, %502, %429 : vector<2x32xi1>, vector<2x32xf32>
      %cst_119 = arith.constant 0.000000e+00 : f32
      %511 = vector.shape_cast %439 : vector<2x1xi1> to vector<2x1xi1>
      %512 = vector.broadcast %511 : vector<2x1xi1> to vector<2x32xi1>
      %513 = vector.broadcast %cst_119 : f32 to vector<2x32xf32>
      %514 = arith.select %512, %507, %513 : vector<2x32xi1>, vector<2x32xf32>
      %c0_120 = arith.constant 0 : index
      %c5_121 = arith.constant 5 : index
      %c0_122 = arith.constant 0 : index
      %515 = vector.load %arg7[%c0_120, %c5_121, %c0_122] : memref<2x8x32xf32, #tpu.memory_space<vmem>>, vector<2x1x32xf32>
      %516 = vector.shape_cast %515 : vector<2x1x32xf32> to vector<2x32xf32>
      %517 = vector.shape_cast %514 : vector<2x32xf32> to vector<2x1x32xf32>
      tpu.vector_store %arg7[%c0_120, %c5_121, %c0_122], %517 {strides = array<i32>} : memref<2x8x32xf32, #tpu.memory_space<vmem>>, vector<2x1x32xf32>,
      %c6_i32 = arith.constant 6 : i32
      %518 = arith.addi %3, %c6_i32 : i32
      %519 = vector.broadcast %518 : i32 to vector<2x1xi32>
      %520 = arith.cmpi sgt, %15, %519 : vector<2x1xi32>
      %c0_123 = arith.constant 0 : index
      %c6 = arith.constant 6 : index
      %c0_124 = arith.constant 0 : index
      %521 = vector.load %arg3[%c0_123, %c6, %c0_124] : memref<2x8x128xf32, #tpu.memory_space<vmem>>, vector<2x1x128xf32>
      %522 = vector.shape_cast %521 : vector<2x1x128xf32> to vector<2x128xf32>
      %cst_125 = arith.constant dense<0.000000e+00> : vector<2x128xf32>
      %523 = tpu.matmul %471, %17, %cst_125 {dimension_numbers = #tpu.dot_dimension_numbers<[1], [0], [0], [1], [0, 0, 1, 1], [], []>} : vector<2x32xf32>, vector<32x128xf32>, vector<2x128xf32> -> vector<2x128xf32>
      %524 = arith.addf %522, %523 : vector<2x128xf32>
      %525 = vector.extract_strided_slice %524 {offsets = [0, 0], sizes = [2, 32], strides = [1, 1]} : vector<2x128xf32> to vector<2x32xf32>
      %526 = arith.negf %525 : vector<2x32xf32>
      %527 = math.exp %526 : vector<2x32xf32>
      %cst_126 = arith.constant 1.000000e+00 : f32
      %528 = vector.broadcast %cst_126 : f32 to vector<2x32xf32>
      %529 = arith.addf %528, %527 : vector<2x32xf32>
      %530 = arith.divf %528, %529 : vector<2x32xf32>
      %531 = vector.extract_strided_slice %524 {offsets = [0, 32], sizes = [2, 32], strides = [1, 1]} : vector<2x128xf32> to vector<2x32xf32>
      %532 = arith.negf %531 : vector<2x32xf32>
      %533 = math.exp %532 : vector<2x32xf32>
      %cst_127 = arith.constant 1.000000e+00 : f32
      %534 = vector.broadcast %cst_127 : f32 to vector<2x32xf32>
      %535 = arith.addf %534, %533 : vector<2x32xf32>
      %536 = arith.divf %534, %535 : vector<2x32xf32>
      %537 = vector.extract_strided_slice %524 {offsets = [0, 64], sizes = [2, 32], strides = [1, 1]} : vector<2x128xf32> to vector<2x32xf32>
      %538 = math.tanh %537 : vector<2x32xf32>
      %539 = vector.extract_strided_slice %524 {offsets = [0, 96], sizes = [2, 32], strides = [1, 1]} : vector<2x128xf32> to vector<2x32xf32>
      %540 = arith.negf %539 : vector<2x32xf32>
      %541 = math.exp %540 : vector<2x32xf32>
      %cst_128 = arith.constant 1.000000e+00 : f32
      %542 = vector.broadcast %cst_128 : f32 to vector<2x32xf32>
      %543 = arith.addf %542, %541 : vector<2x32xf32>
      %544 = arith.divf %542, %543 : vector<2x32xf32>
      %545 = arith.mulf %536, %474 : vector<2x32xf32>
      %546 = arith.mulf %530, %538 : vector<2x32xf32>
      %547 = arith.addf %545, %546 : vector<2x32xf32>
      %548 = math.tanh %547 : vector<2x32xf32>
      %549 = arith.mulf %544, %548 : vector<2x32xf32>
      %550 = vector.shape_cast %520 : vector<2x1xi1> to vector<2x1xi1>
      %551 = vector.broadcast %550 : vector<2x1xi1> to vector<2x32xi1>
      %552 = arith.select %551, %549, %471 : vector<2x32xi1>, vector<2x32xf32>
      %553 = vector.shape_cast %520 : vector<2x1xi1> to vector<2x1xi1>
      %554 = vector.broadcast %553 : vector<2x1xi1> to vector<2x32xi1>
      %555 = arith.select %554, %547, %474 : vector<2x32xi1>, vector<2x32xf32>
      %cst_129 = arith.constant dense<0.000000e+00> : vector<2x128xf32>
      %556 = tpu.matmul %552, %21, %cst_129 {dimension_numbers = #tpu.dot_dimension_numbers<[1], [0], [0], [1], [0, 0, 1, 1], [], []>} : vector<2x32xf32>, vector<32x128xf32>, vector<2x128xf32> -> vector<2x128xf32>
      %cst_130 = arith.constant dense<0.000000e+00> : vector<2x128xf32>
      %557 = tpu.matmul %507, %19, %cst_130 {dimension_numbers = #tpu.dot_dimension_numbers<[1], [0], [0], [1], [0, 0, 1, 1], [], []>} : vector<2x32xf32>, vector<32x128xf32>, vector<2x128xf32> -> vector<2x128xf32>
      %558 = arith.addf %556, %557 : vector<2x128xf32>
      %559 = vector.broadcast %23 : vector<1x128xf32> to vector<2x128xf32>
      %560 = arith.addf %558, %559 : vector<2x128xf32>
      %561 = vector.extract_strided_slice %560 {offsets = [0, 0], sizes = [2, 32], strides = [1, 1]} : vector<2x128xf32> to vector<2x32xf32>
      %562 = arith.negf %561 : vector<2x32xf32>
      %563 = math.exp %562 : vector<2x32xf32>
      %cst_131 = arith.constant 1.000000e+00 : f32
      %564 = vector.broadcast %cst_131 : f32 to vector<2x32xf32>
      %565 = arith.addf %564, %563 : vector<2x32xf32>
      %566 = arith.divf %564, %565 : vector<2x32xf32>
      %567 = vector.extract_strided_slice %560 {offsets = [0, 32], sizes = [2, 32], strides = [1, 1]} : vector<2x128xf32> to vector<2x32xf32>
      %568 = arith.negf %567 : vector<2x32xf32>
      %569 = math.exp %568 : vector<2x32xf32>
      %cst_132 = arith.constant 1.000000e+00 : f32
      %570 = vector.broadcast %cst_132 : f32 to vector<2x32xf32>
      %571 = arith.addf %570, %569 : vector<2x32xf32>
      %572 = arith.divf %570, %571 : vector<2x32xf32>
      %573 = vector.extract_strided_slice %560 {offsets = [0, 64], sizes = [2, 32], strides = [1, 1]} : vector<2x128xf32> to vector<2x32xf32>
      %574 = math.tanh %573 : vector<2x32xf32>
      %575 = vector.extract_strided_slice %560 {offsets = [0, 96], sizes = [2, 32], strides = [1, 1]} : vector<2x128xf32> to vector<2x32xf32>
      %576 = arith.negf %575 : vector<2x32xf32>
      %577 = math.exp %576 : vector<2x32xf32>
      %cst_133 = arith.constant 1.000000e+00 : f32
      %578 = vector.broadcast %cst_133 : f32 to vector<2x32xf32>
      %579 = arith.addf %578, %577 : vector<2x32xf32>
      %580 = arith.divf %578, %579 : vector<2x32xf32>
      %581 = arith.mulf %572, %510 : vector<2x32xf32>
      %582 = arith.mulf %566, %574 : vector<2x32xf32>
      %583 = arith.addf %581, %582 : vector<2x32xf32>
      %584 = math.tanh %583 : vector<2x32xf32>
      %585 = arith.mulf %580, %584 : vector<2x32xf32>
      %586 = vector.shape_cast %520 : vector<2x1xi1> to vector<2x1xi1>
      %587 = vector.broadcast %586 : vector<2x1xi1> to vector<2x32xi1>
      %588 = arith.select %587, %585, %507 : vector<2x32xi1>, vector<2x32xf32>
      %589 = vector.shape_cast %520 : vector<2x1xi1> to vector<2x1xi1>
      %590 = vector.broadcast %589 : vector<2x1xi1> to vector<2x32xi1>
      %591 = arith.select %590, %583, %510 : vector<2x32xi1>, vector<2x32xf32>
      %cst_134 = arith.constant 0.000000e+00 : f32
      %592 = vector.shape_cast %520 : vector<2x1xi1> to vector<2x1xi1>
      %593 = vector.broadcast %592 : vector<2x1xi1> to vector<2x32xi1>
      %594 = vector.broadcast %cst_134 : f32 to vector<2x32xf32>
      %595 = arith.select %593, %588, %594 : vector<2x32xi1>, vector<2x32xf32>
      %c0_135 = arith.constant 0 : index
      %c6_136 = arith.constant 6 : index
      %c0_137 = arith.constant 0 : index
      %596 = vector.load %arg7[%c0_135, %c6_136, %c0_137] : memref<2x8x32xf32, #tpu.memory_space<vmem>>, vector<2x1x32xf32>
      %597 = vector.shape_cast %596 : vector<2x1x32xf32> to vector<2x32xf32>
      %598 = vector.shape_cast %595 : vector<2x32xf32> to vector<2x1x32xf32>
      tpu.vector_store %arg7[%c0_135, %c6_136, %c0_137], %598 {strides = array<i32>} : memref<2x8x32xf32, #tpu.memory_space<vmem>>, vector<2x1x32xf32>,
      %c7_i32 = arith.constant 7 : i32
      %599 = arith.addi %3, %c7_i32 : i32
      %600 = vector.broadcast %599 : i32 to vector<2x1xi32>
      %601 = arith.cmpi sgt, %15, %600 : vector<2x1xi32>
      %c0_138 = arith.constant 0 : index
      %c7 = arith.constant 7 : index
      %c0_139 = arith.constant 0 : index
      %602 = vector.load %arg3[%c0_138, %c7, %c0_139] : memref<2x8x128xf32, #tpu.memory_space<vmem>>, vector<2x1x128xf32>
      %603 = vector.shape_cast %602 : vector<2x1x128xf32> to vector<2x128xf32>
      %cst_140 = arith.constant dense<0.000000e+00> : vector<2x128xf32>
      %604 = tpu.matmul %552, %17, %cst_140 {dimension_numbers = #tpu.dot_dimension_numbers<[1], [0], [0], [1], [0, 0, 1, 1], [], []>} : vector<2x32xf32>, vector<32x128xf32>, vector<2x128xf32> -> vector<2x128xf32>
      %605 = arith.addf %603, %604 : vector<2x128xf32>
      %606 = vector.extract_strided_slice %605 {offsets = [0, 0], sizes = [2, 32], strides = [1, 1]} : vector<2x128xf32> to vector<2x32xf32>
      %607 = arith.negf %606 : vector<2x32xf32>
      %608 = math.exp %607 : vector<2x32xf32>
      %cst_141 = arith.constant 1.000000e+00 : f32
      %609 = vector.broadcast %cst_141 : f32 to vector<2x32xf32>
      %610 = arith.addf %609, %608 : vector<2x32xf32>
      %611 = arith.divf %609, %610 : vector<2x32xf32>
      %612 = vector.extract_strided_slice %605 {offsets = [0, 32], sizes = [2, 32], strides = [1, 1]} : vector<2x128xf32> to vector<2x32xf32>
      %613 = arith.negf %612 : vector<2x32xf32>
      %614 = math.exp %613 : vector<2x32xf32>
      %cst_142 = arith.constant 1.000000e+00 : f32
      %615 = vector.broadcast %cst_142 : f32 to vector<2x32xf32>
      %616 = arith.addf %615, %614 : vector<2x32xf32>
      %617 = arith.divf %615, %616 : vector<2x32xf32>
      %618 = vector.extract_strided_slice %605 {offsets = [0, 64], sizes = [2, 32], strides = [1, 1]} : vector<2x128xf32> to vector<2x32xf32>
      %619 = math.tanh %618 : vector<2x32xf32>
      %620 = vector.extract_strided_slice %605 {offsets = [0, 96], sizes = [2, 32], strides = [1, 1]} : vector<2x128xf32> to vector<2x32xf32>
      %621 = arith.negf %620 : vector<2x32xf32>
      %622 = math.exp %621 : vector<2x32xf32>
      %cst_143 = arith.constant 1.000000e+00 : f32
      %623 = vector.broadcast %cst_143 : f32 to vector<2x32xf32>
      %624 = arith.addf %623, %622 : vector<2x32xf32>
      %625 = arith.divf %623, %624 : vector<2x32xf32>
      %626 = arith.mulf %617, %555 : vector<2x32xf32>
      %627 = arith.mulf %611, %619 : vector<2x32xf32>
      %628 = arith.addf %626, %627 : vector<2x32xf32>
      %629 = math.tanh %628 : vector<2x32xf32>
      %630 = arith.mulf %625, %629 : vector<2x32xf32>
      %631 = vector.shape_cast %601 : vector<2x1xi1> to vector<2x1xi1>
      %632 = vector.broadcast %631 : vector<2x1xi1> to vector<2x32xi1>
      %633 = arith.select %632, %630, %552 : vector<2x32xi1>, vector<2x32xf32>
      %634 = vector.shape_cast %601 : vector<2x1xi1> to vector<2x1xi1>
      %635 = vector.broadcast %634 : vector<2x1xi1> to vector<2x32xi1>
      %636 = arith.select %635, %628, %555 : vector<2x32xi1>, vector<2x32xf32>
      %cst_144 = arith.constant dense<0.000000e+00> : vector<2x128xf32>
      %637 = tpu.matmul %633, %21, %cst_144 {dimension_numbers = #tpu.dot_dimension_numbers<[1], [0], [0], [1], [0, 0, 1, 1], [], []>} : vector<2x32xf32>, vector<32x128xf32>, vector<2x128xf32> -> vector<2x128xf32>
      %cst_145 = arith.constant dense<0.000000e+00> : vector<2x128xf32>
      %638 = tpu.matmul %588, %19, %cst_145 {dimension_numbers = #tpu.dot_dimension_numbers<[1], [0], [0], [1], [0, 0, 1, 1], [], []>} : vector<2x32xf32>, vector<32x128xf32>, vector<2x128xf32> -> vector<2x128xf32>
      %639 = arith.addf %637, %638 : vector<2x128xf32>
      %640 = vector.broadcast %23 : vector<1x128xf32> to vector<2x128xf32>
      %641 = arith.addf %639, %640 : vector<2x128xf32>
      %642 = vector.extract_strided_slice %641 {offsets = [0, 0], sizes = [2, 32], strides = [1, 1]} : vector<2x128xf32> to vector<2x32xf32>
      %643 = arith.negf %642 : vector<2x32xf32>
      %644 = math.exp %643 : vector<2x32xf32>
      %cst_146 = arith.constant 1.000000e+00 : f32
      %645 = vector.broadcast %cst_146 : f32 to vector<2x32xf32>
      %646 = arith.addf %645, %644 : vector<2x32xf32>
      %647 = arith.divf %645, %646 : vector<2x32xf32>
      %648 = vector.extract_strided_slice %641 {offsets = [0, 32], sizes = [2, 32], strides = [1, 1]} : vector<2x128xf32> to vector<2x32xf32>
      %649 = arith.negf %648 : vector<2x32xf32>
      %650 = math.exp %649 : vector<2x32xf32>
      %cst_147 = arith.constant 1.000000e+00 : f32
      %651 = vector.broadcast %cst_147 : f32 to vector<2x32xf32>
      %652 = arith.addf %651, %650 : vector<2x32xf32>
      %653 = arith.divf %651, %652 : vector<2x32xf32>
      %654 = vector.extract_strided_slice %641 {offsets = [0, 64], sizes = [2, 32], strides = [1, 1]} : vector<2x128xf32> to vector<2x32xf32>
      %655 = math.tanh %654 : vector<2x32xf32>
      %656 = vector.extract_strided_slice %641 {offsets = [0, 96], sizes = [2, 32], strides = [1, 1]} : vector<2x128xf32> to vector<2x32xf32>
      %657 = arith.negf %656 : vector<2x32xf32>
      %658 = math.exp %657 : vector<2x32xf32>
      %cst_148 = arith.constant 1.000000e+00 : f32
      %659 = vector.broadcast %cst_148 : f32 to vector<2x32xf32>
      %660 = arith.addf %659, %658 : vector<2x32xf32>
      %661 = arith.divf %659, %660 : vector<2x32xf32>
      %662 = arith.mulf %653, %591 : vector<2x32xf32>
      %663 = arith.mulf %647, %655 : vector<2x32xf32>
      %664 = arith.addf %662, %663 : vector<2x32xf32>
      %665 = math.tanh %664 : vector<2x32xf32>
      %666 = arith.mulf %661, %665 : vector<2x32xf32>
      %667 = vector.shape_cast %601 : vector<2x1xi1> to vector<2x1xi1>
      %668 = vector.broadcast %667 : vector<2x1xi1> to vector<2x32xi1>
      %669 = arith.select %668, %666, %588 : vector<2x32xi1>, vector<2x32xf32>
      %670 = vector.shape_cast %601 : vector<2x1xi1> to vector<2x1xi1>
      %671 = vector.broadcast %670 : vector<2x1xi1> to vector<2x32xi1>
      %672 = arith.select %671, %664, %591 : vector<2x32xi1>, vector<2x32xf32>
      %cst_149 = arith.constant 0.000000e+00 : f32
      %673 = vector.shape_cast %601 : vector<2x1xi1> to vector<2x1xi1>
      %674 = vector.broadcast %673 : vector<2x1xi1> to vector<2x32xi1>
      %675 = vector.broadcast %cst_149 : f32 to vector<2x32xf32>
      %676 = arith.select %674, %669, %675 : vector<2x32xi1>, vector<2x32xf32>
      %c0_150 = arith.constant 0 : index
      %c7_151 = arith.constant 7 : index
      %c0_152 = arith.constant 0 : index
      %677 = vector.load %arg7[%c0_150, %c7_151, %c0_152] : memref<2x8x32xf32, #tpu.memory_space<vmem>>, vector<2x1x32xf32>
      %678 = vector.shape_cast %677 : vector<2x1x32xf32> to vector<2x32xf32>
      %679 = vector.shape_cast %676 : vector<2x32xf32> to vector<2x1x32xf32>
      tpu.vector_store %arg7[%c0_150, %c7_151, %c0_152], %679 {strides = array<i32>} : memref<2x8x32xf32, #tpu.memory_space<vmem>>, vector<2x1x32xf32>,
      %c0_153 = arith.constant 0 : index
      %c0_154 = arith.constant 0 : index
      %c0_155 = arith.constant 0 : index
      %680 = vector.load %arg10[%c0_153, %c0_154, %c0_155] : memref<2x2x32xf32, #tpu.memory_space<vmem>>, vector<1x2x32xf32>
      %681 = vector.shape_cast %680 : vector<1x2x32xf32> to vector<2x32xf32>
      %682 = vector.shape_cast %633 : vector<2x32xf32> to vector<1x2x32xf32>
      tpu.vector_store %arg10[%c0_153, %c0_154, %c0_155], %682 {strides = array<i32>} : memref<2x2x32xf32, #tpu.memory_space<vmem>>, vector<1x2x32xf32>,
      %c0_156 = arith.constant 0 : index
      %c0_157 = arith.constant 0 : index
      %c0_158 = arith.constant 0 : index
      %683 = vector.load %arg11[%c0_156, %c0_157, %c0_158] : memref<2x2x32xf32, #tpu.memory_space<vmem>>, vector<1x2x32xf32>
      %684 = vector.shape_cast %683 : vector<1x2x32xf32> to vector<2x32xf32>
      %685 = vector.shape_cast %636 : vector<2x32xf32> to vector<1x2x32xf32>
      tpu.vector_store %arg11[%c0_156, %c0_157, %c0_158], %685 {strides = array<i32>} : memref<2x2x32xf32, #tpu.memory_space<vmem>>, vector<1x2x32xf32>,
      %c1_159 = arith.constant 1 : index
      %c0_160 = arith.constant 0 : index
      %c0_161 = arith.constant 0 : index
      %686 = vector.load %arg10[%c1_159, %c0_160, %c0_161] : memref<2x2x32xf32, #tpu.memory_space<vmem>>, vector<1x2x32xf32>
      %687 = vector.shape_cast %686 : vector<1x2x32xf32> to vector<2x32xf32>
      %688 = vector.shape_cast %669 : vector<2x32xf32> to vector<1x2x32xf32>
      tpu.vector_store %arg10[%c1_159, %c0_160, %c0_161], %688 {strides = array<i32>} : memref<2x2x32xf32, #tpu.memory_space<vmem>>, vector<1x2x32xf32>,
      %c1_162 = arith.constant 1 : index
      %c0_163 = arith.constant 0 : index
      %c0_164 = arith.constant 0 : index
      %689 = vector.load %arg11[%c1_162, %c0_163, %c0_164] : memref<2x2x32xf32, #tpu.memory_space<vmem>>, vector<1x2x32xf32>
      %690 = vector.shape_cast %689 : vector<1x2x32xf32> to vector<2x32xf32>
      %691 = vector.shape_cast %672 : vector<2x32xf32> to vector<1x2x32xf32>
      tpu.vector_store %arg11[%c1_162, %c0_163, %c0_164], %691 {strides = array<i32>} : memref<2x2x32xf32, #tpu.memory_space<vmem>>, vector<1x2x32xf32>,
    } else {
    }
    %c2_i32 = arith.constant 2 : i32
    %12 = arith.cmpi eq, %arg0, %c2_i32 : i32
    %13 = arith.extui %12 : i1 to i32
    %c0_i32_4 = arith.constant 0 : i32
    %14 = arith.cmpi ne, %13, %c0_i32_4 : i32
    scf.if %14 {
      %c0_5 = arith.constant 0 : index
      %c0_6 = arith.constant 0 : index
      %c0_7 = arith.constant 0 : index
      %15 = vector.load %arg10[%c0_5, %c0_6, %c0_7] : memref<2x2x32xf32, #tpu.memory_space<vmem>>, vector<2x2x32xf32>
      %c0_8 = arith.constant 0 : index
      %c0_9 = arith.constant 0 : index
      %c0_10 = arith.constant 0 : index
      %16 = vector.load %arg8[%c0_8, %c0_9, %c0_10] : memref<2x2x32xf32, #tpu.memory_space<vmem>>, vector<2x2x32xf32>
      tpu.vector_store %arg8[%c0_8, %c0_9, %c0_10], %15 {strides = array<i32>} : memref<2x2x32xf32, #tpu.memory_space<vmem>>, vector<2x2x32xf32>,
      %c0_11 = arith.constant 0 : index
      %c0_12 = arith.constant 0 : index
      %c0_13 = arith.constant 0 : index
      %17 = vector.load %arg11[%c0_11, %c0_12, %c0_13] : memref<2x2x32xf32, #tpu.memory_space<vmem>>, vector<2x2x32xf32>
      %c0_14 = arith.constant 0 : index
      %c0_15 = arith.constant 0 : index
      %c0_16 = arith.constant 0 : index
      %18 = vector.load %arg9[%c0_14, %c0_15, %c0_16] : memref<2x2x32xf32, #tpu.memory_space<vmem>>, vector<2x2x32xf32>
      tpu.vector_store %arg9[%c0_14, %c0_15, %c0_16], %17 {strides = array<i32>} : memref<2x2x32xf32, #tpu.memory_space<vmem>>, vector<2x2x32xf32>,
    } else {
    }
    return
  }
  func.func @transform_0(%arg0: i32, %arg1: memref<1xi32, #tpu.memory_space<smem>>) -> (i32, i32) {
    %c0_i32 = arith.constant 0 : i32
    %c0_i32_0 = arith.constant 0 : i32
    %c0_i32_1 = arith.constant 0 : i32
    return %c0_i32, %c0_i32_0 : i32, i32
  }
  func.func @transform_1(%arg0: i32, %arg1: memref<1xi32, #tpu.memory_space<smem>>) -> (i32, i32, i32) {
    %c0_i32 = arith.constant 0 : i32
    %c0_i32_0 = arith.constant 0 : i32
    %c0_i32_1 = arith.constant 0 : i32
    return %c0_i32, %arg0, %c0_i32_0 : i32, i32, i32
  }
  func.func @transform_2(%arg0: i32, %arg1: memref<1xi32, #tpu.memory_space<smem>>) -> (i32, i32, i32) {
    %c0_i32 = arith.constant 0 : i32
    %c0_i32_0 = arith.constant 0 : i32
    %c0_i32_1 = arith.constant 0 : i32
    %c0_i32_2 = arith.constant 0 : i32
    return %c0_i32, %c0_i32_0, %c0_i32_1 : i32, i32, i32
  }
  func.func @transform_3(%arg0: i32, %arg1: memref<1xi32, #tpu.memory_space<smem>>) -> (i32, i32, i32) {
    %c0_i32 = arith.constant 0 : i32
    %c0_i32_0 = arith.constant 0 : i32
    %c0_i32_1 = arith.constant 0 : i32
    %c0_i32_2 = arith.constant 0 : i32
    return %c0_i32, %c0_i32_0, %c0_i32_1 : i32, i32, i32
  }
  func.func @transform_4(%arg0: i32, %arg1: memref<1xi32, #tpu.memory_space<smem>>) -> (i32, i32, i32) {
    %c0_i32 = arith.constant 0 : i32
    %c0_i32_0 = arith.constant 0 : i32
    %c0_i32_1 = arith.constant 0 : i32
    %c0_i32_2 = arith.constant 0 : i32
    return %c0_i32, %c0_i32_0, %c0_i32_1 : i32, i32, i32
  }
  func.func @transform_5(%arg0: i32, %arg1: memref<1xi32, #tpu.memory_space<smem>>) -> (i32, i32, i32) {
    %c0_i32 = arith.constant 0 : i32
    %c0_i32_0 = arith.constant 0 : i32
    %c0_i32_1 = arith.constant 0 : i32
    return %c0_i32, %arg0, %c0_i32_0 : i32, i32, i32
  }
  func.func @transform_6(%arg0: i32, %arg1: memref<1xi32, #tpu.memory_space<smem>>) -> (i32, i32, i32) {
    %c0_i32 = arith.constant 0 : i32
    %c0_i32_0 = arith.constant 0 : i32
    %c0_i32_1 = arith.constant 0 : i32
    %c0_i32_2 = arith.constant 0 : i32
    return %c0_i32, %c0_i32_0, %c0_i32_1 : i32, i32, i32
  }
  func.func @transform_7(%arg0: i32, %arg1: memref<1xi32, #tpu.memory_space<smem>>) -> (i32, i32, i32) {
    %c0_i32 = arith.constant 0 : i32
    %c0_i32_0 = arith.constant 0 : i32
    %c0_i32_1 = arith.constant 0 : i32
    %c0_i32_2 = arith.constant 0 : i32
    return %c0_i32, %c0_i32_0, %c0_i32_1 : i32, i32, i32
  }
}

</mosaic_0001>

<llo_original>
// kernel: tpu_custom_call.1
$region0: #{tpu_custom_call.1}
  #allocation0 [shape = 'u32[]', space=smem, size = 0x4, offset = 0x4, fixed_abs, tag = 'smem constant byte address 0x4 - core index']
  #allocation1 [shape = 'u32[144,128]{1,0:T(1,128)}', space=vmem, size = 0x12000, scoped, tag = 'internal scratch']
  #allocation2 [shape = 'f32[2,2,32]{2,1,0:T(2,128)}', space=vmem, size = 0x800, scoped, tag = 'scratch operand']
  #allocation3 [shape = 'f32[2,2,32]{2,1,0:T(2,128)}', space=vmem, size = 0x800, scoped, tag = 'scratch operand']
  #allocation4 [shape = 's32[1]{0}', space=sflag, size = 0x4, scoped, tag = 'scoped memory for tpu_custom_call.1']
  #allocation5 [shape = 's32[1]{0:T(128)S(6)}', space=smem, size = 0x200, scoped, tag = 'prefetched SMEM operand 0']
  %s0 = inlined_call_operand.<no memory space> [shape: s32[1], index: 0, kind: input, shape index: {}]
  %s1 = inlined_call_operand.vmem [shape: s32[2,1], index: 1, kind: input, shape index: {}]
  %s2 = inlined_call_operand.hbm [shape: f32[2,24,128], index: 2, kind: input, shape index: {}]
  %s3 = inlined_call_operand.hbm [shape: f32[2,32,128], index: 3, kind: input, shape index: {}]
  %s4 = inlined_call_operand.hbm [shape: f32[1,32,128], index: 4, kind: input, shape index: {}]
  %s5 = inlined_call_operand.vmem [shape: f32[1,1,128], index: 5, kind: input, shape index: {}]
  %s6 = inlined_call_operand.hbm [shape: f32[2,24,32], index: 6, kind: output, shape index: {0}]
  %s7 = inlined_call_operand.hbm [shape: f32[2,2,32], index: 7, kind: output, shape index: {1}]
  %s8 = inlined_call_operand.hbm [shape: f32[2,2,32], index: 8, kind: output, shape index: {2}]
  %9 = xla_tuple %s6, %s7, %s8
  %s10 = sld [smem:[#allocation0]]
  $region97: #{tpu_custom_call.1} parent=0
    _
  %s12 = ssub.s32 1, %s10
  %s13 = scalar_select 0, %s12, %s10
  %14 = sst [smem:[#allocation5]] %s0
  $region1: #{tpu_custom_call.1} parent=0
    #allocation6 [shape = 'u8[16384]{0}', space=vmem, size = 0x4000, scoped, tag = 'input window, operand 2']
    #allocation7 [shape = 's32[2]{0}', space=sflag, size = 0x8, scoped, tag = 'scoped memory for tpu_custom_call.1']
    #allocation8 [shape = 's32[2]{0}', space=sflag, size = 0x8, scoped, tag = 'scoped memory for tpu_custom_call.1']
    #allocation9 [shape = 'u8[32768]{0}', space=vmem, size = 0x8000, scoped, tag = 'input window, operand 3, single buffered']
    #allocation10 [shape = 's32[1]{0}', space=sflag, size = 0x4, scoped, tag = 'scoped memory for tpu_custom_call.1']
    #allocation11 [shape = 'u8[16384]{0}', space=vmem, size = 0x4000, scoped, tag = 'input window, operand 4, single buffered']
    #allocation12 [shape = 'u8[16384]{0}', space=vmem, size = 0x4000, scoped, tag = 'output window, operand 0']
    #allocation13 [shape = 'u8[2048]{0}', space=vmem, size = 0x800, scoped, tag = 'output window, operand 1, single buffered']
    #allocation14 [shape = 's32[1]{0}', space=sflag, size = 0x4, scoped, tag = 'scoped memory for tpu_custom_call.1']
    #allocation15 [shape = 'u8[2048]{0}', space=vmem, size = 0x800, scoped, tag = 'output window, operand 2, single buffered']
    %15 = vsyncpa [#allocation7], 0
    %s16 = scalar_lea.sflag [#allocation7], 1
    %17 = vsyncpa %s16, 0
    %18 = vsyncpa [#allocation10], 0
    %19 = vsyncpa [#allocation8], 0
    %s20 = scalar_lea.sflag [#allocation8], 1
    %21 = vsyncpa %s20, 0
    %22 = vsyncpa [#allocation14], 0
    loop: start=0, step=1, limit=5
    $region2: #{tpu_custom_call.1} parent=1 // loop_pre_header
      _
    $region3: #{tpu_custom_call.1} parent=1 // loop_header
      %s24 = sphi 0, %s28
      %p25 = scmp.ge.s32.totalorder %s24, 5
      %s32 = sphi 0, %s32
      %s34 = sphi 0, %s32
      %s35 = sphi 0, %s34
      %s49 = sphi 0, %s35
      %s55 = sphi 0, %s57
      %s58 = sphi 0, %s55
      %s59 = sphi 0, %s58
      %s75 = sphi 0, %s59
      %s79 = sphi 0, %s79
      %s81 = sphi 0, %s79
      %s82 = sphi 0, %s81
      %s96 = sphi 0, %s82
      %s100 = sphi 0, %s100
      %s102 = sphi 0, %s100
      %s103 = sphi 0, %s102
      %s117 = sphi 0, %s103
      %s121 = sphi 0, %s121
      %s123 = sphi 0, %s121
      %s124 = sphi 0, %s123
      %s138 = sphi 0, %s124
      %s144 = sphi 0, %s146
      %s147 = sphi 0, %s144
      %s148 = sphi 0, %s147
      %s164 = sphi 0, %s148
      %s168 = sphi 0, %s168
      %s170 = sphi 0, %s168
      %s171 = sphi 0, %s170
      %s185 = sphi 0, %s171
      %s189 = sphi 0, %s189
      %s191 = sphi 0, %s189
      %s192 = sphi 0, %s191
      %s206 = sphi 0, %s192
    $region4: #{tpu_custom_call.1} parent=1 // loop_header_branch
      %27 = sbr.rel (%p25) target = $region8
    $region5: #{tpu_custom_call.1} parent=1 // loop_body
      %s29 = ssub.s32 %s24, 1
      %s30 = ssub.s32 %s24, 2
      %s31 = sadd.s32 %s24, 1
      %s33 = sadd.s32 %s32, 1
      %p36 = scmp.eq.s32.totalorder %s24, 2
      %p37 = scmp.ne.s32.totalorder %s32, %s34
      %p38 = scmp.eq.s32.totalorder %s24, 0
      %p39 = por %p37, %p38
      %p40 = scmp.ne.s32.totalorder %s32, %s34
      %p41 = scmp.eq.s32.totalorder %s29, 2
      %p42 = por %p40, %p41
      %p43 = scmp.ne.s32.totalorder %s34, %s35
      %p44 = scmp.eq.s32.totalorder %s29, 0
      %p45 = por %p43, %p44
      %p46 = scmp.ne.s32.totalorder %s34, %s35
      %p47 = scmp.eq.s32.totalorder %s30, 2
      %p48 = por %p46, %p47
      %p50 = scmp.ne.s32.totalorder %s35, %s49
      %p51 = scmp.eq.s32.totalorder %s30, 0
      %p52 = por %p50, %p51
      %s53 = ssub.s32 %s24, %s31
      %p54 = scmp.eq.s32.totalorder %s53, 0
      %s56 = sadd.s32 %s55, 1
      %s57 = scalar_select %p54, %s55, %s56
      %p60 = pneg %p54
      %p61 = scmp.eq.s32.totalorder %s24, 2
      %p62 = por %p60, %p61
      %p63 = scmp.ne.s32.totalorder %s55, %s58
      %p64 = scmp.eq.s32.totalorder %s24, 0
      %p65 = por %p63, %p64
      %p66 = scmp.ne.s32.totalorder %s55, %s58
      %p67 = scmp.eq.s32.totalorder %s29, 2
      %p68 = por %p66, %p67
      %p69 = scmp.ne.s32.totalorder %s58, %s59
      %p70 = scmp.eq.s32.totalorder %s29, 0
      %p71 = por %p69, %p70
      %p72 = scmp.ne.s32.totalorder %s58, %s59
      %p73 = scmp.eq.s32.totalorder %s30, 2
      %p74 = por %p72, %p73
      %p76 = scmp.ne.s32.totalorder %s59, %s75
      %p77 = scmp.eq.s32.totalorder %s30, 0
      %p78 = por %p76, %p77
      %s80 = sadd.s32 %s79, 1
      %p83 = scmp.eq.s32.totalorder %s24, 2
      %p84 = scmp.ne.s32.totalorder %s79, %s81
      %p85 = scmp.eq.s32.totalorder %s24, 0
      %p86 = por %p84, %p85
      %p87 = scmp.ne.s32.totalorder %s79, %s81
      %p88 = scmp.eq.s32.totalorder %s29, 2
      %p89 = por %p87, %p88
      %p90 = scmp.ne.s32.totalorder %s81, %s82
      %p91 = scmp.eq.s32.totalorder %s29, 0
      %p92 = por %p90, %p91
      %p93 = scmp.ne.s32.totalorder %s81, %s82
      %p94 = scmp.eq.s32.totalorder %s30, 2
      %p95 = por %p93, %p94
      %p97 = scmp.ne.s32.totalorder %s82, %s96
      %p98 = scmp.eq.s32.totalorder %s30, 0
      %p99 = por %p97, %p98
      %s101 = sadd.s32 %s100, 1
      %p104 = scmp.eq.s32.totalorder %s24, 2
      %p105 = scmp.ne.s32.totalorder %s100, %s102
      %p106 = scmp.eq.s32.totalorder %s24, 0
      %p107 = por %p105, %p106
      %p108 = scmp.ne.s32.totalorder %s100, %s102
      %p109 = scmp.eq.s32.totalorder %s29, 2
      %p110 = por %p108, %p109
      %p111 = scmp.ne.s32.totalorder %s102, %s103
      %p112 = scmp.eq.s32.totalorder %s29, 0
      %p113 = por %p111, %p112
      %p114 = scmp.ne.s32.totalorder %s102, %s103
      %p115 = scmp.eq.s32.totalorder %s30, 2
      %p116 = por %p114, %p115
      %p118 = scmp.ne.s32.totalorder %s103, %s117
      %p119 = scmp.eq.s32.totalorder %s30, 0
      %p120 = por %p118, %p119
      %s122 = sadd.s32 %s121, 1
      %p125 = scmp.eq.s32.totalorder %s24, 2
      %p126 = scmp.ne.s32.totalorder %s121, %s123
      %p127 = scmp.eq.s32.totalorder %s24, 0
      %p128 = por %p126, %p127
      %p129 = scmp.ne.s32.totalorder %s121, %s123
      %p130 = scmp.eq.s32.totalorder %s29, 2
      %p131 = por %p129, %p130
      %p132 = scmp.ne.s32.totalorder %s123, %s124
      %p133 = scmp.eq.s32.totalorder %s29, 0
      %p134 = por %p132, %p133
      %p135 = scmp.ne.s32.totalorder %s123, %s124
      %p136 = scmp.eq.s32.totalorder %s30, 2
      %p137 = por %p135, %p136
      %p139 = scmp.ne.s32.totalorder %s124, %s138
      %p140 = scmp.eq.s32.totalorder %s30, 0
      %p141 = por %p139, %p140
      %s142 = ssub.s32 %s24, %s31
      %p143 = scmp.eq.s32.totalorder %s142, 0
      %s145 = sadd.s32 %s144, 1
      %s146 = scalar_select %p143, %s144, %s145
      %p149 = pneg %p143
      %p150 = scmp.eq.s32.totalorder %s24, 2
      %p151 = por %p149, %p150
      %p152 = scmp.ne.s32.totalorder %s144, %s147
      %p153 = scmp.eq.s32.totalorder %s24, 0
      %p154 = por %p152, %p153
      %p155 = scmp.ne.s32.totalorder %s144, %s147
      %p156 = scmp.eq.s32.totalorder %s29, 2
      %p157 = por %p155, %p156
      %p158 = scmp.ne.s32.totalorder %s147, %s148
      %p159 = scmp.eq.s32.totalorder %s29, 0
      %p160 = por %p158, %p159
      %p161 = scmp.ne.s32.totalorder %s147, %s148
      %p162 = scmp.eq.s32.totalorder %s30, 2
      %p163 = por %p161, %p162
      %p165 = scmp.ne.s32.totalorder %s148, %s164
      %p166 = scmp.eq.s32.totalorder %s30, 0
      %p167 = por %p165, %p166
      %s169 = sadd.s32 %s168, 1
      %p172 = scmp.eq.s32.totalorder %s24, 2
      %p173 = scmp.ne.s32.totalorder %s168, %s170
      %p174 = scmp.eq.s32.totalorder %s24, 0
      %p175 = por %p173, %p174
      %p176 = scmp.ne.s32.totalorder %s168, %s170
      %p177 = scmp.eq.s32.totalorder %s29, 2
      %p178 = por %p176, %p177
      %p179 = scmp.ne.s32.totalorder %s170, %s171
      %p180 = scmp.eq.s32.totalorder %s29, 0
      %p181 = por %p179, %p180
      %p182 = scmp.ne.s32.totalorder %s170, %s171
      %p183 = scmp.eq.s32.totalorder %s30, 2
      %p184 = por %p182, %p183
      %p186 = scmp.ne.s32.totalorder %s171, %s185
      %p187 = scmp.eq.s32.totalorder %s30, 0
      %p188 = por %p186, %p187
      %s190 = sadd.s32 %s189, 1
      %p193 = scmp.eq.s32.totalorder %s24, 2
      %p194 = scmp.ne.s32.totalorder %s189, %s191
      %p195 = scmp.eq.s32.totalorder %s24, 0
      %p196 = por %p194, %p195
      %p197 = scmp.ne.s32.totalorder %s189, %s191
      %p198 = scmp.eq.s32.totalorder %s29, 2
      %p199 = por %p197, %p198
      %p200 = scmp.ne.s32.totalorder %s191, %s192
      %p201 = scmp.eq.s32.totalorder %s29, 0
      %p202 = por %p200, %p201
      %p203 = scmp.ne.s32.totalorder %s191, %s192
      %p204 = scmp.eq.s32.totalorder %s30, 2
      %p205 = por %p203, %p204
      %p207 = scmp.ne.s32.totalorder %s192, %s206
      %p208 = scmp.eq.s32.totalorder %s30, 0
      %p209 = por %p207, %p208
      %p210 = scmp.le.s32.totalorder 1, %s24
      %p211 = scmp.lt.s32.totalorder %s24, 4
      %p212 = pnand %p210, %p211
      %p213 = pneg %p212
      // Predicated region
      $region9: #{tpu_custom_call.1} parent=5 // pred_check
        _
      $region10: #{tpu_custom_call.1} parent=5 // pred_check_branch
        %215 = sbr.rel (%p212) target = $region12
      $region11: #{tpu_custom_call.1} parent=5 // pred_region
        %s216 = ssub.s32 %s24, 1
        // Predicated region
        $region13: #{tpu_custom_call.1} parent=11 // pred_check
          %p217 = pneg %p45
        $region14: #{tpu_custom_call.1} parent=11 // pred_check_branch
          %219 = sbr.rel (%p217) target = $region16
        $region15: #{tpu_custom_call.1} parent=11 // pred_region
          _
        $region16: #{tpu_custom_call.1} parent=11 // pred_fallthru
          _
        // Predicated region
        $region17: #{tpu_custom_call.1} parent=11 // pred_check
          %p220 = pneg %p92
        $region18: #{tpu_custom_call.1} parent=11 // pred_check_branch
          %222 = sbr.rel (%p220) target = $region20
        $region19: #{tpu_custom_call.1} parent=11 // pred_region
          %s224 = ssub.s32 1024, 1024
          %225 = vsyncadd [#allocation10], %s224
          %s226 = sshll.u32 [#allocation9], 4
          %s227 = int_to_ptr.vmem [resolvable:$true] %s226
          %232 = dma.hbm_to_vmem [thread:$0]  %s3, 1024, %s227, [#allocation10], 128, 128, 8
        $region20: #{tpu_custom_call.1} parent=11 // pred_fallthru
          _
        // Predicated region
        $region21: #{tpu_custom_call.1} parent=11 // pred_check
          %p233 = pneg %p113
        $region22: #{tpu_custom_call.1} parent=11 // pred_check_branch
          %235 = sbr.rel (%p233) target = $region24
        $region23: #{tpu_custom_call.1} parent=11 // pred_region
          %s237 = ssub.s32 512, 512
          %238 = vsyncadd [#allocation10], %s237
          %s239 = sshll.u32 [#allocation11], 4
          %s240 = int_to_ptr.vmem [resolvable:$true] %s239
          %245 = dma.hbm_to_vmem [thread:$0]  %s4, 512, %s240, [#allocation10], 128, 128, 8
        $region24: #{tpu_custom_call.1} parent=11 // pred_fallthru
          _
        // Predicated region
        $region25: #{tpu_custom_call.1} parent=11 // pred_check
          %p246 = pneg %p134
        $region26: #{tpu_custom_call.1} parent=11 // pred_check_branch
          %248 = sbr.rel (%p246) target = $region28
        $region27: #{tpu_custom_call.1} parent=11 // pred_region
          _
        $region28: #{tpu_custom_call.1} parent=11 // pred_fallthru
          _
      $region12: #{tpu_custom_call.1} parent=5 // pred_fallthru
        _
      %p249 = scmp.lt.s32.totalorder %s24, 3
      // Predicated region
      $region29: #{tpu_custom_call.1} parent=5 // pred_check
        %p250 = pneg %p249
      $region30: #{tpu_custom_call.1} parent=5 // pred_check_branch
        %252 = sbr.rel (%p250) target = $region32
      $region31: #{tpu_custom_call.1} parent=5 // pred_region
        // Predicated region
        $region33: #{tpu_custom_call.1} parent=31 // pred_check
          %p253 = pneg %p65
        $region34: #{tpu_custom_call.1} parent=31 // pred_check_branch
          %255 = sbr.rel (%p253) target = $region36
        $region35: #{tpu_custom_call.1} parent=31 // pred_region
          %s256 = sand.u32 %s55, 1
          %s257 = scalar_lea.sflag [#allocation7], %s256
          %s258 = sand.u32 %s55, 1
          %s259 = smul.addr %s258, 16
          %s260 = scalar_lea.vmem [#allocation6], %s259
          %s262 = ssub.s32 256, 256
          %263 = vsyncadd %s257, %s262
          %s264 = smul.addr %s24, 128
          %s265 = scalar_lea.hbm %s2, %s264
          %s266 = sshll.u32 %s260, 4
          %s267 = int_to_ptr.vmem [resolvable:$true] %s266
          %272 = dma.hbm_to_vmem [thread:$0]  %s265, 256, %s267, %s257, 384, 128, 8
        $region36: #{tpu_custom_call.1} parent=31 // pred_fallthru
          _
      $region32: #{tpu_custom_call.1} parent=5 // pred_fallthru
        _
      %p273 = scmp.le.s32.totalorder 1, %s24
      %p274 = scmp.lt.s32.totalorder %s24, 4
      %p275 = pnand %p273, %p274
      %p276 = pneg %p275
      // Predicated region
      $region37: #{tpu_custom_call.1} parent=5 // pred_check
        _
      $region38: #{tpu_custom_call.1} parent=5 // pred_check_branch
        %278 = sbr.rel (%p275) target = $region40
      $region39: #{tpu_custom_call.1} parent=5 // pred_region
        %s279 = ssub.s32 %s24, 1
        %s280 = sand.u32 %s58, 1
        %s281 = scalar_lea.sflag [#allocation7], %s280
        %s282 = sand.u32 %s58, 1
        %s283 = smul.addr %s282, 16
        %s284 = scalar_lea.vmem [#allocation6], %s283
        // Predicated region
        $region41: #{tpu_custom_call.1} parent=39 // pred_check
          %p285 = pneg %p71
        $region42: #{tpu_custom_call.1} parent=39 // pred_check_branch
          %287 = sbr.rel (%p285) target = $region44
        $region43: #{tpu_custom_call.1} parent=39 // pred_region
          %288 = dma.done %s281, 256
        $region44: #{tpu_custom_call.1} parent=39 // pred_fallthru
          _
        // Predicated region
        $region45: #{tpu_custom_call.1} parent=39 // pred_check
          %p289 = pneg %p92
        $region46: #{tpu_custom_call.1} parent=39 // pred_check_branch
          %291 = sbr.rel (%p289) target = $region48
        $region47: #{tpu_custom_call.1} parent=39 // pred_region
          %292 = dma.done [#allocation10], 1024
        $region48: #{tpu_custom_call.1} parent=39 // pred_fallthru
          _
        // Predicated region
        $region49: #{tpu_custom_call.1} parent=39 // pred_check
          %p293 = pneg %p113
        $region50: #{tpu_custom_call.1} parent=39 // pred_check_branch
          %295 = sbr.rel (%p293) target = $region52
        $region51: #{tpu_custom_call.1} parent=39 // pred_region
          %296 = dma.done [#allocation10], 512
        $region52: #{tpu_custom_call.1} parent=39 // pred_fallthru
          _
        %p297 = pneg %p45
        %p298 = pneg %p42
        %s299 = sand.u32 %s58, 1
        %s300 = scalar_lea.sflag [#allocation7], %s299
        %s301 = sand.u32 %s58, 1
        %s302 = smul.addr %s301, 16
        %s303 = scalar_lea.vmem [#allocation6], %s302
        %p304 = pneg %p71
        %p305 = pneg %p68
        %p306 = pneg %p92
        %p307 = pneg %p89
        %p308 = pneg %p113
        %p309 = pneg %p110
        %p310 = pneg %p134
        %p311 = pneg %p131
        %p312 = pneg %p160
        %p313 = pneg %p157
        %s314 = sand.u32 %s147, 1
        %s315 = scalar_lea.sflag [#allocation8], %s314
        %s316 = sand.u32 %s147, 1
        %s317 = smul.addr %s316, 16
        %s318 = scalar_lea.vmem [#allocation12], %s317
        %p319 = pneg %p181
        %p320 = pneg %p178
        %p321 = pneg %p202
        %p322 = pneg %p199
        %p323 = scmp.eq.s32.totalorder %s29, 0
        // Predicated region
        $region53: #{tpu_custom_call.1} parent=39 // pred_check
          %p324 = pneg %p323
        $region54: #{tpu_custom_call.1} parent=39 // pred_check_branch
          %326 = sbr.rel (%p324) target = $region56
        $region55: #{tpu_custom_call.1} parent=39 // pred_region
          %vm327 = vcmask 254976
          %328 = vst.msk [vmem:[#allocation2] sm:$0x3] %vm327, 0.0
          %329 = vst.msk [vmem:[#allocation2 + $0x2] sm:$0x3] %vm327, 0.0
          %330 = vst.msk [vmem:[#allocation3] sm:$0x3] %vm327, 0.0
          %331 = vst.msk [vmem:[#allocation3 + $0x2] sm:$0x3] %vm327, 0.0
        $region56: #{tpu_custom_call.1} parent=39 // pred_fallthru
          _
        %s332 = smul.u32 %s29, 8
        %s333 = sld [smem:[#allocation5]]
        %p334 = scmp.ge.s32.totalorder %s332, %s333
        // Predicated region
        $region57: #{tpu_custom_call.1} parent=39 // pred_check
          %p335 = pneg %p334
        $region58: #{tpu_custom_call.1} parent=39 // pred_check_branch
          %337 = sbr.rel (%p335) target = $region60
        $region59: #{tpu_custom_call.1} parent=39 // pred_region
          %vm338 = vcmask 261120
          %339 = vst.msk [vmem:[%s318] sm:$0xff] %vm338, 0.0
          %340 = vst.msk [vmem:[%s318 + $0x8] sm:$0xff] %vm338, 0.0
        $region60: #{tpu_custom_call.1} parent=39 // pred_fallthru
          _
        %s341 = sld [smem:[#allocation5]]
        %p342 = scmp.lt.s32.totalorder %s332, %s341
        // Predicated region
        $region61: #{tpu_custom_call.1} parent=39 // pred_check
          %p343 = pneg %p342
        $region62: #{tpu_custom_call.1} parent=39 // pred_check_branch
          %345 = sbr.rel (%p343) target = $region64
        $region63: #{tpu_custom_call.1} parent=39 // pred_region
          %v346 = vld [vmem:[%s1] sm:$0x3]
          %v347 = vld [vmem:[#allocation9] sm:$0xff]
          %v348 = vld [vmem:[#allocation9 + $0x8] sm:$0xff]
          %v349 = vld [vmem:[#allocation9 + $0x10] sm:$0xff]
          %v350 = vld [vmem:[#allocation9 + $0x18] sm:$0xff]
          %s351 = scalar_lea.vmem [#allocation9], 32
          %v352 = vld [vmem:[%s351] sm:$0xff]
          %v353 = vld [vmem:[%s351 + $0x8] sm:$0xff]
          %v354 = vld [vmem:[%s351 + $0x10] sm:$0xff]
          %v355 = vld [vmem:[%s351 + $0x18] sm:$0xff]
          %v356 = vld [vmem:[#allocation11] sm:$0xff]
          %v357 = vld [vmem:[#allocation11 + $0x8] sm:$0xff]
          %v358 = vld [vmem:[#allocation11 + $0x10] sm:$0xff]
          %v359 = vld [vmem:[#allocation11 + $0x18] sm:$0xff]
          %v360 = vld [vmem:[%s5] sm:$0x1]
          %v361 = vld [vmem:[#allocation2] sm:$0x3]
          %s362 = scalar_lea.vmem [#allocation2], 2
          %v363 = vld [vmem:[%s362] sm:$0x3]
          %v364 = vld [vmem:[#allocation3] sm:$0x3]
          %s365 = scalar_lea.vmem [#allocation3], 2
          %v366 = vld [vmem:[%s365] sm:$0x3]
          %v367 = vstv %s332
          %vm368 = vcmp.gt.s32.totalorder %v346, %v367
          %v369 = vld [vmem:[%s284] sm:$0x1]
          %v370 = vld [vmem:[%s284 + $0x8] sm:$0x1]
          %vm371 = vcmask 261120
          %v373 = vsel %vm371, %v361, 0
          %375 = vmatprep.subr.mxu0 0.0
          %376 = vmatpush1.msra.mxu0 %v347
          %377 = vmatprep.subr.mxu0 0.0
          %378 = vmatpush1.msra.mxu0 %v348
          %379 = vmatprep.subr.mxu0 0.0
          %380 = vmatpush1.msra.mxu0 %v349
          %381 = vmatprep.subr.mxu0 0.0
          %382 = vmatpush1.msra.mxu0 %v350
          %383 = vmatprep.subr.mxu0 0.0
          %384 = vmatpush1.msra.mxu0 0.0
          %385 = vmatprep.subr.mxu0 0.0
          %386 = vmatpush1.msra.mxu0 0.0
          %387 = vmatprep.subr.mxu0 0.0
          %388 = vmatpush1.msra.mxu0 0.0
          %389 = vmatprep.subr.mxu0 0.0
          %390 = vmatpush1.msra.mxu0 0.0
          %391 = vmatprep.subr.mxu0 0.0
          %392 = vmatpush1.msra.mxu0 0.0
          %393 = vmatprep.subr.mxu0 0.0
          %394 = vmatpush1.msra.mxu0 0.0
          %395 = vmatprep.subr.mxu0 0.0
          %396 = vmatpush1.msra.mxu0 0.0
          %397 = vmatprep.subr.mxu0 0.0
          %398 = vmatpush1.msra.mxu0 0.0
          %399 = vmatprep.subr.mxu0 0.0
          %400 = vmatpush1.msra.mxu0 0.0
          %401 = vmatprep.subr.mxu0 0.0
          %402 = vmatpush1.msra.mxu0 0.0
          %403 = vmatprep.subr.mxu0 0.0
          %404 = vmatpush1.msra.mxu0 0.0
          %405 = vmatprep.subr.mxu0 0.0
          %406 = vmatpush1.msra.mxu0 0.0
          %407 = vmatprep.subr.mxu0 0.0
          %408 = vmatpush1.msra.mxu0 0.0
          %409 = vmatprep.subr.mxu0 0.0
          %410 = vmatpush1.msra.mxu0 0.0
          %411 = vmatprep.subr.mxu0 0.0
          %412 = vmatpush1.msra.mxu0 0.0
          %413 = vmatprep.subr.mxu0 0.0
          %414 = vmatpush1.msra.mxu0 0.0
          %415 = vmatprep.subr.mxu0 0.0
          %416 = vmatpush1.msra.mxu0 0.0
          %417 = vmatprep.subr.mxu0 0.0
          %418 = vmatpush1.msra.mxu0 0.0
          %419 = vmatprep.subr.mxu0 0.0
          %420 = vmatpush1.msra.mxu0 0.0
          %421 = vmatprep.subr.mxu0 0.0
          %422 = vmatpush1.msra.mxu0 0.0
          %423 = vmatprep.subr.mxu0 0.0
          %424 = vmatpush1.msra.mxu0 0.0
          %425 = vmatprep.subr.mxu0 0.0
          %426 = vmatpush1.msra.mxu0 0.0
          %427 = vmatprep.subr.mxu0 0.0
          %428 = vmatpush1.msra.mxu0 0.0
          %429 = vmatprep.subr.mxu0 0.0
          %430 = vmatpush1.msra.mxu0 0.0
          %431 = vmatprep.subr.mxu0 0.0
          %432 = vmatpush1.msra.mxu0 0.0
          %433 = vmatprep.subr.mxu0 0.0
          %434 = vmatpush1.msra.mxu0 0.0
          %435 = vmatprep.subr.mxu0 0.0
          %436 = vmatpush1.msra.mxu0 0.0
          %437 = vmatprep.subr.mxu0 0.0
          %438 = vmatpush1.msra.mxu0 0.0
          %439 = vmatprep.mubr.f32.mxu0 0.0
          %440 = vmatmul.mubr.f32.gmra.mrb[0].mxu0 %v373
          %v441 = vpop.f32.mrb[0].mxu0
          %v442 = vadd.f32 0.0, %v441
          %v443 = vpop.f32.mrb[0].mxu0
          %444 = vdwg.mxu0
          %v446 = vrot.slane %v442, 1
          %v449 = vadd.f32 %v369, %v442
          %v450 = vadd.f32 %v370, %v446
          %v451 = vxor.u32 %v449, 2147483648
          %v452 = vxor.u32 %v450, 2147483648
          %v453 = vmul.f32 %v451, 1.442695
          %v454 = vpow.pop %v453
          %v455 = vmul.f32 %v452, 1.442695
          %v456 = vpow.pop %v455
          %v457 = vadd.f32 %v454, 1.0
          %v458 = vadd.f32 %v456, 1.0
          %v459 = vrcp.pop %v457
          %v460 = vmul.f32 1.0, %v459
          %v461 = vrcp.pop %v458
          %v462 = vmul.f32 1.0, %v461
          %v463 = vtanh.pop %v449
          %v464 = vtanh.pop %v450
          %v466 = vrot.slane %v364, 1
          %467 = vrot.lane.b32.xlu0 %v364, 32
          %v468 = vpop.permute.xlu0 %467
          %469 = vrot.lane.b32.xlu0 %v466, 32
          %v470 = vpop.permute.xlu0 %469
          %v473 = vmul.f32 %v460, %v468
          %v474 = vmul.f32 %v462, %v470
          %477 = vrot.lane.b32.xlu0 %v463, 64
          %v478 = vpop.permute.xlu0 %477
          %479 = vrot.lane.b32.xlu0 %v464, 64
          %v480 = vpop.permute.xlu0 %479
          %v483 = vmul.f32 %v460, %v478
          %v484 = vmul.f32 %v462, %v480
          %487 = vrot.lane.b32.xlu0 %v483, 32
          %v488 = vpop.permute.xlu0 %487
          %489 = vrot.lane.b32.xlu0 %v484, 32
          %v490 = vpop.permute.xlu0 %489
          %v493 = vadd.f32 %v473, %v488
          %v494 = vadd.f32 %v474, %v490
          %v495 = vtanh.pop %v493
          %v496 = vtanh.pop %v494
          %499 = vrot.lane.b32.xlu0 %v495, 64
          %v500 = vpop.permute.xlu0 %499
          %501 = vrot.lane.b32.xlu0 %v496, 64
          %v502 = vpop.permute.xlu0 %501
          %v505 = vmul.f32 %v460, %v500
          %v506 = vmul.f32 %v462, %v502
          %v507 = vsel %vm368, 1, 0
          %508 = vset.pattern.permute.xlu0 0
          %509 = vperm.xlu0 %508, %v507
          %v510 = vpop.permute.xlu0 %509
          %vm511 = vcmp.eq.s32.totalorder %v510, 1
          %v514 = vrot.slane %v506, 7
          %vm515 = vcmask 1041409
          %v516 = vsel %vm515, %v514, %v505
          %517 = vrot.lane.b32.xlu0 %v516, 32
          %v518 = vpop.permute.xlu0 %517
          %v520 = vsel %vm511, %v518, %v361
          %v523 = vrot.slane %v494, 7
          %v524 = vsel %vm515, %v523, %v493
          %525 = vrot.lane.b32.xlu0 %v524, 96
          %v526 = vpop.permute.xlu0 %525
          %v528 = vsel %vm511, %v526, %v364
          %v530 = vsel %vm371, %v363, 0
          %532 = vmatprep.subr.mxu0 0.0
          %533 = vmatpush1.msra.mxu0 %v352
          %534 = vmatprep.subr.mxu0 0.0
          %535 = vmatpush1.msra.mxu0 %v353
          %536 = vmatprep.subr.mxu0 0.0
          %537 = vmatpush1.msra.mxu0 %v354
          %538 = vmatprep.subr.mxu0 0.0
          %539 = vmatpush1.msra.mxu0 %v355
          %540 = vmatprep.subr.mxu0 0.0
          %541 = vmatpush1.msra.mxu0 0.0
          %542 = vmatprep.subr.mxu0 0.0
          %543 = vmatpush1.msra.mxu0 0.0
          %544 = vmatprep.subr.mxu0 0.0
          %545 = vmatpush1.msra.mxu0 0.0
          %546 = vmatprep.subr.mxu0 0.0
          %547 = vmatpush1.msra.mxu0 0.0
          %548 = vmatprep.subr.mxu0 0.0
          %549 = vmatpush1.msra.mxu0 0.0
          %550 = vmatprep.subr.mxu0 0.0
          %551 = vmatpush1.msra.mxu0 0.0
          %552 = vmatprep.subr.mxu0 0.0
          %553 = vmatpush1.msra.mxu0 0.0
          %554 = vmatprep.subr.mxu0 0.0
          %555 = vmatpush1.msra.mxu0 0.0
          %556 = vmatprep.subr.mxu0 0.0
          %557 = vmatpush1.msra.mxu0 0.0
          %558 = vmatprep.subr.mxu0 0.0
          %559 = vmatpush1.msra.mxu0 0.0
          %560 = vmatprep.subr.mxu0 0.0
          %561 = vmatpush1.msra.mxu0 0.0
          %562 = vmatprep.subr.mxu0 0.0
          %563 = vmatpush1.msra.mxu0 0.0
          %564 = vmatprep.subr.mxu0 0.0
          %565 = vmatpush1.msra.mxu0 0.0
          %566 = vmatprep.subr.mxu0 0.0
          %567 = vmatpush1.msra.mxu0 0.0
          %568 = vmatprep.subr.mxu0 0.0
          %569 = vmatpush1.msra.mxu0 0.0
          %570 = vmatprep.subr.mxu0 0.0
          %571 = vmatpush1.msra.mxu0 0.0
          %572 = vmatprep.subr.mxu0 0.0
          %573 = vmatpush1.msra.mxu0 0.0
          %574 = vmatprep.subr.mxu0 0.0
          %575 = vmatpush1.msra.mxu0 0.0
          %576 = vmatprep.subr.mxu0 0.0
          %577 = vmatpush1.msra.mxu0 0.0
          %578 = vmatprep.subr.mxu0 0.0
          %579 = vmatpush1.msra.mxu0 0.0
          %580 = vmatprep.subr.mxu0 0.0
          %581 = vmatpush1.msra.mxu0 0.0
          %582 = vmatprep.subr.mxu0 0.0
          %583 = vmatpush1.msra.mxu0 0.0
          %584 = vmatprep.subr.mxu0 0.0
          %585 = vmatpush1.msra.mxu0 0.0
          %586 = vmatprep.subr.mxu0 0.0
          %587 = vmatpush1.msra.mxu0 0.0
          %588 = vmatprep.subr.mxu0 0.0
          %589 = vmatpush1.msra.mxu0 0.0
          %590 = vmatprep.subr.mxu0 0.0
          %591 = vmatpush1.msra.mxu0 0.0
          %592 = vmatprep.subr.mxu0 0.0
          %593 = vmatpush1.msra.mxu0 0.0
          %594 = vmatprep.subr.mxu0 0.0
          %595 = vmatpush1.msra.mxu0 0.0
          %596 = vmatprep.mubr.f32.mxu0 0.0
          %597 = vmatmul.mubr.f32.gmra.mrb[0].mxu0 %v530
          %v598 = vpop.f32.mrb[0].mxu0
          %v599 = vadd.f32 0.0, %v598
          %v600 = vpop.f32.mrb[0].mxu0
          %601 = vdwg.mxu0
          %v603 = vsel %vm371, %v520, 0
          %605 = vmatprep.subr.mxu0 0.0
          %606 = vmatpush1.msra.mxu0 %v356
          %607 = vmatprep.subr.mxu0 0.0
          %608 = vmatpush1.msra.mxu0 %v357
          %609 = vmatprep.subr.mxu0 0.0
          %610 = vmatpush1.msra.mxu0 %v358
          %611 = vmatprep.subr.mxu0 0.0
          %612 = vmatpush1.msra.mxu0 %v359
          %613 = vmatprep.subr.mxu0 0.0
          %614 = vmatpush1.msra.mxu0 0.0
          %615 = vmatprep.subr.mxu0 0.0
          %616 = vmatpush1.msra.mxu0 0.0
          %617 = vmatprep.subr.mxu0 0.0
          %618 = vmatpush1.msra.mxu0 0.0
          %619 = vmatprep.subr.mxu0 0.0
          %620 = vmatpush1.msra.mxu0 0.0
          %621 = vmatprep.subr.mxu0 0.0
          %622 = vmatpush1.msra.mxu0 0.0
          %623 = vmatprep.subr.mxu0 0.0
          %624 = vmatpush1.msra.mxu0 0.0
          %625 = vmatprep.subr.mxu0 0.0
          %626 = vmatpush1.msra.mxu0 0.0
          %627 = vmatprep.subr.mxu0 0.0
          %628 = vmatpush1.msra.mxu0 0.0
          %629 = vmatprep.subr.mxu0 0.0
          %630 = vmatpush1.msra.mxu0 0.0
          %631 = vmatprep.subr.mxu0 0.0
          %632 = vmatpush1.msra.mxu0 0.0
          %633 = vmatprep.subr.mxu0 0.0
          %634 = vmatpush1.msra.mxu0 0.0
          %635 = vmatprep.subr.mxu0 0.0
          %636 = vmatpush1.msra.mxu0 0.0
          %637 = vmatprep.subr.mxu0 0.0
          %638 = vmatpush1.msra.mxu0 0.0
          %639 = vmatprep.subr.mxu0 0.0
          %640 = vmatpush1.msra.mxu0 0.0
          %641 = vmatprep.subr.mxu0 0.0
          %642 = vmatpush1.msra.mxu0 0.0
          %643 = vmatprep.subr.mxu0 0.0
          %644 = vmatpush1.msra.mxu0 0.0
          %645 = vmatprep.subr.mxu0 0.0
          %646 = vmatpush1.msra.mxu0 0.0
          %647 = vmatprep.subr.mxu0 0.0
          %648 = vmatpush1.msra.mxu0 0.0
          %649 = vmatprep.subr.mxu0 0.0
          %650 = vmatpush1.msra.mxu0 0.0
          %651 = vmatprep.subr.mxu0 0.0
          %652 = vmatpush1.msra.mxu0 0.0
          %653 = vmatprep.subr.mxu0 0.0
          %654 = vmatpush1.msra.mxu0 0.0
          %655 = vmatprep.subr.mxu0 0.0
          %656 = vmatpush1.msra.mxu0 0.0
          %657 = vmatprep.subr.mxu0 0.0
          %658 = vmatpush1.msra.mxu0 0.0
          %659 = vmatprep.subr.mxu0 0.0
          %660 = vmatpush1.msra.mxu0 0.0
          %661 = vmatprep.subr.mxu0 0.0
          %662 = vmatpush1.msra.mxu0 0.0
          %663 = vmatprep.subr.mxu0 0.0
          %664 = vmatpush1.msra.mxu0 0.0
          %665 = vmatprep.subr.mxu0 0.0
          %666 = vmatpush1.msra.mxu0 0.0
          %667 = vmatprep.subr.mxu0 0.0
          %668 = vmatpush1.msra.mxu0 0.0
          %669 = vmatprep.mubr.f32.mxu0 0.0
          %670 = vmatmul.mubr.f32.gmra.mrb[0].mxu0 %v603
          %v671 = vpop.f32.mrb[0].mxu0
          %v672 = vadd.f32 %v599, %v671
          %v673 = vpop.f32.mrb[0].mxu0
          %674 = vdwg.mxu0
          %v676 = vlaneseq
          %v677 = vshrl.u32 %v676, 7
          %v678 = vsub.s32 0, %v677
          %v679 = vrot.slane %v360, %v678
          %v681 = vadd.f32 %v672, %v679
          %v682 = vxor.u32 %v681, 2147483648
          %v683 = vmul.f32 %v682, 1.442695
          %v684 = vpow.pop %v683
          %v685 = vadd.f32 %v684, 1.0
          %v686 = vrcp.pop %v685
          %v687 = vmul.f32 1.0, %v686
          %v688 = vtanh.pop %v681
          %690 = vrot.lane.b32.xlu0 %v366, 32
          %v691 = vpop.permute.xlu0 %690
          %v693 = vmul.f32 %v687, %v691
          %695 = vrot.lane.b32.xlu0 %v688, 64
          %v696 = vpop.permute.xlu0 %695
          %v698 = vmul.f32 %v687, %v696
          %700 = vrot.lane.b32.xlu0 %v698, 32
          %v701 = vpop.permute.xlu0 %700
          %v703 = vadd.f32 %v693, %v701
          %v704 = vtanh.pop %v703
          %706 = vrot.lane.b32.xlu0 %v704, 64
          %v707 = vpop.permute.xlu0 %706
          %v709 = vmul.f32 %v687, %v707
          %710 = vrot.lane.b32.xlu0 %v363, 96
          %v711 = vpop.permute.xlu0 %710
          %v713 = vsel %vm511, %v709, %v711
          %v714 = vsel %vm511, %v703, %v691
          %v715 = vsel %vm511, %v709, 0.0
          %v718 = vunpack.c.l.s4 1966171168
          %v719 = vunpack.c.0.s8 %v718
          %v720 = vlaneseq
          %v721 = vshrl.u32 %v720, 7
          %v722 = vsub.s32 %v719, %v721
          %v723 = vrot.slane %v715, %v722
          %v724 = vcombine.high %v723, %v723
          %v726 = vunpack.c.l.s4 1966171168
          %v727 = vunpack.c.0.s8 %v726
          %v728 = vlaneseq
          %v729 = vshrl.u32 %v728, 7
          %v730 = vsub.s32 %v727, %v729
          %v731 = vrot.slane %v723, %v730
          %v733 = vunpack.c.l.s4 1966171168
          %v734 = vunpack.c.0.s8 %v733
          %v735 = vlaneseq
          %v736 = vshrl.u32 %v735, 7
          %v737 = vsub.s32 %v734, %v736
          %v738 = vrot.slane %v724, %v737
          %v739 = vlaneseq
          %v740 = vshrl.u32 %v739, 7
          %v741 = vsub.s32 0, %v740
          %v742 = vrot.slane %v731, %v741
          %v743 = vlaneseq
          %v744 = vshrl.u32 %v743, 7
          %v745 = vsub.s32 0, %v744
          %v746 = vrot.slane %v738, %v745
          %747 = vrot.lane.b32.xlu0 %v742, 32
          %v748 = vpop.permute.xlu0 %747
          %749 = vrot.lane.b32.xlu0 %v746, 32
          %v750 = vpop.permute.xlu0 %749
          %vm753 = vcmask 253952
          %754 = vst.msk [vmem:[%s318] sm:$0x1] %vm753, %v748
          %755 = vst.msk [vmem:[%s318 + $0x8] sm:$0x1] %vm753, %v750
          %s756 = sadd.s32 %s332, 1
          %v757 = vstv %s756
          %vm758 = vcmp.gt.s32.totalorder %v346, %v757
          %v759 = vld [vmem:[%s284 + $0x1] sm:$0x1]
          %v760 = vld [vmem:[%s284 + $0x9] sm:$0x1]
          %761 = vmatprep.subr.mxu0 0.0
          %762 = vmatpush1.msra.mxu0 %v347
          %763 = vmatprep.subr.mxu0 0.0
          %764 = vmatpush1.msra.mxu0 %v348
          %765 = vmatprep.subr.mxu0 0.0
          %766 = vmatpush1.msra.mxu0 %v349
          %767 = vmatprep.subr.mxu0 0.0
          %768 = vmatpush1.msra.mxu0 %v350
          %769 = vmatprep.subr.mxu0 0.0
          %770 = vmatpush1.msra.mxu0 0.0
          %771 = vmatprep.subr.mxu0 0.0
          %772 = vmatpush1.msra.mxu0 0.0
          %773 = vmatprep.subr.mxu0 0.0
          %774 = vmatpush1.msra.mxu0 0.0
          %775 = vmatprep.subr.mxu0 0.0
          %776 = vmatpush1.msra.mxu0 0.0
          %777 = vmatprep.subr.mxu0 0.0
          %778 = vmatpush1.msra.mxu0 0.0
          %779 = vmatprep.subr.mxu0 0.0
          %780 = vmatpush1.msra.mxu0 0.0
          %781 = vmatprep.subr.mxu0 0.0
          %782 = vmatpush1.msra.mxu0 0.0
          %783 = vmatprep.subr.mxu0 0.0
          %784 = vmatpush1.msra.mxu0 0.0
          %785 = vmatprep.subr.mxu0 0.0
          %786 = vmatpush1.msra.mxu0 0.0
          %787 = vmatprep.subr.mxu0 0.0
          %788 = vmatpush1.msra.mxu0 0.0
          %789 = vmatprep.subr.mxu0 0.0
          %790 = vmatpush1.msra.mxu0 0.0
          %791 = vmatprep.subr.mxu0 0.0
          %792 = vmatpush1.msra.mxu0 0.0
          %793 = vmatprep.subr.mxu0 0.0
          %794 = vmatpush1.msra.mxu0 0.0
          %795 = vmatprep.subr.mxu0 0.0
          %796 = vmatpush1.msra.mxu0 0.0
          %797 = vmatprep.subr.mxu0 0.0
          %798 = vmatpush1.msra.mxu0 0.0
          %799 = vmatprep.subr.mxu0 0.0
          %800 = vmatpush1.msra.mxu0 0.0
          %801 = vmatprep.subr.mxu0 0.0
          %802 = vmatpush1.msra.mxu0 0.0
          %803 = vmatprep.subr.mxu0 0.0
          %804 = vmatpush1.msra.mxu0 0.0
          %805 = vmatprep.subr.mxu0 0.0
          %806 = vmatpush1.msra.mxu0 0.0
          %807 = vmatprep.subr.mxu0 0.0
          %808 = vmatpush1.msra.mxu0 0.0
          %809 = vmatprep.subr.mxu0 0.0
          %810 = vmatpush1.msra.mxu0 0.0
          %811 = vmatprep.subr.mxu0 0.0
          %812 = vmatpush1.msra.mxu0 0.0
          %813 = vmatprep.subr.mxu0 0.0
          %814 = vmatpush1.msra.mxu0 0.0
          %815 = vmatprep.subr.mxu0 0.0
          %816 = vmatpush1.msra.mxu0 0.0
          %817 = vmatprep.subr.mxu0 0.0
          %818 = vmatpush1.msra.mxu0 0.0
          %819 = vmatprep.subr.mxu0 0.0
          %820 = vmatpush1.msra.mxu0 0.0
          %821 = vmatprep.subr.mxu0 0.0
          %822 = vmatpush1.msra.mxu0 0.0
          %823 = vmatprep.subr.mxu0 0.0
          %824 = vmatpush1.msra.mxu0 0.0
          %825 = vmatprep.mubr.f32.mxu0 0.0
          %826 = vmatmul.mubr.f32.gmra.mrb[0].mxu0 %v603
          %v827 = vpop.f32.mrb[0].mxu0
          %v828 = vadd.f32 0.0, %v827
          %v829 = vpop.f32.mrb[0].mxu0
          %830 = vdwg.mxu0
          %v832 = vrot.slane %v828, 1
          %v835 = vadd.f32 %v759, %v828
          %v836 = vadd.f32 %v760, %v832
          %v837 = vxor.u32 %v835, 2147483648
          %v838 = vxor.u32 %v836, 2147483648
          %v839 = vmul.f32 %v837, 1.442695
          %v840 = vpow.pop %v839
          %v841 = vmul.f32 %v838, 1.442695
          %v842 = vpow.pop %v841
          %v843 = vadd.f32 %v840, 1.0
          %v844 = vadd.f32 %v842, 1.0
          %v845 = vrcp.pop %v843
          %v846 = vmul.f32 1.0, %v845
          %v847 = vrcp.pop %v844
          %v848 = vmul.f32 1.0, %v847
          %v849 = vtanh.pop %v835
          %v850 = vtanh.pop %v836
          %v852 = vrot.slane %v528, 1
          %853 = vrot.lane.b32.xlu0 %v528, 32
          %v854 = vpop.permute.xlu0 %853
          %855 = vrot.lane.b32.xlu0 %v852, 32
          %v856 = vpop.permute.xlu0 %855
          %v859 = vmul.f32 %v846, %v854
          %v860 = vmul.f32 %v848, %v856
          %863 = vrot.lane.b32.xlu0 %v849, 64
          %v864 = vpop.permute.xlu0 %863
          %865 = vrot.lane.b32.xlu0 %v850, 64
          %v866 = vpop.permute.xlu0 %865
          %v869 = vmul.f32 %v846, %v864
          %v870 = vmul.f32 %v848, %v866
          %873 = vrot.lane.b32.xlu0 %v869, 32
          %v874 = vpop.permute.xlu0 %873
          %875 = vrot.lane.b32.xlu0 %v870, 32
          %v876 = vpop.permute.xlu0 %875
          %v879 = vadd.f32 %v859, %v874
          %v880 = vadd.f32 %v860, %v876
          %v881 = vtanh.pop %v879
          %v882 = vtanh.pop %v880
          %885 = vrot.lane.b32.xlu0 %v881, 64
          %v886 = vpop.permute.xlu0 %885
          %887 = vrot.lane.b32.xlu0 %v882, 64
          %v888 = vpop.permute.xlu0 %887
          %v891 = vmul.f32 %v846, %v886
          %v892 = vmul.f32 %v848, %v888
          %v893 = vsel %vm758, 1, 0
          %894 = vset.pattern.permute.xlu0 0
          %895 = vperm.xlu0 %894, %v893
          %v896 = vpop.permute.xlu0 %895
          %vm897 = vcmp.eq.s32.totalorder %v896, 1
          %v900 = vrot.slane %v892, 7
          %v901 = vsel %vm515, %v900, %v891
          %902 = vrot.lane.b32.xlu0 %v901, 32
          %v903 = vpop.permute.xlu0 %902
          %v905 = vsel %vm897, %v903, %v520
          %v908 = vrot.slane %v880, 7
          %v909 = vsel %vm515, %v908, %v879
          %910 = vrot.lane.b32.xlu0 %v909, 96
          %v911 = vpop.permute.xlu0 %910
          %v913 = vsel %vm897, %v911, %v528
          %915 = vrot.lane.b32.xlu0 %v713, 32
          %v916 = vpop.permute.xlu0 %915
          %v917 = vsel %vm371, %v916, 0
          %919 = vmatprep.subr.mxu0 0.0
          %920 = vmatpush1.msra.mxu0 %v352
          %921 = vmatprep.subr.mxu0 0.0
          %922 = vmatpush1.msra.mxu0 %v353
          %923 = vmatprep.subr.mxu0 0.0
          %924 = vmatpush1.msra.mxu0 %v354
          %925 = vmatprep.subr.mxu0 0.0
          %926 = vmatpush1.msra.mxu0 %v355
          %927 = vmatprep.subr.mxu0 0.0
          %928 = vmatpush1.msra.mxu0 0.0
          %929 = vmatprep.subr.mxu0 0.0
          %930 = vmatpush1.msra.mxu0 0.0
          %931 = vmatprep.subr.mxu0 0.0
          %932 = vmatpush1.msra.mxu0 0.0
          %933 = vmatprep.subr.mxu0 0.0
          %934 = vmatpush1.msra.mxu0 0.0
          %935 = vmatprep.subr.mxu0 0.0
          %936 = vmatpush1.msra.mxu0 0.0
          %937 = vmatprep.subr.mxu0 0.0
          %938 = vmatpush1.msra.mxu0 0.0
          %939 = vmatprep.subr.mxu0 0.0
          %940 = vmatpush1.msra.mxu0 0.0
          %941 = vmatprep.subr.mxu0 0.0
          %942 = vmatpush1.msra.mxu0 0.0
          %943 = vmatprep.subr.mxu0 0.0
          %944 = vmatpush1.msra.mxu0 0.0
          %945 = vmatprep.subr.mxu0 0.0
          %946 = vmatpush1.msra.mxu0 0.0
          %947 = vmatprep.subr.mxu0 0.0
          %948 = vmatpush1.msra.mxu0 0.0
          %949 = vmatprep.subr.mxu0 0.0
          %950 = vmatpush1.msra.mxu0 0.0
          %951 = vmatprep.subr.mxu0 0.0
          %952 = vmatpush1.msra.mxu0 0.0
          %953 = vmatprep.subr.mxu0 0.0
          %954 = vmatpush1.msra.mxu0 0.0
          %955 = vmatprep.subr.mxu0 0.0
          %956 = vmatpush1.msra.mxu0 0.0
          %957 = vmatprep.subr.mxu0 0.0
          %958 = vmatpush1.msra.mxu0 0.0
          %959 = vmatprep.subr.mxu0 0.0
          %960 = vmatpush1.msra.mxu0 0.0
          %961 = vmatprep.subr.mxu0 0.0
          %962 = vmatpush1.msra.mxu0 0.0
          %963 = vmatprep.subr.mxu0 0.0
          %964 = vmatpush1.msra.mxu0 0.0
          %965 = vmatprep.subr.mxu0 0.0
          %966 = vmatpush1.msra.mxu0 0.0
          %967 = vmatprep.subr.mxu0 0.0
          %968 = vmatpush1.msra.mxu0 0.0
          %969 = vmatprep.subr.mxu0 0.0
          %970 = vmatpush1.msra.mxu0 0.0
          %971 = vmatprep.subr.mxu0 0.0
          %972 = vmatpush1.msra.mxu0 0.0
          %973 = vmatprep.subr.mxu0 0.0
          %974 = vmatpush1.msra.mxu0 0.0
          %975 = vmatprep.subr.mxu0 0.0
          %976 = vmatpush1.msra.mxu0 0.0
          %977 = vmatprep.subr.mxu0 0.0
          %978 = vmatpush1.msra.mxu0 0.0
          %979 = vmatprep.subr.mxu0 0.0
          %980 = vmatpush1.msra.mxu0 0.0
          %981 = vmatprep.subr.mxu0 0.0
          %982 = vmatpush1.msra.mxu0 0.0
          %983 = vmatprep.mubr.f32.mxu0 0.0
          %984 = vmatmul.mubr.f32.gmra.mrb[0].mxu0 %v917
          %v985 = vpop.f32.mrb[0].mxu0
          %v986 = vadd.f32 0.0, %v985
          %v987 = vpop.f32.mrb[0].mxu0
          %988 = vdwg.mxu0
          %v990 = vsel %vm371, %v905, 0
          %992 = vmatprep.subr.mxu0 0.0
          %993 = vmatpush1.msra.mxu0 %v356
          %994 = vmatprep.subr.mxu0 0.0
          %995 = vmatpush1.msra.mxu0 %v357
          %996 = vmatprep.subr.mxu0 0.0
          %997 = vmatpush1.msra.mxu0 %v358
          %998 = vmatprep.subr.mxu0 0.0
          %999 = vmatpush1.msra.mxu0 %v359
          %1000 = vmatprep.subr.mxu0 0.0
          %1001 = vmatpush1.msra.mxu0 0.0
          %1002 = vmatprep.subr.mxu0 0.0
          %1003 = vmatpush1.msra.mxu0 0.0
          %1004 = vmatprep.subr.mxu0 0.0
          %1005 = vmatpush1.msra.mxu0 0.0
          %1006 = vmatprep.subr.mxu0 0.0
          %1007 = vmatpush1.msra.mxu0 0.0
          %1008 = vmatprep.subr.mxu0 0.0
          %1009 = vmatpush1.msra.mxu0 0.0
          %1010 = vmatprep.subr.mxu0 0.0
          %1011 = vmatpush1.msra.mxu0 0.0
          %1012 = vmatprep.subr.mxu0 0.0
          %1013 = vmatpush1.msra.mxu0 0.0
          %1014 = vmatprep.subr.mxu0 0.0
          %1015 = vmatpush1.msra.mxu0 0.0
          %1016 = vmatprep.subr.mxu0 0.0
          %1017 = vmatpush1.msra.mxu0 0.0
          %1018 = vmatprep.subr.mxu0 0.0
          %1019 = vmatpush1.msra.mxu0 0.0
          %1020 = vmatprep.subr.mxu0 0.0
          %1021 = vmatpush1.msra.mxu0 0.0
          %1022 = vmatprep.subr.mxu0 0.0
          %1023 = vmatpush1.msra.mxu0 0.0
          %1024 = vmatprep.subr.mxu0 0.0
          %1025 = vmatpush1.msra.mxu0 0.0
          %1026 = vmatprep.subr.mxu0 0.0
          %1027 = vmatpush1.msra.mxu0 0.0
          %1028 = vmatprep.subr.mxu0 0.0
          %1029 = vmatpush1.msra.mxu0 0.0
          %1030 = vmatprep.subr.mxu0 0.0
          %1031 = vmatpush1.msra.mxu0 0.0
          %1032 = vmatprep.subr.mxu0 0.0
          %1033 = vmatpush1.msra.mxu0 0.0
          %1034 = vmatprep.subr.mxu0 0.0
          %1035 = vmatpush1.msra.mxu0 0.0
          %1036 = vmatprep.subr.mxu0 0.0
          %1037 = vmatpush1.msra.mxu0 0.0
          %1038 = vmatprep.subr.mxu0 0.0
          %1039 = vmatpush1.msra.mxu0 0.0
          %1040 = vmatprep.subr.mxu0 0.0
          %1041 = vmatpush1.msra.mxu0 0.0
          %1042 = vmatprep.subr.mxu0 0.0
          %1043 = vmatpush1.msra.mxu0 0.0
          %1044 = vmatprep.subr.mxu0 0.0
          %1045 = vmatpush1.msra.mxu0 0.0
          %1046 = vmatprep.subr.mxu0 0.0
          %1047 = vmatpush1.msra.mxu0 0.0
          %1048 = vmatprep.subr.mxu0 0.0
          %1049 = vmatpush1.msra.mxu0 0.0
          %1050 = vmatprep.subr.mxu0 0.0
          %1051 = vmatpush1.msra.mxu0 0.0
          %1052 = vmatprep.subr.mxu0 0.0
          %1053 = vmatpush1.msra.mxu0 0.0
          %1054 = vmatprep.subr.mxu0 0.0
          %1055 = vmatpush1.msra.mxu0 0.0
          %1056 = vmatprep.mubr.f32.mxu0 0.0
          %1057 = vmatmul.mubr.f32.gmra.mrb[0].mxu0 %v990
          %v1058 = vpop.f32.mrb[0].mxu0
          %v1059 = vadd.f32 %v986, %v1058
          %v1060 = vpop.f32.mrb[0].mxu0
          %1061 = vdwg.mxu0
          %v1062 = vadd.f32 %v1059, %v679
          %v1063 = vxor.u32 %v1062, 2147483648
          %v1064 = vmul.f32 %v1063, 1.442695
          %v1065 = vpow.pop %v1064
          %v1066 = vadd.f32 %v1065, 1.0
          %v1067 = vrcp.pop %v1066
          %v1068 = vmul.f32 1.0, %v1067
          %v1069 = vtanh.pop %v1062
          %v1070 = vmul.f32 %v1068, %v714
          %1072 = vrot.lane.b32.xlu0 %v1069, 64
          %v1073 = vpop.permute.xlu0 %1072
          %v1075 = vmul.f32 %v1068, %v1073
          %1077 = vrot.lane.b32.xlu0 %v1075, 32
          %v1078 = vpop.permute.xlu0 %1077
          %v1080 = vadd.f32 %v1070, %v1078
          %v1081 = vtanh.pop %v1080
          %1083 = vrot.lane.b32.xlu0 %v1081, 64
          %v1084 = vpop.permute.xlu0 %1083
          %v1086 = vmul.f32 %v1068, %v1084
          %v1087 = vsel %vm897, %v1086, %v713
          %v1088 = vsel %vm897, %v1080, %v714
          %v1089 = vsel %vm897, %v1086, 0.0
          %v1092 = vunpack.c.l.s4 1966171168
          %v1093 = vunpack.c.0.s8 %v1092
          %v1094 = vlaneseq
          %v1095 = vshrl.u32 %v1094, 7
          %v1096 = vsub.s32 %v1093, %v1095
          %v1097 = vrot.slane %v1089, %v1096
          %v1098 = vcombine.high %v1097, %v1097
          %v1100 = vunpack.c.l.s4 1966171168
          %v1101 = vunpack.c.0.s8 %v1100
          %v1102 = vlaneseq
          %v1103 = vshrl.u32 %v1102, 7
          %v1104 = vsub.s32 %v1101, %v1103
          %v1105 = vrot.slane %v1097, %v1104
          %v1107 = vunpack.c.l.s4 1966171168
          %v1108 = vunpack.c.0.s8 %v1107
          %v1109 = vlaneseq
          %v1110 = vshrl.u32 %v1109, 7
          %v1111 = vsub.s32 %v1108, %v1110
          %v1112 = vrot.slane %v1098, %v1111
          %v1113 = vlaneseq
          %v1114 = vshrl.u32 %v1113, 7
          %v1115 = vsub.s32 0, %v1114
          %v1116 = vrot.slane %v1105, %v1115
          %v1117 = vlaneseq
          %v1118 = vshrl.u32 %v1117, 7
          %v1119 = vsub.s32 0, %v1118
          %v1120 = vrot.slane %v1112, %v1119
          %1121 = vrot.lane.b32.xlu0 %v1116, 32
          %v1122 = vpop.permute.xlu0 %1121
          %1123 = vrot.lane.b32.xlu0 %v1120, 32
          %v1124 = vpop.permute.xlu0 %1123
          %1127 = vst.msk [vmem:[%s318 + $0x1] sm:$0x1] %vm753, %v1122
          %1128 = vst.msk [vmem:[%s318 + $0x9] sm:$0x1] %vm753, %v1124
          %s1129 = sadd.s32 %s332, 2
          %v1130 = vstv %s1129
          %vm1131 = vcmp.gt.s32.totalorder %v346, %v1130
          %v1132 = vld [vmem:[%s284 + $0x2] sm:$0x1]
          %v1133 = vld [vmem:[%s284 + $0xa] sm:$0x1]
          %1134 = vmatprep.subr.mxu0 0.0
          %1135 = vmatpush1.msra.mxu0 %v347
          %1136 = vmatprep.subr.mxu0 0.0
          %1137 = vmatpush1.msra.mxu0 %v348
          %1138 = vmatprep.subr.mxu0 0.0
          %1139 = vmatpush1.msra.mxu0 %v349
          %1140 = vmatprep.subr.mxu0 0.0
          %1141 = vmatpush1.msra.mxu0 %v350
          %1142 = vmatprep.subr.mxu0 0.0
          %1143 = vmatpush1.msra.mxu0 0.0
          %1144 = vmatprep.subr.mxu0 0.0
          %1145 = vmatpush1.msra.mxu0 0.0
          %1146 = vmatprep.subr.mxu0 0.0
          %1147 = vmatpush1.msra.mxu0 0.0
          %1148 = vmatprep.subr.mxu0 0.0
          %1149 = vmatpush1.msra.mxu0 0.0
          %1150 = vmatprep.subr.mxu0 0.0
          %1151 = vmatpush1.msra.mxu0 0.0
          %1152 = vmatprep.subr.mxu0 0.0
          %1153 = vmatpush1.msra.mxu0 0.0
          %1154 = vmatprep.subr.mxu0 0.0
          %1155 = vmatpush1.msra.mxu0 0.0
          %1156 = vmatprep.subr.mxu0 0.0
          %1157 = vmatpush1.msra.mxu0 0.0
          %1158 = vmatprep.subr.mxu0 0.0
          %1159 = vmatpush1.msra.mxu0 0.0
          %1160 = vmatprep.subr.mxu0 0.0
          %1161 = vmatpush1.msra.mxu0 0.0
          %1162 = vmatprep.subr.mxu0 0.0
          %1163 = vmatpush1.msra.mxu0 0.0
          %1164 = vmatprep.subr.mxu0 0.0
          %1165 = vmatpush1.msra.mxu0 0.0
          %1166 = vmatprep.subr.mxu0 0.0
          %1167 = vmatpush1.msra.mxu0 0.0
          %1168 = vmatprep.subr.mxu0 0.0
          %1169 = vmatpush1.msra.mxu0 0.0
          %1170 = vmatprep.subr.mxu0 0.0
          %1171 = vmatpush1.msra.mxu0 0.0
          %1172 = vmatprep.subr.mxu0 0.0
          %1173 = vmatpush1.msra.mxu0 0.0
          %1174 = vmatprep.subr.mxu0 0.0
          %1175 = vmatpush1.msra.mxu0 0.0
          %1176 = vmatprep.subr.mxu0 0.0
          %1177 = vmatpush1.msra.mxu0 0.0
          %1178 = vmatprep.subr.mxu0 0.0
          %1179 = vmatpush1.msra.mxu0 0.0
          %1180 = vmatprep.subr.mxu0 0.0
          %1181 = vmatpush1.msra.mxu0 0.0
          %1182 = vmatprep.subr.mxu0 0.0
          %1183 = vmatpush1.msra.mxu0 0.0
          %1184 = vmatprep.subr.mxu0 0.0
          %1185 = vmatpush1.msra.mxu0 0.0
          %1186 = vmatprep.subr.mxu0 0.0
          %1187 = vmatpush1.msra.mxu0 0.0
          %1188 = vmatprep.subr.mxu0 0.0
          %1189 = vmatpush1.msra.mxu0 0.0
          %1190 = vmatprep.subr.mxu0 0.0
          %1191 = vmatpush1.msra.mxu0 0.0
          %1192 = vmatprep.subr.mxu0 0.0
          %1193 = vmatpush1.msra.mxu0 0.0
          %1194 = vmatprep.subr.mxu0 0.0
          %1195 = vmatpush1.msra.mxu0 0.0
          %1196 = vmatprep.subr.mxu0 0.0
          %1197 = vmatpush1.msra.mxu0 0.0
          %1198 = vmatprep.mubr.f32.mxu0 0.0
          %1199 = vmatmul.mubr.f32.gmra.mrb[0].mxu0 %v990
          %v1200 = vpop.f32.mrb[0].mxu0
          %v1201 = vadd.f32 0.0, %v1200
          %v1202 = vpop.f32.mrb[0].mxu0
          %1203 = vdwg.mxu0
          %v1205 = vrot.slane %v1201, 1
          %v1208 = vadd.f32 %v1132, %v1201
          %v1209 = vadd.f32 %v1133, %v1205
          %v1210 = vxor.u32 %v1208, 2147483648
          %v1211 = vxor.u32 %v1209, 2147483648
          %v1212 = vmul.f32 %v1210, 1.442695
          %v1213 = vpow.pop %v1212
          %v1214 = vmul.f32 %v1211, 1.442695
          %v1215 = vpow.pop %v1214
          %v1216 = vadd.f32 %v1213, 1.0
          %v1217 = vadd.f32 %v1215, 1.0
          %v1218 = vrcp.pop %v1216
          %v1219 = vmul.f32 1.0, %v1218
          %v1220 = vrcp.pop %v1217
          %v1221 = vmul.f32 1.0, %v1220
          %v1222 = vtanh.pop %v1208
          %v1223 = vtanh.pop %v1209
          %v1225 = vrot.slane %v913, 1
          %1226 = vrot.lane.b32.xlu0 %v913, 32
          %v1227 = vpop.permute.xlu0 %1226
          %1228 = vrot.lane.b32.xlu0 %v1225, 32
          %v1229 = vpop.permute.xlu0 %1228
          %v1232 = vmul.f32 %v1219, %v1227
          %v1233 = vmul.f32 %v1221, %v1229
          %1236 = vrot.lane.b32.xlu0 %v1222, 64
          %v1237 = vpop.permute.xlu0 %1236
          %1238 = vrot.lane.b32.xlu0 %v1223, 64
          %v1239 = vpop.permute.xlu0 %1238
          %v1242 = vmul.f32 %v1219, %v1237
          %v1243 = vmul.f32 %v1221, %v1239
          %1246 = vrot.lane.b32.xlu0 %v1242, 32
          %v1247 = vpop.permute.xlu0 %1246
          %1248 = vrot.lane.b32.xlu0 %v1243, 32
          %v1249 = vpop.permute.xlu0 %1248
          %v1252 = vadd.f32 %v1232, %v1247
          %v1253 = vadd.f32 %v1233, %v1249
          %v1254 = vtanh.pop %v1252
          %v1255 = vtanh.pop %v1253
          %1258 = vrot.lane.b32.xlu0 %v1254, 64
          %v1259 = vpop.permute.xlu0 %1258
          %1260 = vrot.lane.b32.xlu0 %v1255, 64
          %v1261 = vpop.permute.xlu0 %1260
          %v1264 = vmul.f32 %v1219, %v1259
          %v1265 = vmul.f32 %v1221, %v1261
          %v1266 = vsel %vm1131, 1, 0
          %1267 = vset.pattern.permute.xlu0 0
          %1268 = vperm.xlu0 %1267, %v1266
          %v1269 = vpop.permute.xlu0 %1268
          %vm1270 = vcmp.eq.s32.totalorder %v1269, 1
          %v1273 = vrot.slane %v1265, 7
          %v1274 = vsel %vm515, %v1273, %v1264
          %1275 = vrot.lane.b32.xlu0 %v1274, 32
          %v1276 = vpop.permute.xlu0 %1275
          %v1278 = vsel %vm1270, %v1276, %v905
          %v1281 = vrot.slane %v1253, 7
          %v1282 = vsel %vm515, %v1281, %v1252
          %1283 = vrot.lane.b32.xlu0 %v1282, 96
          %v1284 = vpop.permute.xlu0 %1283
          %v1286 = vsel %vm1270, %v1284, %v913
          %1288 = vrot.lane.b32.xlu0 %v1087, 32
          %v1289 = vpop.permute.xlu0 %1288
          %v1290 = vsel %vm371, %v1289, 0
          %1292 = vmatprep.subr.mxu0 0.0
          %1293 = vmatpush1.msra.mxu0 %v352
          %1294 = vmatprep.subr.mxu0 0.0
          %1295 = vmatpush1.msra.mxu0 %v353
          %1296 = vmatprep.subr.mxu0 0.0
          %1297 = vmatpush1.msra.mxu0 %v354
          %1298 = vmatprep.subr.mxu0 0.0
          %1299 = vmatpush1.msra.mxu0 %v355
          %1300 = vmatprep.subr.mxu0 0.0
          %1301 = vmatpush1.msra.mxu0 0.0
          %1302 = vmatprep.subr.mxu0 0.0
          %1303 = vmatpush1.msra.mxu0 0.0
          %1304 = vmatprep.subr.mxu0 0.0
          %1305 = vmatpush1.msra.mxu0 0.0
          %1306 = vmatprep.subr.mxu0 0.0
          %1307 = vmatpush1.msra.mxu0 0.0
          %1308 = vmatprep.subr.mxu0 0.0
          %1309 = vmatpush1.msra.mxu0 0.0
          %1310 = vmatprep.subr.mxu0 0.0
          %1311 = vmatpush1.msra.mxu0 0.0
          %1312 = vmatprep.subr.mxu0 0.0
          %1313 = vmatpush1.msra.mxu0 0.0
          %1314 = vmatprep.subr.mxu0 0.0
          %1315 = vmatpush1.msra.mxu0 0.0
          %1316 = vmatprep.subr.mxu0 0.0
          %1317 = vmatpush1.msra.mxu0 0.0
          %1318 = vmatprep.subr.mxu0 0.0
          %1319 = vmatpush1.msra.mxu0 0.0
          %1320 = vmatprep.subr.mxu0 0.0
          %1321 = vmatpush1.msra.mxu0 0.0
          %1322 = vmatprep.subr.mxu0 0.0
          %1323 = vmatpush1.msra.mxu0 0.0
          %1324 = vmatprep.subr.mxu0 0.0
          %1325 = vmatpush1.msra.mxu0 0.0
          %1326 = vmatprep.subr.mxu0 0.0
          %1327 = vmatpush1.msra.mxu0 0.0
          %1328 = vmatprep.subr.mxu0 0.0
          %1329 = vmatpush1.msra.mxu0 0.0
          %1330 = vmatprep.subr.mxu0 0.0
          %1331 = vmatpush1.msra.mxu0 0.0
          %1332 = vmatprep.subr.mxu0 0.0
          %1333 = vmatpush1.msra.mxu0 0.0
          %1334 = vmatprep.subr.mxu0 0.0
          %1335 = vmatpush1.msra.mxu0 0.0
          %1336 = vmatprep.subr.mxu0 0.0
          %1337 = vmatpush1.msra.mxu0 0.0
          %1338 = vmatprep.subr.mxu0 0.0
          %1339 = vmatpush1.msra.mxu0 0.0
          %1340 = vmatprep.subr.mxu0 0.0
          %1341 = vmatpush1.msra.mxu0 0.0
          %1342 = vmatprep.subr.mxu0 0.0
          %1343 = vmatpush1.msra.mxu0 0.0
          %1344 = vmatprep.subr.mxu0 0.0
          %1345 = vmatpush1.msra.mxu0 0.0
          %1346 = vmatprep.subr.mxu0 0.0
          %1347 = vmatpush1.msra.mxu0 0.0
          %1348 = vmatprep.subr.mxu0 0.0
          %1349 = vmatpush1.msra.mxu0 0.0
          %1350 = vmatprep.subr.mxu0 0.0
          %1351 = vmatpush1.msra.mxu0 0.0
          %1352 = vmatprep.subr.mxu0 0.0
          %1353 = vmatpush1.msra.mxu0 0.0
          %1354 = vmatprep.subr.mxu0 0.0
          %1355 = vmatpush1.msra.mxu0 0.0
          %1356 = vmatprep.mubr.f32.mxu0 0.0
          %1357 = vmatmul.mubr.f32.gmra.mrb[0].mxu0 %v1290
          %v1358 = vpop.f32.mrb[0].mxu0
          %v1359 = vadd.f32 0.0, %v1358
          %v1360 = vpop.f32.mrb[0].mxu0
          %1361 = vdwg.mxu0
          %v1363 = vsel %vm371, %v1278, 0
          %1365 = vmatprep.subr.mxu0 0.0
          %1366 = vmatpush1.msra.mxu0 %v356
          %1367 = vmatprep.subr.mxu0 0.0
          %1368 = vmatpush1.msra.mxu0 %v357
          %1369 = vmatprep.subr.mxu0 0.0
          %1370 = vmatpush1.msra.mxu0 %v358
          %1371 = vmatprep.subr.mxu0 0.0
          %1372 = vmatpush1.msra.mxu0 %v359
          %1373 = vmatprep.subr.mxu0 0.0
          %1374 = vmatpush1.msra.mxu0 0.0
          %1375 = vmatprep.subr.mxu0 0.0
          %1376 = vmatpush1.msra.mxu0 0.0
          %1377 = vmatprep.subr.mxu0 0.0
          %1378 = vmatpush1.msra.mxu0 0.0
          %1379 = vmatprep.subr.mxu0 0.0
          %1380 = vmatpush1.msra.mxu0 0.0
          %1381 = vmatprep.subr.mxu0 0.0
          %1382 = vmatpush1.msra.mxu0 0.0
          %1383 = vmatprep.subr.mxu0 0.0
          %1384 = vmatpush1.msra.mxu0 0.0
          %1385 = vmatprep.subr.mxu0 0.0
          %1386 = vmatpush1.msra.mxu0 0.0
          %1387 = vmatprep.subr.mxu0 0.0
          %1388 = vmatpush1.msra.mxu0 0.0
          %1389 = vmatprep.subr.mxu0 0.0
          %1390 = vmatpush1.msra.mxu0 0.0
          %1391 = vmatprep.subr.mxu0 0.0
          %1392 = vmatpush1.msra.mxu0 0.0
          %1393 = vmatprep.subr.mxu0 0.0
          %1394 = vmatpush1.msra.mxu0 0.0
          %1395 = vmatprep.subr.mxu0 0.0
          %1396 = vmatpush1.msra.mxu0 0.0
          %1397 = vmatprep.subr.mxu0 0.0
          %1398 = vmatpush1.msra.mxu0 0.0
          %1399 = vmatprep.subr.mxu0 0.0
          %1400 = vmatpush1.msra.mxu0 0.0
          %1401 = vmatprep.subr.mxu0 0.0
          %1402 = vmatpush1.msra.mxu0 0.0
          %1403 = vmatprep.subr.mxu0 0.0
          %1404 = vmatpush1.msra.mxu0 0.0
          %1405 = vmatprep.subr.mxu0 0.0
          %1406 = vmatpush1.msra.mxu0 0.0
          %1407 = vmatprep.subr.mxu0 0.0
          %1408 = vmatpush1.msra.mxu0 0.0
          %1409 = vmatprep.subr.mxu0 0.0
          %1410 = vmatpush1.msra.mxu0 0.0
          %1411 = vmatprep.subr.mxu0 0.0
          %1412 = vmatpush1.msra.mxu0 0.0
          %1413 = vmatprep.subr.mxu0 0.0
          %1414 = vmatpush1.msra.mxu0 0.0
          %1415 = vmatprep.subr.mxu0 0.0
          %1416 = vmatpush1.msra.mxu0 0.0
          %1417 = vmatprep.subr.mxu0 0.0
          %1418 = vmatpush1.msra.mxu0 0.0
          %1419 = vmatprep.subr.mxu0 0.0
          %1420 = vmatpush1.msra.mxu0 0.0
          %1421 = vmatprep.subr.mxu0 0.0
          %1422 = vmatpush1.msra.mxu0 0.0
          %1423 = vmatprep.subr.mxu0 0.0
          %1424 = vmatpush1.msra.mxu0 0.0
          %1425 = vmatprep.subr.mxu0 0.0
          %1426 = vmatpush1.msra.mxu0 0.0
          %1427 = vmatprep.subr.mxu0 0.0
          %1428 = vmatpush1.msra.mxu0 0.0
          %1429 = vmatprep.mubr.f32.mxu0 0.0
          %1430 = vmatmul.mubr.f32.gmra.mrb[0].mxu0 %v1363
          %v1431 = vpop.f32.mrb[0].mxu0
          %v1432 = vadd.f32 %v1359, %v1431
          %v1433 = vpop.f32.mrb[0].mxu0
          %1434 = vdwg.mxu0
          %v1435 = vadd.f32 %v1432, %v679
          %v1436 = vxor.u32 %v1435, 2147483648
          %v1437 = vmul.f32 %v1436, 1.442695
          %v1438 = vpow.pop %v1437
          %v1439 = vadd.f32 %v1438, 1.0
          %v1440 = vrcp.pop %v1439
          %v1441 = vmul.f32 1.0, %v1440
          %v1442 = vtanh.pop %v1435
          %v1443 = vmul.f32 %v1441, %v1088
          %1445 = vrot.lane.b32.xlu0 %v1442, 64
          %v1446 = vpop.permute.xlu0 %1445
          %v1448 = vmul.f32 %v1441, %v1446
          %1450 = vrot.lane.b32.xlu0 %v1448, 32
          %v1451 = vpop.permute.xlu0 %1450
          %v1453 = vadd.f32 %v1443, %v1451
          %v1454 = vtanh.pop %v1453
          %1456 = vrot.lane.b32.xlu0 %v1454, 64
          %v1457 = vpop.permute.xlu0 %1456
          %v1459 = vmul.f32 %v1441, %v1457
          %v1460 = vsel %vm1270, %v1459, %v1087
          %v1461 = vsel %vm1270, %v1453, %v1088
          %v1462 = vsel %vm1270, %v1459, 0.0
          %v1465 = vunpack.c.l.s4 1966171168
          %v1466 = vunpack.c.0.s8 %v1465
          %v1467 = vlaneseq
          %v1468 = vshrl.u32 %v1467, 7
          %v1469 = vsub.s32 %v1466, %v1468
          %v1470 = vrot.slane %v1462, %v1469
          %v1471 = vcombine.high %v1470, %v1470
          %v1473 = vunpack.c.l.s4 1966171168
          %v1474 = vunpack.c.0.s8 %v1473
          %v1475 = vlaneseq
          %v1476 = vshrl.u32 %v1475, 7
          %v1477 = vsub.s32 %v1474, %v1476
          %v1478 = vrot.slane %v1470, %v1477
          %v1480 = vunpack.c.l.s4 1966171168
          %v1481 = vunpack.c.0.s8 %v1480
          %v1482 = vlaneseq
          %v1483 = vshrl.u32 %v1482, 7
          %v1484 = vsub.s32 %v1481, %v1483
          %v1485 = vrot.slane %v1471, %v1484
          %v1486 = vlaneseq
          %v1487 = vshrl.u32 %v1486, 7
          %v1488 = vsub.s32 0, %v1487
          %v1489 = vrot.slane %v1478, %v1488
          %v1490 = vlaneseq
          %v1491 = vshrl.u32 %v1490, 7
          %v1492 = vsub.s32 0, %v1491
          %v1493 = vrot.slane %v1485, %v1492
          %1494 = vrot.lane.b32.xlu0 %v1489, 32
          %v1495 = vpop.permute.xlu0 %1494
          %1496 = vrot.lane.b32.xlu0 %v1493, 32
          %v1497 = vpop.permute.xlu0 %1496
          %1500 = vst.msk [vmem:[%s318 + $0x2] sm:$0x1] %vm753, %v1495
          %1501 = vst.msk [vmem:[%s318 + $0xa] sm:$0x1] %vm753, %v1497
          %s1502 = sadd.s32 %s332, 3
          %v1503 = vstv %s1502
          %vm1504 = vcmp.gt.s32.totalorder %v346, %v1503
          %v1505 = vld [vmem:[%s284 + $0x3] sm:$0x1]
          %v1506 = vld [vmem:[%s284 + $0xb] sm:$0x1]
          %1507 = vmatprep.subr.mxu0 0.0
          %1508 = vmatpush1.msra.mxu0 %v347
          %1509 = vmatprep.subr.mxu0 0.0
          %1510 = vmatpush1.msra.mxu0 %v348
          %1511 = vmatprep.subr.mxu0 0.0
          %1512 = vmatpush1.msra.mxu0 %v349
          %1513 = vmatprep.subr.mxu0 0.0
          %1514 = vmatpush1.msra.mxu0 %v350
          %1515 = vmatprep.subr.mxu0 0.0
          %1516 = vmatpush1.msra.mxu0 0.0
          %1517 = vmatprep.subr.mxu0 0.0
          %1518 = vmatpush1.msra.mxu0 0.0
          %1519 = vmatprep.subr.mxu0 0.0
          %1520 = vmatpush1.msra.mxu0 0.0
          %1521 = vmatprep.subr.mxu0 0.0
          %1522 = vmatpush1.msra.mxu0 0.0
          %1523 = vmatprep.subr.mxu0 0.0
          %1524 = vmatpush1.msra.mxu0 0.0
          %1525 = vmatprep.subr.mxu0 0.0
          %1526 = vmatpush1.msra.mxu0 0.0
          %1527 = vmatprep.subr.mxu0 0.0
          %1528 = vmatpush1.msra.mxu0 0.0
          %1529 = vmatprep.subr.mxu0 0.0
          %1530 = vmatpush1.msra.mxu0 0.0
          %1531 = vmatprep.subr.mxu0 0.0
          %1532 = vmatpush1.msra.mxu0 0.0
          %1533 = vmatprep.subr.mxu0 0.0
          %1534 = vmatpush1.msra.mxu0 0.0
          %1535 = vmatprep.subr.mxu0 0.0
          %1536 = vmatpush1.msra.mxu0 0.0
          %1537 = vmatprep.subr.mxu0 0.0
          %1538 = vmatpush1.msra.mxu0 0.0
          %1539 = vmatprep.subr.mxu0 0.0
          %1540 = vmatpush1.msra.mxu0 0.0
          %1541 = vmatprep.subr.mxu0 0.0
          %1542 = vmatpush1.msra.mxu0 0.0
          %1543 = vmatprep.subr.mxu0 0.0
          %1544 = vmatpush1.msra.mxu0 0.0
          %1545 = vmatprep.subr.mxu0 0.0
          %1546 = vmatpush1.msra.mxu0 0.0
          %1547 = vmatprep.subr.mxu0 0.0
          %1548 = vmatpush1.msra.mxu0 0.0
          %1549 = vmatprep.subr.mxu0 0.0
          %1550 = vmatpush1.msra.mxu0 0.0
          %1551 = vmatprep.subr.mxu0 0.0
          %1552 = vmatpush1.msra.mxu0 0.0
          %1553 = vmatprep.subr.mxu0 0.0
          %1554 = vmatpush1.msra.mxu0 0.0
          %1555 = vmatprep.subr.mxu0 0.0
          %1556 = vmatpush1.msra.mxu0 0.0
          %1557 = vmatprep.subr.mxu0 0.0
          %1558 = vmatpush1.msra.mxu0 0.0
          %1559 = vmatprep.subr.mxu0 0.0
          %1560 = vmatpush1.msra.mxu0 0.0
          %1561 = vmatprep.subr.mxu0 0.0
          %1562 = vmatpush1.msra.mxu0 0.0
          %1563 = vmatprep.subr.mxu0 0.0
          %1564 = vmatpush1.msra.mxu0 0.0
          %1565 = vmatprep.subr.mxu0 0.0
          %1566 = vmatpush1.msra.mxu0 0.0
          %1567 = vmatprep.subr.mxu0 0.0
          %1568 = vmatpush1.msra.mxu0 0.0
          %1569 = vmatprep.subr.mxu0 0.0
          %1570 = vmatpush1.msra.mxu0 0.0
          %1571 = vmatprep.mubr.f32.mxu0 0.0
          %1572 = vmatmul.mubr.f32.gmra.mrb[0].mxu0 %v1363
          %v1573 = vpop.f32.mrb[0].mxu0
          %v1574 = vadd.f32 0.0, %v1573
          %v1575 = vpop.f32.mrb[0].mxu0
          %1576 = vdwg.mxu0
          %v1578 = vrot.slane %v1574, 1
          %v1581 = vadd.f32 %v1505, %v1574
          %v1582 = vadd.f32 %v1506, %v1578
          %v1583 = vxor.u32 %v1581, 2147483648
          %v1584 = vxor.u32 %v1582, 2147483648
          %v1585 = vmul.f32 %v1583, 1.442695
          %v1586 = vpow.pop %v1585
          %v1587 = vmul.f32 %v1584, 1.442695
          %v1588 = vpow.pop %v1587
          %v1589 = vadd.f32 %v1586, 1.0
          %v1590 = vadd.f32 %v1588, 1.0
          %v1591 = vrcp.pop %v1589
          %v1592 = vmul.f32 1.0, %v1591
          %v1593 = vrcp.pop %v1590
          %v1594 = vmul.f32 1.0, %v1593
          %v1595 = vtanh.pop %v1581
          %v1596 = vtanh.pop %v1582
          %v1598 = vrot.slane %v1286, 1
          %1599 = vrot.lane.b32.xlu0 %v1286, 32
          %v1600 = vpop.permute.xlu0 %1599
          %1601 = vrot.lane.b32.xlu0 %v1598, 32
          %v1602 = vpop.permute.xlu0 %1601
          %v1605 = vmul.f32 %v1592, %v1600
          %v1606 = vmul.f32 %v1594, %v1602
          %1609 = vrot.lane.b32.xlu0 %v1595, 64
          %v1610 = vpop.permute.xlu0 %1609
          %1611 = vrot.lane.b32.xlu0 %v1596, 64
          %v1612 = vpop.permute.xlu0 %1611
          %v1615 = vmul.f32 %v1592, %v1610
          %v1616 = vmul.f32 %v1594, %v1612
          %1619 = vrot.lane.b32.xlu0 %v1615, 32
          %v1620 = vpop.permute.xlu0 %1619
          %1621 = vrot.lane.b32.xlu0 %v1616, 32
          %v1622 = vpop.permute.xlu0 %1621
          %v1625 = vadd.f32 %v1605, %v1620
          %v1626 = vadd.f32 %v1606, %v1622
          %v1627 = vtanh.pop %v1625
          %v1628 = vtanh.pop %v1626
          %1631 = vrot.lane.b32.xlu0 %v1627, 64
          %v1632 = vpop.permute.xlu0 %1631
          %1633 = vrot.lane.b32.xlu0 %v1628, 64
          %v1634 = vpop.permute.xlu0 %1633
          %v1637 = vmul.f32 %v1592, %v1632
          %v1638 = vmul.f32 %v1594, %v1634
          %v1639 = vsel %vm1504, 1, 0
          %1640 = vset.pattern.permute.xlu0 0
          %1641 = vperm.xlu0 %1640, %v1639
          %v1642 = vpop.permute.xlu0 %1641
          %vm1643 = vcmp.eq.s32.totalorder %v1642, 1
          %v1646 = vrot.slane %v1638, 7
          %v1647 = vsel %vm515, %v1646, %v1637
          %1648 = vrot.lane.b32.xlu0 %v1647, 32
          %v1649 = vpop.permute.xlu0 %1648
          %v1651 = vsel %vm1643, %v1649, %v1278
          %v1654 = vrot.slane %v1626, 7
          %v1655 = vsel %vm515, %v1654, %v1625
          %1656 = vrot.lane.b32.xlu0 %v1655, 96
          %v1657 = vpop.permute.xlu0 %1656
          %v1659 = vsel %vm1643, %v1657, %v1286
          %1661 = vrot.lane.b32.xlu0 %v1460, 32
          %v1662 = vpop.permute.xlu0 %1661
          %v1663 = vsel %vm371, %v1662, 0
          %1665 = vmatprep.subr.mxu0 0.0
          %1666 = vmatpush1.msra.mxu0 %v352
          %1667 = vmatprep.subr.mxu0 0.0
          %1668 = vmatpush1.msra.mxu0 %v353
          %1669 = vmatprep.subr.mxu0 0.0
          %1670 = vmatpush1.msra.mxu0 %v354
          %1671 = vmatprep.subr.mxu0 0.0
          %1672 = vmatpush1.msra.mxu0 %v355
          %1673 = vmatprep.subr.mxu0 0.0
          %1674 = vmatpush1.msra.mxu0 0.0
          %1675 = vmatprep.subr.mxu0 0.0
          %1676 = vmatpush1.msra.mxu0 0.0
          %1677 = vmatprep.subr.mxu0 0.0
          %1678 = vmatpush1.msra.mxu0 0.0
          %1679 = vmatprep.subr.mxu0 0.0
          %1680 = vmatpush1.msra.mxu0 0.0
          %1681 = vmatprep.subr.mxu0 0.0
          %1682 = vmatpush1.msra.mxu0 0.0
          %1683 = vmatprep.subr.mxu0 0.0
          %1684 = vmatpush1.msra.mxu0 0.0
          %1685 = vmatprep.subr.mxu0 0.0
          %1686 = vmatpush1.msra.mxu0 0.0
          %1687 = vmatprep.subr.mxu0 0.0
          %1688 = vmatpush1.msra.mxu0 0.0
          %1689 = vmatprep.subr.mxu0 0.0
          %1690 = vmatpush1.msra.mxu0 0.0
          %1691 = vmatprep.subr.mxu0 0.0
          %1692 = vmatpush1.msra.mxu0 0.0
          %1693 = vmatprep.subr.mxu0 0.0
          %1694 = vmatpush1.msra.mxu0 0.0
          %1695 = vmatprep.subr.mxu0 0.0
          %1696 = vmatpush1.msra.mxu0 0.0
          %1697 = vmatprep.subr.mxu0 0.0
          %1698 = vmatpush1.msra.mxu0 0.0
          %1699 = vmatprep.subr.mxu0 0.0
          %1700 = vmatpush1.msra.mxu0 0.0
          %1701 = vmatprep.subr.mxu0 0.0
          %1702 = vmatpush1.msra.mxu0 0.0
          %1703 = vmatprep.subr.mxu0 0.0
          %1704 = vmatpush1.msra.mxu0 0.0
          %1705 = vmatprep.subr.mxu0 0.0
          %1706 = vmatpush1.msra.mxu0 0.0
          %1707 = vmatprep.subr.mxu0 0.0
          %1708 = vmatpush1.msra.mxu0 0.0
          %1709 = vmatprep.subr.mxu0 0.0
          %1710 = vmatpush1.msra.mxu0 0.0
          %1711 = vmatprep.subr.mxu0 0.0
          %1712 = vmatpush1.msra.mxu0 0.0
          %1713 = vmatprep.subr.mxu0 0.0
          %1714 = vmatpush1.msra.mxu0 0.0
          %1715 = vmatprep.subr.mxu0 0.0
          %1716 = vmatpush1.msra.mxu0 0.0
          %1717 = vmatprep.subr.mxu0 0.0
          %1718 = vmatpush1.msra.mxu0 0.0
          %1719 = vmatprep.subr.mxu0 0.0
          %1720 = vmatpush1.msra.mxu0 0.0
          %1721 = vmatprep.subr.mxu0 0.0
          %1722 = vmatpush1.msra.mxu0 0.0
          %1723 = vmatprep.subr.mxu0 0.0
          %1724 = vmatpush1.msra.mxu0 0.0
          %1725 = vmatprep.subr.mxu0 0.0
          %1726 = vmatpush1.msra.mxu0 0.0
          %1727 = vmatprep.subr.mxu0 0.0
          %1728 = vmatpush1.msra.mxu0 0.0
          %1729 = vmatprep.mubr.f32.mxu0 0.0
          %1730 = vmatmul.mubr.f32.gmra.mrb[0].mxu0 %v1663
          %v1731 = vpop.f32.mrb[0].mxu0
          %v1732 = vadd.f32 0.0, %v1731
          %v1733 = vpop.f32.mrb[0].mxu0
          %1734 = vdwg.mxu0
          %v1736 = vsel %vm371, %v1651, 0
          %1738 = vmatprep.subr.mxu0 0.0
          %1739 = vmatpush1.msra.mxu0 %v356
          %1740 = vmatprep.subr.mxu0 0.0
          %1741 = vmatpush1.msra.mxu0 %v357
          %1742 = vmatprep.subr.mxu0 0.0
          %1743 = vmatpush1.msra.mxu0 %v358
          %1744 = vmatprep.subr.mxu0 0.0
          %1745 = vmatpush1.msra.mxu0 %v359
          %1746 = vmatprep.subr.mxu0 0.0
          %1747 = vmatpush1.msra.mxu0 0.0
          %1748 = vmatprep.subr.mxu0 0.0
          %1749 = vmatpush1.msra.mxu0 0.0
          %1750 = vmatprep.subr.mxu0 0.0
          %1751 = vmatpush1.msra.mxu0 0.0
          %1752 = vmatprep.subr.mxu0 0.0
          %1753 = vmatpush1.msra.mxu0 0.0
          %1754 = vmatprep.subr.mxu0 0.0
          %1755 = vmatpush1.msra.mxu0 0.0
          %1756 = vmatprep.subr.mxu0 0.0
          %1757 = vmatpush1.msra.mxu0 0.0
          %1758 = vmatprep.subr.mxu0 0.0
          %1759 = vmatpush1.msra.mxu0 0.0
          %1760 = vmatprep.subr.mxu0 0.0
          %1761 = vmatpush1.msra.mxu0 0.0
          %1762 = vmatprep.subr.mxu0 0.0
          %1763 = vmatpush1.msra.mxu0 0.0
          %1764 = vmatprep.subr.mxu0 0.0
          %1765 = vmatpush1.msra.mxu0 0.0
          %1766 = vmatprep.subr.mxu0 0.0
          %1767 = vmatpush1.msra.mxu0 0.0
          %1768 = vmatprep.subr.mxu0 0.0
          %1769 = vmatpush1.msra.mxu0 0.0
          %1770 = vmatprep.subr.mxu0 0.0
          %1771 = vmatpush1.msra.mxu0 0.0
          %1772 = vmatprep.subr.mxu0 0.0
          %1773 = vmatpush1.msra.mxu0 0.0
          %1774 = vmatprep.subr.mxu0 0.0
          %1775 = vmatpush1.msra.mxu0 0.0
          %1776 = vmatprep.subr.mxu0 0.0
          %1777 = vmatpush1.msra.mxu0 0.0
          %1778 = vmatprep.subr.mxu0 0.0
          %1779 = vmatpush1.msra.mxu0 0.0
          %1780 = vmatprep.subr.mxu0 0.0
          %1781 = vmatpush1.msra.mxu0 0.0
          %1782 = vmatprep.subr.mxu0 0.0
          %1783 = vmatpush1.msra.mxu0 0.0
          %1784 = vmatprep.subr.mxu0 0.0
          %1785 = vmatpush1.msra.mxu0 0.0
          %1786 = vmatprep.subr.mxu0 0.0
          %1787 = vmatpush1.msra.mxu0 0.0
          %1788 = vmatprep.subr.mxu0 0.0
          %1789 = vmatpush1.msra.mxu0 0.0
          %1790 = vmatprep.subr.mxu0 0.0
          %1791 = vmatpush1.msra.mxu0 0.0
          %1792 = vmatprep.subr.mxu0 0.0
          %1793 = vmatpush1.msra.mxu0 0.0
          %1794 = vmatprep.subr.mxu0 0.0
          %1795 = vmatpush1.msra.mxu0 0.0
          %1796 = vmatprep.subr.mxu0 0.0
          %1797 = vmatpush1.msra.mxu0 0.0
          %1798 = vmatprep.subr.mxu0 0.0
          %1799 = vmatpush1.msra.mxu0 0.0
          %1800 = vmatprep.subr.mxu0 0.0
          %1801 = vmatpush1.msra.mxu0 0.0
          %1802 = vmatprep.mubr.f32.mxu0 0.0
          %1803 = vmatmul.mubr.f32.gmra.mrb[0].mxu0 %v1736
          %v1804 = vpop.f32.mrb[0].mxu0
          %v1805 = vadd.f32 %v1732, %v1804
          %v1806 = vpop.f32.mrb[0].mxu0
          %1807 = vdwg.mxu0
          %v1808 = vadd.f32 %v1805, %v679
          %v1809 = vxor.u32 %v1808, 2147483648
          %v1810 = vmul.f32 %v1809, 1.442695
          %v1811 = vpow.pop %v1810
          %v1812 = vadd.f32 %v1811, 1.0
          %v1813 = vrcp.pop %v1812
          %v1814 = vmul.f32 1.0, %v1813
          %v1815 = vtanh.pop %v1808
          %v1816 = vmul.f32 %v1814, %v1461
          %1818 = vrot.lane.b32.xlu0 %v1815, 64
          %v1819 = vpop.permute.xlu0 %1818
          %v1821 = vmul.f32 %v1814, %v1819
          %1823 = vrot.lane.b32.xlu0 %v1821, 32
          %v1824 = vpop.permute.xlu0 %1823
          %v1826 = vadd.f32 %v1816, %v1824
          %v1827 = vtanh.pop %v1826
          %1829 = vrot.lane.b32.xlu0 %v1827, 64
          %v1830 = vpop.permute.xlu0 %1829
          %v1832 = vmul.f32 %v1814, %v1830
          %v1833 = vsel %vm1643, %v1832, %v1460
          %v1834 = vsel %vm1643, %v1826, %v1461
          %v1835 = vsel %vm1643, %v1832, 0.0
          %v1838 = vunpack.c.l.s4 1966171168
          %v1839 = vunpack.c.0.s8 %v1838
          %v1840 = vlaneseq
          %v1841 = vshrl.u32 %v1840, 7
          %v1842 = vsub.s32 %v1839, %v1841
          %v1843 = vrot.slane %v1835, %v1842
          %v1844 = vcombine.high %v1843, %v1843
          %v1846 = vunpack.c.l.s4 1966171168
          %v1847 = vunpack.c.0.s8 %v1846
          %v1848 = vlaneseq
          %v1849 = vshrl.u32 %v1848, 7
          %v1850 = vsub.s32 %v1847, %v1849
          %v1851 = vrot.slane %v1843, %v1850
          %v1853 = vunpack.c.l.s4 1966171168
          %v1854 = vunpack.c.0.s8 %v1853
          %v1855 = vlaneseq
          %v1856 = vshrl.u32 %v1855, 7
          %v1857 = vsub.s32 %v1854, %v1856
          %v1858 = vrot.slane %v1844, %v1857
          %v1859 = vlaneseq
          %v1860 = vshrl.u32 %v1859, 7
          %v1861 = vsub.s32 0, %v1860
          %v1862 = vrot.slane %v1851, %v1861
          %v1863 = vlaneseq
          %v1864 = vshrl.u32 %v1863, 7
          %v1865 = vsub.s32 0, %v1864
          %v1866 = vrot.slane %v1858, %v1865
          %1867 = vrot.lane.b32.xlu0 %v1862, 32
          %v1868 = vpop.permute.xlu0 %1867
          %1869 = vrot.lane.b32.xlu0 %v1866, 32
          %v1870 = vpop.permute.xlu0 %1869
          %1873 = vst.msk [vmem:[%s318 + $0x3] sm:$0x1] %vm753, %v1868
          %1874 = vst.msk [vmem:[%s318 + $0xb] sm:$0x1] %vm753, %v1870
          %s1875 = sadd.s32 %s332, 4
          %v1876 = vstv %s1875
          %vm1877 = vcmp.gt.s32.totalorder %v346, %v1876
          %v1878 = vld [vmem:[%s284 + $0x4] sm:$0x1]
          %v1879 = vld [vmem:[%s284 + $0xc] sm:$0x1]
          %1880 = vmatprep.subr.mxu0 0.0
          %1881 = vmatpush1.msra.mxu0 %v347
          %1882 = vmatprep.subr.mxu0 0.0
          %1883 = vmatpush1.msra.mxu0 %v348
          %1884 = vmatprep.subr.mxu0 0.0
          %1885 = vmatpush1.msra.mxu0 %v349
          %1886 = vmatprep.subr.mxu0 0.0
          %1887 = vmatpush1.msra.mxu0 %v350
          %1888 = vmatprep.subr.mxu0 0.0
          %1889 = vmatpush1.msra.mxu0 0.0
          %1890 = vmatprep.subr.mxu0 0.0
          %1891 = vmatpush1.msra.mxu0 0.0
          %1892 = vmatprep.subr.mxu0 0.0
          %1893 = vmatpush1.msra.mxu0 0.0
          %1894 = vmatprep.subr.mxu0 0.0
          %1895 = vmatpush1.msra.mxu0 0.0
          %1896 = vmatprep.subr.mxu0 0.0
          %1897 = vmatpush1.msra.mxu0 0.0
          %1898 = vmatprep.subr.mxu0 0.0
          %1899 = vmatpush1.msra.mxu0 0.0
          %1900 = vmatprep.subr.mxu0 0.0
          %1901 = vmatpush1.msra.mxu0 0.0
          %1902 = vmatprep.subr.mxu0 0.0
          %1903 = vmatpush1.msra.mxu0 0.0
          %1904 = vmatprep.subr.mxu0 0.0
          %1905 = vmatpush1.msra.mxu0 0.0
          %1906 = vmatprep.subr.mxu0 0.0
          %1907 = vmatpush1.msra.mxu0 0.0
          %1908 = vmatprep.subr.mxu0 0.0
          %1909 = vmatpush1.msra.mxu0 0.0
          %1910 = vmatprep.subr.mxu0 0.0
          %1911 = vmatpush1.msra.mxu0 0.0
          %1912 = vmatprep.subr.mxu0 0.0
          %1913 = vmatpush1.msra.mxu0 0.0
          %1914 = vmatprep.subr.mxu0 0.0
          %1915 = vmatpush1.msra.mxu0 0.0
          %1916 = vmatprep.subr.mxu0 0.0
          %1917 = vmatpush1.msra.mxu0 0.0
          %1918 = vmatprep.subr.mxu0 0.0
          %1919 = vmatpush1.msra.mxu0 0.0
          %1920 = vmatprep.subr.mxu0 0.0
          %1921 = vmatpush1.msra.mxu0 0.0
          %1922 = vmatprep.subr.mxu0 0.0
          %1923 = vmatpush1.msra.mxu0 0.0
          %1924 = vmatprep.subr.mxu0 0.0
          %1925 = vmatpush1.msra.mxu0 0.0
          %1926 = vmatprep.subr.mxu0 0.0
          %1927 = vmatpush1.msra.mxu0 0.0
          %1928 = vmatprep.subr.mxu0 0.0
          %1929 = vmatpush1.msra.mxu0 0.0
          %1930 = vmatprep.subr.mxu0 0.0
          %1931 = vmatpush1.msra.mxu0 0.0
          %1932 = vmatprep.subr.mxu0 0.0
          %1933 = vmatpush1.msra.mxu0 0.0
          %1934 = vmatprep.subr.mxu0 0.0
          %1935 = vmatpush1.msra.mxu0 0.0
          %1936 = vmatprep.subr.mxu0 0.0
          %1937 = vmatpush1.msra.mxu0 0.0
          %1938 = vmatprep.subr.mxu0 0.0
          %1939 = vmatpush1.msra.mxu0 0.0
          %1940 = vmatprep.subr.mxu0 0.0
          %1941 = vmatpush1.msra.mxu0 0.0
          %1942 = vmatprep.subr.mxu0 0.0
          %1943 = vmatpush1.msra.mxu0 0.0
          %1944 = vmatprep.mubr.f32.mxu0 0.0
          %1945 = vmatmul.mubr.f32.gmra.mrb[0].mxu0 %v1736
          %v1946 = vpop.f32.mrb[0].mxu0
          %v1947 = vadd.f32 0.0, %v1946
          %v1948 = vpop.f32.mrb[0].mxu0
          %1949 = vdwg.mxu0
          %v1951 = vrot.slane %v1947, 1
          %v1954 = vadd.f32 %v1878, %v1947
          %v1955 = vadd.f32 %v1879, %v1951
          %v1956 = vxor.u32 %v1954, 2147483648
          %v1957 = vxor.u32 %v1955, 2147483648
          %v1958 = vmul.f32 %v1956, 1.442695
          %v1959 = vpow.pop %v1958
          %v1960 = vmul.f32 %v1957, 1.442695
          %v1961 = vpow.pop %v1960
          %v1962 = vadd.f32 %v1959, 1.0
          %v1963 = vadd.f32 %v1961, 1.0
          %v1964 = vrcp.pop %v1962
          %v1965 = vmul.f32 1.0, %v1964
          %v1966 = vrcp.pop %v1963
          %v1967 = vmul.f32 1.0, %v1966
          %v1968 = vtanh.pop %v1954
          %v1969 = vtanh.pop %v1955
          %v1971 = vrot.slane %v1659, 1
          %1972 = vrot.lane.b32.xlu0 %v1659, 32
          %v1973 = vpop.permute.xlu0 %1972
          %1974 = vrot.lane.b32.xlu0 %v1971, 32
          %v1975 = vpop.permute.xlu0 %1974
          %v1978 = vmul.f32 %v1965, %v1973
          %v1979 = vmul.f32 %v1967, %v1975
          %1982 = vrot.lane.b32.xlu0 %v1968, 64
          %v1983 = vpop.permute.xlu0 %1982
          %1984 = vrot.lane.b32.xlu0 %v1969, 64
          %v1985 = vpop.permute.xlu0 %1984
          %v1988 = vmul.f32 %v1965, %v1983
          %v1989 = vmul.f32 %v1967, %v1985
          %1992 = vrot.lane.b32.xlu0 %v1988, 32
          %v1993 = vpop.permute.xlu0 %1992
          %1994 = vrot.lane.b32.xlu0 %v1989, 32
          %v1995 = vpop.permute.xlu0 %1994
          %v1998 = vadd.f32 %v1978, %v1993
          %v1999 = vadd.f32 %v1979, %v1995
          %v2000 = vtanh.pop %v1998
          %v2001 = vtanh.pop %v1999
          %2004 = vrot.lane.b32.xlu0 %v2000, 64
          %v2005 = vpop.permute.xlu0 %2004
          %2006 = vrot.lane.b32.xlu0 %v2001, 64
          %v2007 = vpop.permute.xlu0 %2006
          %v2010 = vmul.f32 %v1965, %v2005
          %v2011 = vmul.f32 %v1967, %v2007
          %v2012 = vsel %vm1877, 1, 0
          %2013 = vset.pattern.permute.xlu0 0
          %2014 = vperm.xlu0 %2013, %v2012
          %v2015 = vpop.permute.xlu0 %2014
          %vm2016 = vcmp.eq.s32.totalorder %v2015, 1
          %v2019 = vrot.slane %v2011, 7
          %v2020 = vsel %vm515, %v2019, %v2010
          %2021 = vrot.lane.b32.xlu0 %v2020, 32
          %v2022 = vpop.permute.xlu0 %2021
          %v2024 = vsel %vm2016, %v2022, %v1651
          %v2027 = vrot.slane %v1999, 7
          %v2028 = vsel %vm515, %v2027, %v1998
          %2029 = vrot.lane.b32.xlu0 %v2028, 96
          %v2030 = vpop.permute.xlu0 %2029
          %v2032 = vsel %vm2016, %v2030, %v1659
          %2034 = vrot.lane.b32.xlu0 %v1833, 32
          %v2035 = vpop.permute.xlu0 %2034
          %v2036 = vsel %vm371, %v2035, 0
          %2038 = vmatprep.subr.mxu0 0.0
          %2039 = vmatpush1.msra.mxu0 %v352
          %2040 = vmatprep.subr.mxu0 0.0
          %2041 = vmatpush1.msra.mxu0 %v353
          %2042 = vmatprep.subr.mxu0 0.0
          %2043 = vmatpush1.msra.mxu0 %v354
          %2044 = vmatprep.subr.mxu0 0.0
          %2045 = vmatpush1.msra.mxu0 %v355
          %2046 = vmatprep.subr.mxu0 0.0
          %2047 = vmatpush1.msra.mxu0 0.0
          %2048 = vmatprep.subr.mxu0 0.0
          %2049 = vmatpush1.msra.mxu0 0.0
          %2050 = vmatprep.subr.mxu0 0.0
          %2051 = vmatpush1.msra.mxu0 0.0
          %2052 = vmatprep.subr.mxu0 0.0
          %2053 = vmatpush1.msra.mxu0 0.0
          %2054 = vmatprep.subr.mxu0 0.0
          %2055 = vmatpush1.msra.mxu0 0.0
          %2056 = vmatprep.subr.mxu0 0.0
          %2057 = vmatpush1.msra.mxu0 0.0
          %2058 = vmatprep.subr.mxu0 0.0
          %2059 = vmatpush1.msra.mxu0 0.0
          %2060 = vmatprep.subr.mxu0 0.0
          %2061 = vmatpush1.msra.mxu0 0.0
          %2062 = vmatprep.subr.mxu0 0.0
          %2063 = vmatpush1.msra.mxu0 0.0
          %2064 = vmatprep.subr.mxu0 0.0
          %2065 = vmatpush1.msra.mxu0 0.0
          %2066 = vmatprep.subr.mxu0 0.0
          %2067 = vmatpush1.msra.mxu0 0.0
          %2068 = vmatprep.subr.mxu0 0.0
          %2069 = vmatpush1.msra.mxu0 0.0
          %2070 = vmatprep.subr.mxu0 0.0
          %2071 = vmatpush1.msra.mxu0 0.0
          %2072 = vmatprep.subr.mxu0 0.0
          %2073 = vmatpush1.msra.mxu0 0.0
          %2074 = vmatprep.subr.mxu0 0.0
          %2075 = vmatpush1.msra.mxu0 0.0
          %2076 = vmatprep.subr.mxu0 0.0
          %2077 = vmatpush1.msra.mxu0 0.0
          %2078 = vmatprep.subr.mxu0 0.0
          %2079 = vmatpush1.msra.mxu0 0.0
          %2080 = vmatprep.subr.mxu0 0.0
          %2081 = vmatpush1.msra.mxu0 0.0
          %2082 = vmatprep.subr.mxu0 0.0
          %2083 = vmatpush1.msra.mxu0 0.0
          %2084 = vmatprep.subr.mxu0 0.0
          %2085 = vmatpush1.msra.mxu0 0.0
          %2086 = vmatprep.subr.mxu0 0.0
          %2087 = vmatpush1.msra.mxu0 0.0
          %2088 = vmatprep.subr.mxu0 0.0
          %2089 = vmatpush1.msra.mxu0 0.0
          %2090 = vmatprep.subr.mxu0 0.0
          %2091 = vmatpush1.msra.mxu0 0.0
          %2092 = vmatprep.subr.mxu0 0.0
          %2093 = vmatpush1.msra.mxu0 0.0
          %2094 = vmatprep.subr.mxu0 0.0
          %2095 = vmatpush1.msra.mxu0 0.0
          %2096 = vmatprep.subr.mxu0 0.0
          %2097 = vmatpush1.msra.mxu0 0.0
          %2098 = vmatprep.subr.mxu0 0.0
          %2099 = vmatpush1.msra.mxu0 0.0
          %2100 = vmatprep.subr.mxu0 0.0
          %2101 = vmatpush1.msra.mxu0 0.0
          %2102 = vmatprep.mubr.f32.mxu0 0.0
          %2103 = vmatmul.mubr.f32.gmra.mrb[0].mxu0 %v2036
          %v2104 = vpop.f32.mrb[0].mxu0
          %v2105 = vadd.f32 0.0, %v2104
          %v2106 = vpop.f32.mrb[0].mxu0
          %2107 = vdwg.mxu0
          %v2109 = vsel %vm371, %v2024, 0
          %2111 = vmatprep.subr.mxu0 0.0
          %2112 = vmatpush1.msra.mxu0 %v356
          %2113 = vmatprep.subr.mxu0 0.0
          %2114 = vmatpush1.msra.mxu0 %v357
          %2115 = vmatprep.subr.mxu0 0.0
          %2116 = vmatpush1.msra.mxu0 %v358
          %2117 = vmatprep.subr.mxu0 0.0
          %2118 = vmatpush1.msra.mxu0 %v359
          %2119 = vmatprep.subr.mxu0 0.0
          %2120 = vmatpush1.msra.mxu0 0.0
          %2121 = vmatprep.subr.mxu0 0.0
          %2122 = vmatpush1.msra.mxu0 0.0
          %2123 = vmatprep.subr.mxu0 0.0
          %2124 = vmatpush1.msra.mxu0 0.0
          %2125 = vmatprep.subr.mxu0 0.0
          %2126 = vmatpush1.msra.mxu0 0.0
          %2127 = vmatprep.subr.mxu0 0.0
          %2128 = vmatpush1.msra.mxu0 0.0
          %2129 = vmatprep.subr.mxu0 0.0
          %2130 = vmatpush1.msra.mxu0 0.0
          %2131 = vmatprep.subr.mxu0 0.0
          %2132 = vmatpush1.msra.mxu0 0.0
          %2133 = vmatprep.subr.mxu0 0.0
          %2134 = vmatpush1.msra.mxu0 0.0
          %2135 = vmatprep.subr.mxu0 0.0
          %2136 = vmatpush1.msra.mxu0 0.0
          %2137 = vmatprep.subr.mxu0 0.0
          %2138 = vmatpush1.msra.mxu0 0.0
          %2139 = vmatprep.subr.mxu0 0.0
          %2140 = vmatpush1.msra.mxu0 0.0
          %2141 = vmatprep.subr.mxu0 0.0
          %2142 = vmatpush1.msra.mxu0 0.0
          %2143 = vmatprep.subr.mxu0 0.0
          %2144 = vmatpush1.msra.mxu0 0.0
          %2145 = vmatprep.subr.mxu0 0.0
          %2146 = vmatpush1.msra.mxu0 0.0
          %2147 = vmatprep.subr.mxu0 0.0
          %2148 = vmatpush1.msra.mxu0 0.0
          %2149 = vmatprep.subr.mxu0 0.0
          %2150 = vmatpush1.msra.mxu0 0.0
          %2151 = vmatprep.subr.mxu0 0.0
          %2152 = vmatpush1.msra.mxu0 0.0
          %2153 = vmatprep.subr.mxu0 0.0
          %2154 = vmatpush1.msra.mxu0 0.0
          %2155 = vmatprep.subr.mxu0 0.0
          %2156 = vmatpush1.msra.mxu0 0.0
          %2157 = vmatprep.subr.mxu0 0.0
          %2158 = vmatpush1.msra.mxu0 0.0
          %2159 = vmatprep.subr.mxu0 0.0
          %2160 = vmatpush1.msra.mxu0 0.0
          %2161 = vmatprep.subr.mxu0 0.0
          %2162 = vmatpush1.msra.mxu0 0.0
          %2163 = vmatprep.subr.mxu0 0.0
          %2164 = vmatpush1.msra.mxu0 0.0
          %2165 = vmatprep.subr.mxu0 0.0
          %2166 = vmatpush1.msra.mxu0 0.0
          %2167 = vmatprep.subr.mxu0 0.0
          %2168 = vmatpush1.msra.mxu0 0.0
          %2169 = vmatprep.subr.mxu0 0.0
          %2170 = vmatpush1.msra.mxu0 0.0
          %2171 = vmatprep.subr.mxu0 0.0
          %2172 = vmatpush1.msra.mxu0 0.0
          %2173 = vmatprep.subr.mxu0 0.0
          %2174 = vmatpush1.msra.mxu0 0.0
          %2175 = vmatprep.mubr.f32.mxu0 0.0
          %2176 = vmatmul.mubr.f32.gmra.mrb[0].mxu0 %v2109
          %v2177 = vpop.f32.mrb[0].mxu0
          %v2178 = vadd.f32 %v2105, %v2177
          %v2179 = vpop.f32.mrb[0].mxu0
          %2180 = vdwg.mxu0
          %v2181 = vadd.f32 %v2178, %v679
          %v2182 = vxor.u32 %v2181, 2147483648
          %v2183 = vmul.f32 %v2182, 1.442695
          %v2184 = vpow.pop %v2183
          %v2185 = vadd.f32 %v2184, 1.0
          %v2186 = vrcp.pop %v2185
          %v2187 = vmul.f32 1.0, %v2186
          %v2188 = vtanh.pop %v2181
          %v2189 = vmul.f32 %v2187, %v1834
          %2191 = vrot.lane.b32.xlu0 %v2188, 64
          %v2192 = vpop.permute.xlu0 %2191
          %v2194 = vmul.f32 %v2187, %v2192
          %2196 = vrot.lane.b32.xlu0 %v2194, 32
          %v2197 = vpop.permute.xlu0 %2196
          %v2199 = vadd.f32 %v2189, %v2197
          %v2200 = vtanh.pop %v2199
          %2202 = vrot.lane.b32.xlu0 %v2200, 64
          %v2203 = vpop.permute.xlu0 %2202
          %v2205 = vmul.f32 %v2187, %v2203
          %v2206 = vsel %vm2016, %v2205, %v1833
          %v2207 = vsel %vm2016, %v2199, %v1834
          %v2208 = vsel %vm2016, %v2205, 0.0
          %v2211 = vunpack.c.l.s4 1966171168
          %v2212 = vunpack.c.0.s8 %v2211
          %v2213 = vlaneseq
          %v2214 = vshrl.u32 %v2213, 7
          %v2215 = vsub.s32 %v2212, %v2214
          %v2216 = vrot.slane %v2208, %v2215
          %v2217 = vcombine.high %v2216, %v2216
          %v2219 = vunpack.c.l.s4 1966171168
          %v2220 = vunpack.c.0.s8 %v2219
          %v2221 = vlaneseq
          %v2222 = vshrl.u32 %v2221, 7
          %v2223 = vsub.s32 %v2220, %v2222
          %v2224 = vrot.slane %v2216, %v2223
          %v2226 = vunpack.c.l.s4 1966171168
          %v2227 = vunpack.c.0.s8 %v2226
          %v2228 = vlaneseq
          %v2229 = vshrl.u32 %v2228, 7
          %v2230 = vsub.s32 %v2227, %v2229
          %v2231 = vrot.slane %v2217, %v2230
          %v2232 = vlaneseq
          %v2233 = vshrl.u32 %v2232, 7
          %v2234 = vsub.s32 0, %v2233
          %v2235 = vrot.slane %v2224, %v2234
          %v2236 = vlaneseq
          %v2237 = vshrl.u32 %v2236, 7
          %v2238 = vsub.s32 0, %v2237
          %v2239 = vrot.slane %v2231, %v2238
          %2240 = vrot.lane.b32.xlu0 %v2235, 32
          %v2241 = vpop.permute.xlu0 %2240
          %2242 = vrot.lane.b32.xlu0 %v2239, 32
          %v2243 = vpop.permute.xlu0 %2242
          %2246 = vst.msk [vmem:[%s318 + $0x4] sm:$0x1] %vm753, %v2241
          %2247 = vst.msk [vmem:[%s318 + $0xc] sm:$0x1] %vm753, %v2243
          %s2248 = sadd.s32 %s332, 5
          %v2249 = vstv %s2248
          %vm2250 = vcmp.gt.s32.totalorder %v346, %v2249
          %v2251 = vld [vmem:[%s284 + $0x5] sm:$0x1]
          %v2252 = vld [vmem:[%s284 + $0xd] sm:$0x1]
          %2253 = vmatprep.subr.mxu0 0.0
          %2254 = vmatpush1.msra.mxu0 %v347
          %2255 = vmatprep.subr.mxu0 0.0
          %2256 = vmatpush1.msra.mxu0 %v348
          %2257 = vmatprep.subr.mxu0 0.0
          %2258 = vmatpush1.msra.mxu0 %v349
          %2259 = vmatprep.subr.mxu0 0.0
          %2260 = vmatpush1.msra.mxu0 %v350
          %2261 = vmatprep.subr.mxu0 0.0
          %2262 = vmatpush1.msra.mxu0 0.0
          %2263 = vmatprep.subr.mxu0 0.0
          %2264 = vmatpush1.msra.mxu0 0.0
          %2265 = vmatprep.subr.mxu0 0.0
          %2266 = vmatpush1.msra.mxu0 0.0
          %2267 = vmatprep.subr.mxu0 0.0
          %2268 = vmatpush1.msra.mxu0 0.0
          %2269 = vmatprep.subr.mxu0 0.0
          %2270 = vmatpush1.msra.mxu0 0.0
          %2271 = vmatprep.subr.mxu0 0.0
          %2272 = vmatpush1.msra.mxu0 0.0
          %2273 = vmatprep.subr.mxu0 0.0
          %2274 = vmatpush1.msra.mxu0 0.0
          %2275 = vmatprep.subr.mxu0 0.0
          %2276 = vmatpush1.msra.mxu0 0.0
          %2277 = vmatprep.subr.mxu0 0.0
          %2278 = vmatpush1.msra.mxu0 0.0
          %2279 = vmatprep.subr.mxu0 0.0
          %2280 = vmatpush1.msra.mxu0 0.0
          %2281 = vmatprep.subr.mxu0 0.0
          %2282 = vmatpush1.msra.mxu0 0.0
          %2283 = vmatprep.subr.mxu0 0.0
          %2284 = vmatpush1.msra.mxu0 0.0
          %2285 = vmatprep.subr.mxu0 0.0
          %2286 = vmatpush1.msra.mxu0 0.0
          %2287 = vmatprep.subr.mxu0 0.0
          %2288 = vmatpush1.msra.mxu0 0.0
          %2289 = vmatprep.subr.mxu0 0.0
          %2290 = vmatpush1.msra.mxu0 0.0
          %2291 = vmatprep.subr.mxu0 0.0
          %2292 = vmatpush1.msra.mxu0 0.0
          %2293 = vmatprep.subr.mxu0 0.0
          %2294 = vmatpush1.msra.mxu0 0.0
          %2295 = vmatprep.subr.mxu0 0.0
          %2296 = vmatpush1.msra.mxu0 0.0
          %2297 = vmatprep.subr.mxu0 0.0
          %2298 = vmatpush1.msra.mxu0 0.0
          %2299 = vmatprep.subr.mxu0 0.0
          %2300 = vmatpush1.msra.mxu0 0.0
          %2301 = vmatprep.subr.mxu0 0.0
          %2302 = vmatpush1.msra.mxu0 0.0
          %2303 = vmatprep.subr.mxu0 0.0
          %2304 = vmatpush1.msra.mxu0 0.0
          %2305 = vmatprep.subr.mxu0 0.0
          %2306 = vmatpush1.msra.mxu0 0.0
          %2307 = vmatprep.subr.mxu0 0.0
          %2308 = vmatpush1.msra.mxu0 0.0
          %2309 = vmatprep.subr.mxu0 0.0
          %2310 = vmatpush1.msra.mxu0 0.0
          %2311 = vmatprep.subr.mxu0 0.0
          %2312 = vmatpush1.msra.mxu0 0.0
          %2313 = vmatprep.subr.mxu0 0.0
          %2314 = vmatpush1.msra.mxu0 0.0
          %2315 = vmatprep.subr.mxu0 0.0
          %2316 = vmatpush1.msra.mxu0 0.0
          %2317 = vmatprep.mubr.f32.mxu0 0.0
          %2318 = vmatmul.mubr.f32.gmra.mrb[0].mxu0 %v2109
          %v2319 = vpop.f32.mrb[0].mxu0
          %v2320 = vadd.f32 0.0, %v2319
          %v2321 = vpop.f32.mrb[0].mxu0
          %2322 = vdwg.mxu0
          %v2324 = vrot.slane %v2320, 1
          %v2327 = vadd.f32 %v2251, %v2320
          %v2328 = vadd.f32 %v2252, %v2324
          %v2329 = vxor.u32 %v2327, 2147483648
          %v2330 = vxor.u32 %v2328, 2147483648
          %v2331 = vmul.f32 %v2329, 1.442695
          %v2332 = vpow.pop %v2331
          %v2333 = vmul.f32 %v2330, 1.442695
          %v2334 = vpow.pop %v2333
          %v2335 = vadd.f32 %v2332, 1.0
          %v2336 = vadd.f32 %v2334, 1.0
          %v2337 = vrcp.pop %v2335
          %v2338 = vmul.f32 1.0, %v2337
          %v2339 = vrcp.pop %v2336
          %v2340 = vmul.f32 1.0, %v2339
          %v2341 = vtanh.pop %v2327
          %v2342 = vtanh.pop %v2328
          %v2344 = vrot.slane %v2032, 1
          %2345 = vrot.lane.b32.xlu0 %v2032, 32
          %v2346 = vpop.permute.xlu0 %2345
          %2347 = vrot.lane.b32.xlu0 %v2344, 32
          %v2348 = vpop.permute.xlu0 %2347
          %v2351 = vmul.f32 %v2338, %v2346
          %v2352 = vmul.f32 %v2340, %v2348
          %2355 = vrot.lane.b32.xlu0 %v2341, 64
          %v2356 = vpop.permute.xlu0 %2355
          %2357 = vrot.lane.b32.xlu0 %v2342, 64
          %v2358 = vpop.permute.xlu0 %2357
          %v2361 = vmul.f32 %v2338, %v2356
          %v2362 = vmul.f32 %v2340, %v2358
          %2365 = vrot.lane.b32.xlu0 %v2361, 32
          %v2366 = vpop.permute.xlu0 %2365
          %2367 = vrot.lane.b32.xlu0 %v2362, 32
          %v2368 = vpop.permute.xlu0 %2367
          %v2371 = vadd.f32 %v2351, %v2366
          %v2372 = vadd.f32 %v2352, %v2368
          %v2373 = vtanh.pop %v2371
          %v2374 = vtanh.pop %v2372
          %2377 = vrot.lane.b32.xlu0 %v2373, 64
          %v2378 = vpop.permute.xlu0 %2377
          %2379 = vrot.lane.b32.xlu0 %v2374, 64
          %v2380 = vpop.permute.xlu0 %2379
          %v2383 = vmul.f32 %v2338, %v2378
          %v2384 = vmul.f32 %v2340, %v2380
          %v2385 = vsel %vm2250, 1, 0
          %2386 = vset.pattern.permute.xlu0 0
          %2387 = vperm.xlu0 %2386, %v2385
          %v2388 = vpop.permute.xlu0 %2387
          %vm2389 = vcmp.eq.s32.totalorder %v2388, 1
          %v2392 = vrot.slane %v2384, 7
          %v2393 = vsel %vm515, %v2392, %v2383
          %2394 = vrot.lane.b32.xlu0 %v2393, 32
          %v2395 = vpop.permute.xlu0 %2394
          %v2397 = vsel %vm2389, %v2395, %v2024
          %v2400 = vrot.slane %v2372, 7
          %v2401 = vsel %vm515, %v2400, %v2371
          %2402 = vrot.lane.b32.xlu0 %v2401, 96
          %v2403 = vpop.permute.xlu0 %2402
          %v2405 = vsel %vm2389, %v2403, %v2032
          %2407 = vrot.lane.b32.xlu0 %v2206, 32
          %v2408 = vpop.permute.xlu0 %2407
          %v2409 = vsel %vm371, %v2408, 0
          %2411 = vmatprep.subr.mxu0 0.0
          %2412 = vmatpush1.msra.mxu0 %v352
          %2413 = vmatprep.subr.mxu0 0.0
          %2414 = vmatpush1.msra.mxu0 %v353
          %2415 = vmatprep.subr.mxu0 0.0
          %2416 = vmatpush1.msra.mxu0 %v354
          %2417 = vmatprep.subr.mxu0 0.0
          %2418 = vmatpush1.msra.mxu0 %v355
          %2419 = vmatprep.subr.mxu0 0.0
          %2420 = vmatpush1.msra.mxu0 0.0
          %2421 = vmatprep.subr.mxu0 0.0
          %2422 = vmatpush1.msra.mxu0 0.0
          %2423 = vmatprep.subr.mxu0 0.0
          %2424 = vmatpush1.msra.mxu0 0.0
          %2425 = vmatprep.subr.mxu0 0.0
          %2426 = vmatpush1.msra.mxu0 0.0
          %2427 = vmatprep.subr.mxu0 0.0
          %2428 = vmatpush1.msra.mxu0 0.0
          %2429 = vmatprep.subr.mxu0 0.0
          %2430 = vmatpush1.msra.mxu0 0.0
          %2431 = vmatprep.subr.mxu0 0.0
          %2432 = vmatpush1.msra.mxu0 0.0
          %2433 = vmatprep.subr.mxu0 0.0
          %2434 = vmatpush1.msra.mxu0 0.0
          %2435 = vmatprep.subr.mxu0 0.0
          %2436 = vmatpush1.msra.mxu0 0.0
          %2437 = vmatprep.subr.mxu0 0.0
          %2438 = vmatpush1.msra.mxu0 0.0
          %2439 = vmatprep.subr.mxu0 0.0
          %2440 = vmatpush1.msra.mxu0 0.0
          %2441 = vmatprep.subr.mxu0 0.0
          %2442 = vmatpush1.msra.mxu0 0.0
          %2443 = vmatprep.subr.mxu0 0.0
          %2444 = vmatpush1.msra.mxu0 0.0
          %2445 = vmatprep.subr.mxu0 0.0
          %2446 = vmatpush1.msra.mxu0 0.0
          %2447 = vmatprep.subr.mxu0 0.0
          %2448 = vmatpush1.msra.mxu0 0.0
          %2449 = vmatprep.subr.mxu0 0.0
          %2450 = vmatpush1.msra.mxu0 0.0
          %2451 = vmatprep.subr.mxu0 0.0
          %2452 = vmatpush1.msra.mxu0 0.0
          %2453 = vmatprep.subr.mxu0 0.0
          %2454 = vmatpush1.msra.mxu0 0.0
          %2455 = vmatprep.subr.mxu0 0.0
          %2456 = vmatpush1.msra.mxu0 0.0
          %2457 = vmatprep.subr.mxu0 0.0
          %2458 = vmatpush1.msra.mxu0 0.0
          %2459 = vmatprep.subr.mxu0 0.0
          %2460 = vmatpush1.msra.mxu0 0.0
          %2461 = vmatprep.subr.mxu0 0.0
          %2462 = vmatpush1.msra.mxu0 0.0
          %2463 = vmatprep.subr.mxu0 0.0
          %2464 = vmatpush1.msra.mxu0 0.0
          %2465 = vmatprep.subr.mxu0 0.0
          %2466 = vmatpush1.msra.mxu0 0.0
          %2467 = vmatprep.subr.mxu0 0.0
          %2468 = vmatpush1.msra.mxu0 0.0
          %2469 = vmatprep.subr.mxu0 0.0
          %2470 = vmatpush1.msra.mxu0 0.0
          %2471 = vmatprep.subr.mxu0 0.0
          %2472 = vmatpush1.msra.mxu0 0.0
          %2473 = vmatprep.subr.mxu0 0.0
          %2474 = vmatpush1.msra.mxu0 0.0
          %2475 = vmatprep.mubr.f32.mxu0 0.0
          %2476 = vmatmul.mubr.f32.gmra.mrb[0].mxu0 %v2409
          %v2477 = vpop.f32.mrb[0].mxu0
          %v2478 = vadd.f32 0.0, %v2477
          %v2479 = vpop.f32.mrb[0].mxu0
          %2480 = vdwg.mxu0
          %v2482 = vsel %vm371, %v2397, 0
          %2484 = vmatprep.subr.mxu0 0.0
          %2485 = vmatpush1.msra.mxu0 %v356
          %2486 = vmatprep.subr.mxu0 0.0
          %2487 = vmatpush1.msra.mxu0 %v357
          %2488 = vmatprep.subr.mxu0 0.0
          %2489 = vmatpush1.msra.mxu0 %v358
          %2490 = vmatprep.subr.mxu0 0.0
          %2491 = vmatpush1.msra.mxu0 %v359
          %2492 = vmatprep.subr.mxu0 0.0
          %2493 = vmatpush1.msra.mxu0 0.0
          %2494 = vmatprep.subr.mxu0 0.0
          %2495 = vmatpush1.msra.mxu0 0.0
          %2496 = vmatprep.subr.mxu0 0.0
          %2497 = vmatpush1.msra.mxu0 0.0
          %2498 = vmatprep.subr.mxu0 0.0
          %2499 = vmatpush1.msra.mxu0 0.0
          %2500 = vmatprep.subr.mxu0 0.0
          %2501 = vmatpush1.msra.mxu0 0.0
          %2502 = vmatprep.subr.mxu0 0.0
          %2503 = vmatpush1.msra.mxu0 0.0
          %2504 = vmatprep.subr.mxu0 0.0
          %2505 = vmatpush1.msra.mxu0 0.0
          %2506 = vmatprep.subr.mxu0 0.0
          %2507 = vmatpush1.msra.mxu0 0.0
          %2508 = vmatprep.subr.mxu0 0.0
          %2509 = vmatpush1.msra.mxu0 0.0
          %2510 = vmatprep.subr.mxu0 0.0
          %2511 = vmatpush1.msra.mxu0 0.0
          %2512 = vmatprep.subr.mxu0 0.0
          %2513 = vmatpush1.msra.mxu0 0.0
          %2514 = vmatprep.subr.mxu0 0.0
          %2515 = vmatpush1.msra.mxu0 0.0
          %2516 = vmatprep.subr.mxu0 0.0
          %2517 = vmatpush1.msra.mxu0 0.0
          %2518 = vmatprep.subr.mxu0 0.0
          %2519 = vmatpush1.msra.mxu0 0.0
          %2520 = vmatprep.subr.mxu0 0.0
          %2521 = vmatpush1.msra.mxu0 0.0
          %2522 = vmatprep.subr.mxu0 0.0
          %2523 = vmatpush1.msra.mxu0 0.0
          %2524 = vmatprep.subr.mxu0 0.0
          %2525 = vmatpush1.msra.mxu0 0.0
          %2526 = vmatprep.subr.mxu0 0.0
          %2527 = vmatpush1.msra.mxu0 0.0
          %2528 = vmatprep.subr.mxu0 0.0
          %2529 = vmatpush1.msra.mxu0 0.0
          %2530 = vmatprep.subr.mxu0 0.0
          %2531 = vmatpush1.msra.mxu0 0.0
          %2532 = vmatprep.subr.mxu0 0.0
          %2533 = vmatpush1.msra.mxu0 0.0
          %2534 = vmatprep.subr.mxu0 0.0
          %2535 = vmatpush1.msra.mxu0 0.0
          %2536 = vmatprep.subr.mxu0 0.0
          %2537 = vmatpush1.msra.mxu0 0.0
          %2538 = vmatprep.subr.mxu0 0.0
          %2539 = vmatpush1.msra.mxu0 0.0
          %2540 = vmatprep.subr.mxu0 0.0
          %2541 = vmatpush1.msra.mxu0 0.0
          %2542 = vmatprep.subr.mxu0 0.0
          %2543 = vmatpush1.msra.mxu0 0.0
          %2544 = vmatprep.subr.mxu0 0.0
          %2545 = vmatpush1.msra.mxu0 0.0
          %2546 = vmatprep.subr.mxu0 0.0
          %2547 = vmatpush1.msra.mxu0 0.0
          %2548 = vmatprep.mubr.f32.mxu0 0.0
          %2549 = vmatmul.mubr.f32.gmra.mrb[0].mxu0 %v2482
          %v2550 = vpop.f32.mrb[0].mxu0
          %v2551 = vadd.f32 %v2478, %v2550
          %v2552 = vpop.f32.mrb[0].mxu0
          %2553 = vdwg.mxu0
          %v2554 = vadd.f32 %v2551, %v679
          %v2555 = vxor.u32 %v2554, 2147483648
          %v2556 = vmul.f32 %v2555, 1.442695
          %v2557 = vpow.pop %v2556
          %v2558 = vadd.f32 %v2557, 1.0
          %v2559 = vrcp.pop %v2558
          %v2560 = vmul.f32 1.0, %v2559
          %v2561 = vtanh.pop %v2554
          %v2562 = vmul.f32 %v2560, %v2207
          %2564 = vrot.lane.b32.xlu0 %v2561, 64
          %v2565 = vpop.permute.xlu0 %2564
          %v2567 = vmul.f32 %v2560, %v2565
          %2569 = vrot.lane.b32.xlu0 %v2567, 32
          %v2570 = vpop.permute.xlu0 %2569
          %v2572 = vadd.f32 %v2562, %v2570
          %v2573 = vtanh.pop %v2572
          %2575 = vrot.lane.b32.xlu0 %v2573, 64
          %v2576 = vpop.permute.xlu0 %2575
          %v2578 = vmul.f32 %v2560, %v2576
          %v2579 = vsel %vm2389, %v2578, %v2206
          %v2580 = vsel %vm2389, %v2572, %v2207
          %v2581 = vsel %vm2389, %v2578, 0.0
          %v2584 = vunpack.c.l.s4 1966171168
          %v2585 = vunpack.c.0.s8 %v2584
          %v2586 = vlaneseq
          %v2587 = vshrl.u32 %v2586, 7
          %v2588 = vsub.s32 %v2585, %v2587
          %v2589 = vrot.slane %v2581, %v2588
          %v2590 = vcombine.high %v2589, %v2589
          %v2592 = vunpack.c.l.s4 1966171168
          %v2593 = vunpack.c.0.s8 %v2592
          %v2594 = vlaneseq
          %v2595 = vshrl.u32 %v2594, 7
          %v2596 = vsub.s32 %v2593, %v2595
          %v2597 = vrot.slane %v2589, %v2596
          %v2599 = vunpack.c.l.s4 1966171168
          %v2600 = vunpack.c.0.s8 %v2599
          %v2601 = vlaneseq
          %v2602 = vshrl.u32 %v2601, 7
          %v2603 = vsub.s32 %v2600, %v2602
          %v2604 = vrot.slane %v2590, %v2603
          %v2605 = vlaneseq
          %v2606 = vshrl.u32 %v2605, 7
          %v2607 = vsub.s32 0, %v2606
          %v2608 = vrot.slane %v2597, %v2607
          %v2609 = vlaneseq
          %v2610 = vshrl.u32 %v2609, 7
          %v2611 = vsub.s32 0, %v2610
          %v2612 = vrot.slane %v2604, %v2611
          %2613 = vrot.lane.b32.xlu0 %v2608, 32
          %v2614 = vpop.permute.xlu0 %2613
          %2615 = vrot.lane.b32.xlu0 %v2612, 32
          %v2616 = vpop.permute.xlu0 %2615
          %2619 = vst.msk [vmem:[%s318 + $0x5] sm:$0x1] %vm753, %v2614
          %2620 = vst.msk [vmem:[%s318 + $0xd] sm:$0x1] %vm753, %v2616
          %s2621 = sadd.s32 %s332, 6
          %v2622 = vstv %s2621
          %vm2623 = vcmp.gt.s32.totalorder %v346, %v2622
          %v2624 = vld [vmem:[%s284 + $0x6] sm:$0x1]
          %v2625 = vld [vmem:[%s284 + $0xe] sm:$0x1]
          %2626 = vmatprep.subr.mxu0 0.0
          %2627 = vmatpush1.msra.mxu0 %v347
          %2628 = vmatprep.subr.mxu0 0.0
          %2629 = vmatpush1.msra.mxu0 %v348
          %2630 = vmatprep.subr.mxu0 0.0
          %2631 = vmatpush1.msra.mxu0 %v349
          %2632 = vmatprep.subr.mxu0 0.0
          %2633 = vmatpush1.msra.mxu0 %v350
          %2634 = vmatprep.subr.mxu0 0.0
          %2635 = vmatpush1.msra.mxu0 0.0
          %2636 = vmatprep.subr.mxu0 0.0
          %2637 = vmatpush1.msra.mxu0 0.0
          %2638 = vmatprep.subr.mxu0 0.0
          %2639 = vmatpush1.msra.mxu0 0.0
          %2640 = vmatprep.subr.mxu0 0.0
          %2641 = vmatpush1.msra.mxu0 0.0
          %2642 = vmatprep.subr.mxu0 0.0
          %2643 = vmatpush1.msra.mxu0 0.0
          %2644 = vmatprep.subr.mxu0 0.0
          %2645 = vmatpush1.msra.mxu0 0.0
          %2646 = vmatprep.subr.mxu0 0.0
          %2647 = vmatpush1.msra.mxu0 0.0
          %2648 = vmatprep.subr.mxu0 0.0
          %2649 = vmatpush1.msra.mxu0 0.0
          %2650 = vmatprep.subr.mxu0 0.0
          %2651 = vmatpush1.msra.mxu0 0.0
          %2652 = vmatprep.subr.mxu0 0.0
          %2653 = vmatpush1.msra.mxu0 0.0
          %2654 = vmatprep.subr.mxu0 0.0
          %2655 = vmatpush1.msra.mxu0 0.0
          %2656 = vmatprep.subr.mxu0 0.0
          %2657 = vmatpush1.msra.mxu0 0.0
          %2658 = vmatprep.subr.mxu0 0.0
          %2659 = vmatpush1.msra.mxu0 0.0
          %2660 = vmatprep.subr.mxu0 0.0
          %2661 = vmatpush1.msra.mxu0 0.0
          %2662 = vmatprep.subr.mxu0 0.0
          %2663 = vmatpush1.msra.mxu0 0.0
          %2664 = vmatprep.subr.mxu0 0.0
          %2665 = vmatpush1.msra.mxu0 0.0
          %2666 = vmatprep.subr.mxu0 0.0
          %2667 = vmatpush1.msra.mxu0 0.0
          %2668 = vmatprep.subr.mxu0 0.0
          %2669 = vmatpush1.msra.mxu0 0.0
          %2670 = vmatprep.subr.mxu0 0.0
          %2671 = vmatpush1.msra.mxu0 0.0
          %2672 = vmatprep.subr.mxu0 0.0
          %2673 = vmatpush1.msra.mxu0 0.0
          %2674 = vmatprep.subr.mxu0 0.0
          %2675 = vmatpush1.msra.mxu0 0.0
          %2676 = vmatprep.subr.mxu0 0.0
          %2677 = vmatpush1.msra.mxu0 0.0
          %2678 = vmatprep.subr.mxu0 0.0
          %2679 = vmatpush1.msra.mxu0 0.0
          %2680 = vmatprep.subr.mxu0 0.0
          %2681 = vmatpush1.msra.mxu0 0.0
          %2682 = vmatprep.subr.mxu0 0.0
          %2683 = vmatpush1.msra.mxu0 0.0
          %2684 = vmatprep.subr.mxu0 0.0
          %2685 = vmatpush1.msra.mxu0 0.0
          %2686 = vmatprep.subr.mxu0 0.0
          %2687 = vmatpush1.msra.mxu0 0.0
          %2688 = vmatprep.subr.mxu0 0.0
          %2689 = vmatpush1.msra.mxu0 0.0
          %2690 = vmatprep.mubr.f32.mxu0 0.0
          %2691 = vmatmul.mubr.f32.gmra.mrb[0].mxu0 %v2482
          %v2692 = vpop.f32.mrb[0].mxu0
          %v2693 = vadd.f32 0.0, %v2692
          %v2694 = vpop.f32.mrb[0].mxu0
          %2695 = vdwg.mxu0
          %v2697 = vrot.slane %v2693, 1
          %v2700 = vadd.f32 %v2624, %v2693
          %v2701 = vadd.f32 %v2625, %v2697
          %v2702 = vxor.u32 %v2700, 2147483648
          %v2703 = vxor.u32 %v2701, 2147483648
          %v2704 = vmul.f32 %v2702, 1.442695
          %v2705 = vpow.pop %v2704
          %v2706 = vmul.f32 %v2703, 1.442695
          %v2707 = vpow.pop %v2706
          %v2708 = vadd.f32 %v2705, 1.0
          %v2709 = vadd.f32 %v2707, 1.0
          %v2710 = vrcp.pop %v2708
          %v2711 = vmul.f32 1.0, %v2710
          %v2712 = vrcp.pop %v2709
          %v2713 = vmul.f32 1.0, %v2712
          %v2714 = vtanh.pop %v2700
          %v2715 = vtanh.pop %v2701
          %v2717 = vrot.slane %v2405, 1
          %2718 = vrot.lane.b32.xlu0 %v2405, 32
          %v2719 = vpop.permute.xlu0 %2718
          %2720 = vrot.lane.b32.xlu0 %v2717, 32
          %v2721 = vpop.permute.xlu0 %2720
          %v2724 = vmul.f32 %v2711, %v2719
          %v2725 = vmul.f32 %v2713, %v2721
          %2728 = vrot.lane.b32.xlu0 %v2714, 64
          %v2729 = vpop.permute.xlu0 %2728
          %2730 = vrot.lane.b32.xlu0 %v2715, 64
          %v2731 = vpop.permute.xlu0 %2730
          %v2734 = vmul.f32 %v2711, %v2729
          %v2735 = vmul.f32 %v2713, %v2731
          %2738 = vrot.lane.b32.xlu0 %v2734, 32
          %v2739 = vpop.permute.xlu0 %2738
          %2740 = vrot.lane.b32.xlu0 %v2735, 32
          %v2741 = vpop.permute.xlu0 %2740
          %v2744 = vadd.f32 %v2724, %v2739
          %v2745 = vadd.f32 %v2725, %v2741
          %v2746 = vtanh.pop %v2744
          %v2747 = vtanh.pop %v2745
          %2750 = vrot.lane.b32.xlu0 %v2746, 64
          %v2751 = vpop.permute.xlu0 %2750
          %2752 = vrot.lane.b32.xlu0 %v2747, 64
          %v2753 = vpop.permute.xlu0 %2752
          %v2756 = vmul.f32 %v2711, %v2751
          %v2757 = vmul.f32 %v2713, %v2753
          %v2758 = vsel %vm2623, 1, 0
          %2759 = vset.pattern.permute.xlu0 0
          %2760 = vperm.xlu0 %2759, %v2758
          %v2761 = vpop.permute.xlu0 %2760
          %vm2762 = vcmp.eq.s32.totalorder %v2761, 1
          %v2765 = vrot.slane %v2757, 7
          %v2766 = vsel %vm515, %v2765, %v2756
          %2767 = vrot.lane.b32.xlu0 %v2766, 32
          %v2768 = vpop.permute.xlu0 %2767
          %v2770 = vsel %vm2762, %v2768, %v2397
          %v2773 = vrot.slane %v2745, 7
          %v2774 = vsel %vm515, %v2773, %v2744
          %2775 = vrot.lane.b32.xlu0 %v2774, 96
          %v2776 = vpop.permute.xlu0 %2775
          %v2778 = vsel %vm2762, %v2776, %v2405
          %2780 = vrot.lane.b32.xlu0 %v2579, 32
          %v2781 = vpop.permute.xlu0 %2780
          %v2782 = vsel %vm371, %v2781, 0
          %2784 = vmatprep.subr.mxu0 0.0
          %2785 = vmatpush1.msra.mxu0 %v352
          %2786 = vmatprep.subr.mxu0 0.0
          %2787 = vmatpush1.msra.mxu0 %v353
          %2788 = vmatprep.subr.mxu0 0.0
          %2789 = vmatpush1.msra.mxu0 %v354
          %2790 = vmatprep.subr.mxu0 0.0
          %2791 = vmatpush1.msra.mxu0 %v355
          %2792 = vmatprep.subr.mxu0 0.0
          %2793 = vmatpush1.msra.mxu0 0.0
          %2794 = vmatprep.subr.mxu0 0.0
          %2795 = vmatpush1.msra.mxu0 0.0
          %2796 = vmatprep.subr.mxu0 0.0
          %2797 = vmatpush1.msra.mxu0 0.0
          %2798 = vmatprep.subr.mxu0 0.0
          %2799 = vmatpush1.msra.mxu0 0.0
          %2800 = vmatprep.subr.mxu0 0.0
          %2801 = vmatpush1.msra.mxu0 0.0
          %2802 = vmatprep.subr.mxu0 0.0
          %2803 = vmatpush1.msra.mxu0 0.0
          %2804 = vmatprep.subr.mxu0 0.0
          %2805 = vmatpush1.msra.mxu0 0.0
          %2806 = vmatprep.subr.mxu0 0.0
          %2807 = vmatpush1.msra.mxu0 0.0
          %2808 = vmatprep.subr.mxu0 0.0
          %2809 = vmatpush1.msra.mxu0 0.0
          %2810 = vmatprep.subr.mxu0 0.0
          %2811 = vmatpush1.msra.mxu0 0.0
          %2812 = vmatprep.subr.mxu0 0.0
          %2813 = vmatpush1.msra.mxu0 0.0
          %2814 = vmatprep.subr.mxu0 0.0
          %2815 = vmatpush1.msra.mxu0 0.0
          %2816 = vmatprep.subr.mxu0 0.0
          %2817 = vmatpush1.msra.mxu0 0.0
          %2818 = vmatprep.subr.mxu0 0.0
          %2819 = vmatpush1.msra.mxu0 0.0
          %2820 = vmatprep.subr.mxu0 0.0
          %2821 = vmatpush1.msra.mxu0 0.0
          %2822 = vmatprep.subr.mxu0 0.0
          %2823 = vmatpush1.msra.mxu0 0.0
          %2824 = vmatprep.subr.mxu0 0.0
          %2825 = vmatpush1.msra.mxu0 0.0
          %2826 = vmatprep.subr.mxu0 0.0
          %2827 = vmatpush1.msra.mxu0 0.0
          %2828 = vmatprep.subr.mxu0 0.0
          %2829 = vmatpush1.msra.mxu0 0.0
          %2830 = vmatprep.subr.mxu0 0.0
          %2831 = vmatpush1.msra.mxu0 0.0
          %2832 = vmatprep.subr.mxu0 0.0
          %2833 = vmatpush1.msra.mxu0 0.0
          %2834 = vmatprep.subr.mxu0 0.0
          %2835 = vmatpush1.msra.mxu0 0.0
          %2836 = vmatprep.subr.mxu0 0.0
          %2837 = vmatpush1.msra.mxu0 0.0
          %2838 = vmatprep.subr.mxu0 0.0
          %2839 = vmatpush1.msra.mxu0 0.0
          %2840 = vmatprep.subr.mxu0 0.0
          %2841 = vmatpush1.msra.mxu0 0.0
          %2842 = vmatprep.subr.mxu0 0.0
          %2843 = vmatpush1.msra.mxu0 0.0
          %2844 = vmatprep.subr.mxu0 0.0
          %2845 = vmatpush1.msra.mxu0 0.0
          %2846 = vmatprep.subr.mxu0 0.0
          %2847 = vmatpush1.msra.mxu0 0.0
          %2848 = vmatprep.mubr.f32.mxu0 0.0
          %2849 = vmatmul.mubr.f32.gmra.mrb[0].mxu0 %v2782
          %v2850 = vpop.f32.mrb[0].mxu0
          %v2851 = vadd.f32 0.0, %v2850
          %v2852 = vpop.f32.mrb[0].mxu0
          %2853 = vdwg.mxu0
          %v2855 = vsel %vm371, %v2770, 0
          %2857 = vmatprep.subr.mxu0 0.0
          %2858 = vmatpush1.msra.mxu0 %v356
          %2859 = vmatprep.subr.mxu0 0.0
          %2860 = vmatpush1.msra.mxu0 %v357
          %2861 = vmatprep.subr.mxu0 0.0
          %2862 = vmatpush1.msra.mxu0 %v358
          %2863 = vmatprep.subr.mxu0 0.0
          %2864 = vmatpush1.msra.mxu0 %v359
          %2865 = vmatprep.subr.mxu0 0.0
          %2866 = vmatpush1.msra.mxu0 0.0
          %2867 = vmatprep.subr.mxu0 0.0
          %2868 = vmatpush1.msra.mxu0 0.0
          %2869 = vmatprep.subr.mxu0 0.0
          %2870 = vmatpush1.msra.mxu0 0.0
          %2871 = vmatprep.subr.mxu0 0.0
          %2872 = vmatpush1.msra.mxu0 0.0
          %2873 = vmatprep.subr.mxu0 0.0
          %2874 = vmatpush1.msra.mxu0 0.0
          %2875 = vmatprep.subr.mxu0 0.0
          %2876 = vmatpush1.msra.mxu0 0.0
          %2877 = vmatprep.subr.mxu0 0.0
          %2878 = vmatpush1.msra.mxu0 0.0
          %2879 = vmatprep.subr.mxu0 0.0
          %2880 = vmatpush1.msra.mxu0 0.0
          %2881 = vmatprep.subr.mxu0 0.0
          %2882 = vmatpush1.msra.mxu0 0.0
          %2883 = vmatprep.subr.mxu0 0.0
          %2884 = vmatpush1.msra.mxu0 0.0
          %2885 = vmatprep.subr.mxu0 0.0
          %2886 = vmatpush1.msra.mxu0 0.0
          %2887 = vmatprep.subr.mxu0 0.0
          %2888 = vmatpush1.msra.mxu0 0.0
          %2889 = vmatprep.subr.mxu0 0.0
          %2890 = vmatpush1.msra.mxu0 0.0
          %2891 = vmatprep.subr.mxu0 0.0
          %2892 = vmatpush1.msra.mxu0 0.0
          %2893 = vmatprep.subr.mxu0 0.0
          %2894 = vmatpush1.msra.mxu0 0.0
          %2895 = vmatprep.subr.mxu0 0.0
          %2896 = vmatpush1.msra.mxu0 0.0
          %2897 = vmatprep.subr.mxu0 0.0
          %2898 = vmatpush1.msra.mxu0 0.0
          %2899 = vmatprep.subr.mxu0 0.0
          %2900 = vmatpush1.msra.mxu0 0.0
          %2901 = vmatprep.subr.mxu0 0.0
          %2902 = vmatpush1.msra.mxu0 0.0
          %2903 = vmatprep.subr.mxu0 0.0
          %2904 = vmatpush1.msra.mxu0 0.0
          %2905 = vmatprep.subr.mxu0 0.0
          %2906 = vmatpush1.msra.mxu0 0.0
          %2907 = vmatprep.subr.mxu0 0.0
          %2908 = vmatpush1.msra.mxu0 0.0
          %2909 = vmatprep.subr.mxu0 0.0
          %2910 = vmatpush1.msra.mxu0 0.0
          %2911 = vmatprep.subr.mxu0 0.0
          %2912 = vmatpush1.msra.mxu0 0.0
          %2913 = vmatprep.subr.mxu0 0.0
          %2914 = vmatpush1.msra.mxu0 0.0
          %2915 = vmatprep.subr.mxu0 0.0
          %2916 = vmatpush1.msra.mxu0 0.0
          %2917 = vmatprep.subr.mxu0 0.0
          %2918 = vmatpush1.msra.mxu0 0.0
          %2919 = vmatprep.subr.mxu0 0.0
          %2920 = vmatpush1.msra.mxu0 0.0
          %2921 = vmatprep.mubr.f32.mxu0 0.0
          %2922 = vmatmul.mubr.f32.gmra.mrb[0].mxu0 %v2855
          %v2923 = vpop.f32.mrb[0].mxu0
          %v2924 = vadd.f32 %v2851, %v2923
          %v2925 = vpop.f32.mrb[0].mxu0
          %2926 = vdwg.mxu0
          %v2927 = vadd.f32 %v2924, %v679
          %v2928 = vxor.u32 %v2927, 2147483648
          %v2929 = vmul.f32 %v2928, 1.442695
          %v2930 = vpow.pop %v2929
          %v2931 = vadd.f32 %v2930, 1.0
          %v2932 = vrcp.pop %v2931
          %v2933 = vmul.f32 1.0, %v2932
          %v2934 = vtanh.pop %v2927
          %v2935 = vmul.f32 %v2933, %v2580
          %2937 = vrot.lane.b32.xlu0 %v2934, 64
          %v2938 = vpop.permute.xlu0 %2937
          %v2940 = vmul.f32 %v2933, %v2938
          %2942 = vrot.lane.b32.xlu0 %v2940, 32
          %v2943 = vpop.permute.xlu0 %2942
          %v2945 = vadd.f32 %v2935, %v2943
          %v2946 = vtanh.pop %v2945
          %2948 = vrot.lane.b32.xlu0 %v2946, 64
          %v2949 = vpop.permute.xlu0 %2948
          %v2951 = vmul.f32 %v2933, %v2949
          %v2952 = vsel %vm2762, %v2951, %v2579
          %v2953 = vsel %vm2762, %v2945, %v2580
          %v2954 = vsel %vm2762, %v2951, 0.0
          %v2957 = vunpack.c.l.s4 1966171168
          %v2958 = vunpack.c.0.s8 %v2957
          %v2959 = vlaneseq
          %v2960 = vshrl.u32 %v2959, 7
          %v2961 = vsub.s32 %v2958, %v2960
          %v2962 = vrot.slane %v2954, %v2961
          %v2963 = vcombine.high %v2962, %v2962
          %v2965 = vunpack.c.l.s4 1966171168
          %v2966 = vunpack.c.0.s8 %v2965
          %v2967 = vlaneseq
          %v2968 = vshrl.u32 %v2967, 7
          %v2969 = vsub.s32 %v2966, %v2968
          %v2970 = vrot.slane %v2962, %v2969
          %v2972 = vunpack.c.l.s4 1966171168
          %v2973 = vunpack.c.0.s8 %v2972
          %v2974 = vlaneseq
          %v2975 = vshrl.u32 %v2974, 7
          %v2976 = vsub.s32 %v2973, %v2975
          %v2977 = vrot.slane %v2963, %v2976
          %v2978 = vlaneseq
          %v2979 = vshrl.u32 %v2978, 7
          %v2980 = vsub.s32 0, %v2979
          %v2981 = vrot.slane %v2970, %v2980
          %v2982 = vlaneseq
          %v2983 = vshrl.u32 %v2982, 7
          %v2984 = vsub.s32 0, %v2983
          %v2985 = vrot.slane %v2977, %v2984
          %2986 = vrot.lane.b32.xlu0 %v2981, 32
          %v2987 = vpop.permute.xlu0 %2986
          %2988 = vrot.lane.b32.xlu0 %v2985, 32
          %v2989 = vpop.permute.xlu0 %2988
          %2992 = vst.msk [vmem:[%s318 + $0x6] sm:$0x1] %vm753, %v2987
          %2993 = vst.msk [vmem:[%s318 + $0xe] sm:$0x1] %vm753, %v2989
          %s2994 = sadd.s32 %s332, 7
          %v2995 = vstv %s2994
          %vm2996 = vcmp.gt.s32.totalorder %v346, %v2995
          %v2997 = vld [vmem:[%s284 + $0x7] sm:$0x1]
          %v2998 = vld [vmem:[%s284 + $0xf] sm:$0x1]
          %2999 = vmatprep.subr.mxu0 0.0
          %3000 = vmatpush1.msra.mxu0 %v347
          %3001 = vmatprep.subr.mxu0 0.0
          %3002 = vmatpush1.msra.mxu0 %v348
          %3003 = vmatprep.subr.mxu0 0.0
          %3004 = vmatpush1.msra.mxu0 %v349
          %3005 = vmatprep.subr.mxu0 0.0
          %3006 = vmatpush1.msra.mxu0 %v350
          %3007 = vmatprep.subr.mxu0 0.0
          %3008 = vmatpush1.msra.mxu0 0.0
          %3009 = vmatprep.subr.mxu0 0.0
          %3010 = vmatpush1.msra.mxu0 0.0
          %3011 = vmatprep.subr.mxu0 0.0
          %3012 = vmatpush1.msra.mxu0 0.0
          %3013 = vmatprep.subr.mxu0 0.0
          %3014 = vmatpush1.msra.mxu0 0.0
          %3015 = vmatprep.subr.mxu0 0.0
          %3016 = vmatpush1.msra.mxu0 0.0
          %3017 = vmatprep.subr.mxu0 0.0
          %3018 = vmatpush1.msra.mxu0 0.0
          %3019 = vmatprep.subr.mxu0 0.0
          %3020 = vmatpush1.msra.mxu0 0.0
          %3021 = vmatprep.subr.mxu0 0.0
          %3022 = vmatpush1.msra.mxu0 0.0
          %3023 = vmatprep.subr.mxu0 0.0
          %3024 = vmatpush1.msra.mxu0 0.0
          %3025 = vmatprep.subr.mxu0 0.0
          %3026 = vmatpush1.msra.mxu0 0.0
          %3027 = vmatprep.subr.mxu0 0.0
          %3028 = vmatpush1.msra.mxu0 0.0
          %3029 = vmatprep.subr.mxu0 0.0
          %3030 = vmatpush1.msra.mxu0 0.0
          %3031 = vmatprep.subr.mxu0 0.0
          %3032 = vmatpush1.msra.mxu0 0.0
          %3033 = vmatprep.subr.mxu0 0.0
          %3034 = vmatpush1.msra.mxu0 0.0
          %3035 = vmatprep.subr.mxu0 0.0
          %3036 = vmatpush1.msra.mxu0 0.0
          %3037 = vmatprep.subr.mxu0 0.0
          %3038 = vmatpush1.msra.mxu0 0.0
          %3039 = vmatprep.subr.mxu0 0.0
          %3040 = vmatpush1.msra.mxu0 0.0
          %3041 = vmatprep.subr.mxu0 0.0
          %3042 = vmatpush1.msra.mxu0 0.0
          %3043 = vmatprep.subr.mxu0 0.0
          %3044 = vmatpush1.msra.mxu0 0.0
          %3045 = vmatprep.subr.mxu0 0.0
          %3046 = vmatpush1.msra.mxu0 0.0
          %3047 = vmatprep.subr.mxu0 0.0
          %3048 = vmatpush1.msra.mxu0 0.0
          %3049 = vmatprep.subr.mxu0 0.0
          %3050 = vmatpush1.msra.mxu0 0.0
          %3051 = vmatprep.subr.mxu0 0.0
          %3052 = vmatpush1.msra.mxu0 0.0
          %3053 = vmatprep.subr.mxu0 0.0
          %3054 = vmatpush1.msra.mxu0 0.0
          %3055 = vmatprep.subr.mxu0 0.0
          %3056 = vmatpush1.msra.mxu0 0.0
          %3057 = vmatprep.subr.mxu0 0.0
          %3058 = vmatpush1.msra.mxu0 0.0
          %3059 = vmatprep.subr.mxu0 0.0
          %3060 = vmatpush1.msra.mxu0 0.0
          %3061 = vmatprep.subr.mxu0 0.0
          %3062 = vmatpush1.msra.mxu0 0.0
          %3063 = vmatprep.mubr.f32.mxu0 0.0
          %3064 = vmatmul.mubr.f32.gmra.mrb[0].mxu0 %v2855
          %v3065 = vpop.f32.mrb[0].mxu0
          %v3066 = vadd.f32 0.0, %v3065
          %v3067 = vpop.f32.mrb[0].mxu0
          %3068 = vdwg.mxu0
          %v3070 = vrot.slane %v3066, 1
          %v3073 = vadd.f32 %v2997, %v3066
          %v3074 = vadd.f32 %v2998, %v3070
          %v3075 = vxor.u32 %v3073, 2147483648
          %v3076 = vxor.u32 %v3074, 2147483648
          %v3077 = vmul.f32 %v3075, 1.442695
          %v3078 = vpow.pop %v3077
          %v3079 = vmul.f32 %v3076, 1.442695
          %v3080 = vpow.pop %v3079
          %v3081 = vadd.f32 %v3078, 1.0
          %v3082 = vadd.f32 %v3080, 1.0
          %v3083 = vrcp.pop %v3081
          %v3084 = vmul.f32 1.0, %v3083
          %v3085 = vrcp.pop %v3082
          %v3086 = vmul.f32 1.0, %v3085
          %v3087 = vtanh.pop %v3073
          %v3088 = vtanh.pop %v3074
          %v3090 = vrot.slane %v2778, 1
          %3091 = vrot.lane.b32.xlu0 %v2778, 32
          %v3092 = vpop.permute.xlu0 %3091
          %3093 = vrot.lane.b32.xlu0 %v3090, 32
          %v3094 = vpop.permute.xlu0 %3093
          %v3097 = vmul.f32 %v3084, %v3092
          %v3098 = vmul.f32 %v3086, %v3094
          %3101 = vrot.lane.b32.xlu0 %v3087, 64
          %v3102 = vpop.permute.xlu0 %3101
          %3103 = vrot.lane.b32.xlu0 %v3088, 64
          %v3104 = vpop.permute.xlu0 %3103
          %v3107 = vmul.f32 %v3084, %v3102
          %v3108 = vmul.f32 %v3086, %v3104
          %3111 = vrot.lane.b32.xlu0 %v3107, 32
          %v3112 = vpop.permute.xlu0 %3111
          %3113 = vrot.lane.b32.xlu0 %v3108, 32
          %v3114 = vpop.permute.xlu0 %3113
          %v3117 = vadd.f32 %v3097, %v3112
          %v3118 = vadd.f32 %v3098, %v3114
          %v3119 = vtanh.pop %v3117
          %v3120 = vtanh.pop %v3118
          %3123 = vrot.lane.b32.xlu0 %v3119, 64
          %v3124 = vpop.permute.xlu0 %3123
          %3125 = vrot.lane.b32.xlu0 %v3120, 64
          %v3126 = vpop.permute.xlu0 %3125
          %v3129 = vmul.f32 %v3084, %v3124
          %v3130 = vmul.f32 %v3086, %v3126
          %v3131 = vsel %vm2996, 1, 0
          %3132 = vset.pattern.permute.xlu0 0
          %3133 = vperm.xlu0 %3132, %v3131
          %v3134 = vpop.permute.xlu0 %3133
          %vm3135 = vcmp.eq.s32.totalorder %v3134, 1
          %v3138 = vrot.slane %v3130, 7
          %v3139 = vsel %vm515, %v3138, %v3129
          %3140 = vrot.lane.b32.xlu0 %v3139, 32
          %v3141 = vpop.permute.xlu0 %3140
          %v3143 = vsel %vm3135, %v3141, %v2770
          %v3146 = vrot.slane %v3118, 7
          %v3147 = vsel %vm515, %v3146, %v3117
          %3148 = vrot.lane.b32.xlu0 %v3147, 96
          %v3149 = vpop.permute.xlu0 %3148
          %v3151 = vsel %vm3135, %v3149, %v2778
          %3153 = vrot.lane.b32.xlu0 %v2952, 32
          %v3154 = vpop.permute.xlu0 %3153
          %v3155 = vsel %vm371, %v3154, 0
          %3157 = vmatprep.subr.mxu0 0.0
          %3158 = vmatpush1.msra.mxu0 %v352
          %3159 = vmatprep.subr.mxu0 0.0
          %3160 = vmatpush1.msra.mxu0 %v353
          %3161 = vmatprep.subr.mxu0 0.0
          %3162 = vmatpush1.msra.mxu0 %v354
          %3163 = vmatprep.subr.mxu0 0.0
          %3164 = vmatpush1.msra.mxu0 %v355
          %3165 = vmatprep.subr.mxu0 0.0
          %3166 = vmatpush1.msra.mxu0 0.0
          %3167 = vmatprep.subr.mxu0 0.0
          %3168 = vmatpush1.msra.mxu0 0.0
          %3169 = vmatprep.subr.mxu0 0.0
          %3170 = vmatpush1.msra.mxu0 0.0
          %3171 = vmatprep.subr.mxu0 0.0
          %3172 = vmatpush1.msra.mxu0 0.0
          %3173 = vmatprep.subr.mxu0 0.0
          %3174 = vmatpush1.msra.mxu0 0.0
          %3175 = vmatprep.subr.mxu0 0.0
          %3176 = vmatpush1.msra.mxu0 0.0
          %3177 = vmatprep.subr.mxu0 0.0
          %3178 = vmatpush1.msra.mxu0 0.0
          %3179 = vmatprep.subr.mxu0 0.0
          %3180 = vmatpush1.msra.mxu0 0.0
          %3181 = vmatprep.subr.mxu0 0.0
          %3182 = vmatpush1.msra.mxu0 0.0
          %3183 = vmatprep.subr.mxu0 0.0
          %3184 = vmatpush1.msra.mxu0 0.0
          %3185 = vmatprep.subr.mxu0 0.0
          %3186 = vmatpush1.msra.mxu0 0.0
          %3187 = vmatprep.subr.mxu0 0.0
          %3188 = vmatpush1.msra.mxu0 0.0
          %3189 = vmatprep.subr.mxu0 0.0
          %3190 = vmatpush1.msra.mxu0 0.0
          %3191 = vmatprep.subr.mxu0 0.0
          %3192 = vmatpush1.msra.mxu0 0.0
          %3193 = vmatprep.subr.mxu0 0.0
          %3194 = vmatpush1.msra.mxu0 0.0
          %3195 = vmatprep.subr.mxu0 0.0
          %3196 = vmatpush1.msra.mxu0 0.0
          %3197 = vmatprep.subr.mxu0 0.0
          %3198 = vmatpush1.msra.mxu0 0.0
          %3199 = vmatprep.subr.mxu0 0.0
          %3200 = vmatpush1.msra.mxu0 0.0
          %3201 = vmatprep.subr.mxu0 0.0
          %3202 = vmatpush1.msra.mxu0 0.0
          %3203 = vmatprep.subr.mxu0 0.0
          %3204 = vmatpush1.msra.mxu0 0.0
          %3205 = vmatprep.subr.mxu0 0.0
          %3206 = vmatpush1.msra.mxu0 0.0
          %3207 = vmatprep.subr.mxu0 0.0
          %3208 = vmatpush1.msra.mxu0 0.0
          %3209 = vmatprep.subr.mxu0 0.0
          %3210 = vmatpush1.msra.mxu0 0.0
          %3211 = vmatprep.subr.mxu0 0.0
          %3212 = vmatpush1.msra.mxu0 0.0
          %3213 = vmatprep.subr.mxu0 0.0
          %3214 = vmatpush1.msra.mxu0 0.0
          %3215 = vmatprep.subr.mxu0 0.0
          %3216 = vmatpush1.msra.mxu0 0.0
          %3217 = vmatprep.subr.mxu0 0.0
          %3218 = vmatpush1.msra.mxu0 0.0
          %3219 = vmatprep.subr.mxu0 0.0
          %3220 = vmatpush1.msra.mxu0 0.0
          %3221 = vmatprep.mubr.f32.mxu0 0.0
          %3222 = vmatmul.mubr.f32.gmra.mrb[0].mxu0 %v3155
          %v3223 = vpop.f32.mrb[0].mxu0
          %v3224 = vadd.f32 0.0, %v3223
          %v3225 = vpop.f32.mrb[0].mxu0
          %3226 = vdwg.mxu0
          %v3228 = vsel %vm371, %v3143, 0
          %3230 = vmatprep.subr.mxu0 0.0
          %3231 = vmatpush1.msra.mxu0 %v356
          %3232 = vmatprep.subr.mxu0 0.0
          %3233 = vmatpush1.msra.mxu0 %v357
          %3234 = vmatprep.subr.mxu0 0.0
          %3235 = vmatpush1.msra.mxu0 %v358
          %3236 = vmatprep.subr.mxu0 0.0
          %3237 = vmatpush1.msra.mxu0 %v359
          %3238 = vmatprep.subr.mxu0 0.0
          %3239 = vmatpush1.msra.mxu0 0.0
          %3240 = vmatprep.subr.mxu0 0.0
          %3241 = vmatpush1.msra.mxu0 0.0
          %3242 = vmatprep.subr.mxu0 0.0
          %3243 = vmatpush1.msra.mxu0 0.0
          %3244 = vmatprep.subr.mxu0 0.0
          %3245 = vmatpush1.msra.mxu0 0.0
          %3246 = vmatprep.subr.mxu0 0.0
          %3247 = vmatpush1.msra.mxu0 0.0
          %3248 = vmatprep.subr.mxu0 0.0
          %3249 = vmatpush1.msra.mxu0 0.0
          %3250 = vmatprep.subr.mxu0 0.0
          %3251 = vmatpush1.msra.mxu0 0.0
          %3252 = vmatprep.subr.mxu0 0.0
          %3253 = vmatpush1.msra.mxu0 0.0
          %3254 = vmatprep.subr.mxu0 0.0
          %3255 = vmatpush1.msra.mxu0 0.0
          %3256 = vmatprep.subr.mxu0 0.0
          %3257 = vmatpush1.msra.mxu0 0.0
          %3258 = vmatprep.subr.mxu0 0.0
          %3259 = vmatpush1.msra.mxu0 0.0
          %3260 = vmatprep.subr.mxu0 0.0
          %3261 = vmatpush1.msra.mxu0 0.0
          %3262 = vmatprep.subr.mxu0 0.0
          %3263 = vmatpush1.msra.mxu0 0.0
          %3264 = vmatprep.subr.mxu0 0.0
          %3265 = vmatpush1.msra.mxu0 0.0
          %3266 = vmatprep.subr.mxu0 0.0
          %3267 = vmatpush1.msra.mxu0 0.0
          %3268 = vmatprep.subr.mxu0 0.0
          %3269 = vmatpush1.msra.mxu0 0.0
          %3270 = vmatprep.subr.mxu0 0.0
          %3271 = vmatpush1.msra.mxu0 0.0
          %3272 = vmatprep.subr.mxu0 0.0
          %3273 = vmatpush1.msra.mxu0 0.0
          %3274 = vmatprep.subr.mxu0 0.0
          %3275 = vmatpush1.msra.mxu0 0.0
          %3276 = vmatprep.subr.mxu0 0.0
          %3277 = vmatpush1.msra.mxu0 0.0
          %3278 = vmatprep.subr.mxu0 0.0
          %3279 = vmatpush1.msra.mxu0 0.0
          %3280 = vmatprep.subr.mxu0 0.0
          %3281 = vmatpush1.msra.mxu0 0.0
          %3282 = vmatprep.subr.mxu0 0.0
          %3283 = vmatpush1.msra.mxu0 0.0
          %3284 = vmatprep.subr.mxu0 0.0
          %3285 = vmatpush1.msra.mxu0 0.0
          %3286 = vmatprep.subr.mxu0 0.0
          %3287 = vmatpush1.msra.mxu0 0.0
          %3288 = vmatprep.subr.mxu0 0.0
          %3289 = vmatpush1.msra.mxu0 0.0
          %3290 = vmatprep.subr.mxu0 0.0
          %3291 = vmatpush1.msra.mxu0 0.0
          %3292 = vmatprep.subr.mxu0 0.0
          %3293 = vmatpush1.msra.mxu0 0.0
          %3294 = vmatprep.mubr.f32.mxu0 0.0
          %3295 = vmatmul.mubr.f32.gmra.mrb[0].mxu0 %v3228
          %v3296 = vpop.f32.mrb[0].mxu0
          %v3297 = vadd.f32 %v3224, %v3296
          %v3298 = vpop.f32.mrb[0].mxu0
          %3299 = vdwg.mxu0
          %v3300 = vadd.f32 %v3297, %v679
          %v3301 = vxor.u32 %v3300, 2147483648
          %v3302 = vmul.f32 %v3301, 1.442695
          %v3303 = vpow.pop %v3302
          %v3304 = vadd.f32 %v3303, 1.0
          %v3305 = vrcp.pop %v3304
          %v3306 = vmul.f32 1.0, %v3305
          %v3307 = vtanh.pop %v3300
          %v3308 = vmul.f32 %v3306, %v2953
          %3310 = vrot.lane.b32.xlu0 %v3307, 64
          %v3311 = vpop.permute.xlu0 %3310
          %v3313 = vmul.f32 %v3306, %v3311
          %3315 = vrot.lane.b32.xlu0 %v3313, 32
          %v3316 = vpop.permute.xlu0 %3315
          %v3318 = vadd.f32 %v3308, %v3316
          %v3319 = vtanh.pop %v3318
          %3321 = vrot.lane.b32.xlu0 %v3319, 64
          %v3322 = vpop.permute.xlu0 %3321
          %v3324 = vmul.f32 %v3306, %v3322
          %v3325 = vsel %vm3135, %v3324, %v2952
          %v3326 = vsel %vm3135, %v3318, %v2953
          %v3327 = vsel %vm3135, %v3324, 0.0
          %v3330 = vunpack.c.l.s4 1966171168
          %v3331 = vunpack.c.0.s8 %v3330
          %v3332 = vlaneseq
          %v3333 = vshrl.u32 %v3332, 7
          %v3334 = vsub.s32 %v3331, %v3333
          %v3335 = vrot.slane %v3327, %v3334
          %v3336 = vcombine.high %v3335, %v3335
          %v3338 = vunpack.c.l.s4 1966171168
          %v3339 = vunpack.c.0.s8 %v3338
          %v3340 = vlaneseq
          %v3341 = vshrl.u32 %v3340, 7
          %v3342 = vsub.s32 %v3339, %v3341
          %v3343 = vrot.slane %v3335, %v3342
          %v3345 = vunpack.c.l.s4 1966171168
          %v3346 = vunpack.c.0.s8 %v3345
          %v3347 = vlaneseq
          %v3348 = vshrl.u32 %v3347, 7
          %v3349 = vsub.s32 %v3346, %v3348
          %v3350 = vrot.slane %v3336, %v3349
          %v3351 = vlaneseq
          %v3352 = vshrl.u32 %v3351, 7
          %v3353 = vsub.s32 0, %v3352
          %v3354 = vrot.slane %v3343, %v3353
          %v3355 = vlaneseq
          %v3356 = vshrl.u32 %v3355, 7
          %v3357 = vsub.s32 0, %v3356
          %v3358 = vrot.slane %v3350, %v3357
          %3359 = vrot.lane.b32.xlu0 %v3354, 32
          %v3360 = vpop.permute.xlu0 %3359
          %3361 = vrot.lane.b32.xlu0 %v3358, 32
          %v3362 = vpop.permute.xlu0 %3361
          %3365 = vst.msk [vmem:[%s318 + $0x7] sm:$0x1] %vm753, %v3360
          %3366 = vst.msk [vmem:[%s318 + $0xf] sm:$0x1] %vm753, %v3362
          %vm3367 = vcmask 254976
          %3368 = vst.msk [vmem:[#allocation2] sm:$0x3] %vm3367, %v3143
          %3369 = vst.msk [vmem:[#allocation3] sm:$0x3] %vm3367, %v3151
          %3371 = vrot.lane.b32.xlu0 %v3325, 32
          %v3372 = vpop.permute.xlu0 %3371
          %3374 = vst.msk [vmem:[%s362] sm:$0x3] %vm3367, %v3372
          %3376 = vrot.lane.b32.xlu0 %v3326, 96
          %v3377 = vpop.permute.xlu0 %3376
          %3379 = vst.msk [vmem:[%s365] sm:$0x3] %vm3367, %v3377
        $region64: #{tpu_custom_call.1} parent=39 // pred_fallthru
          _
        %p3380 = scmp.eq.s32.totalorder %s29, 2
        // Predicated region
        $region65: #{tpu_custom_call.1} parent=39 // pred_check
          %p3381 = pneg %p3380
        $region66: #{tpu_custom_call.1} parent=39 // pred_check_branch
          %3383 = sbr.rel (%p3381) target = $region68
        $region67: #{tpu_custom_call.1} parent=39 // pred_region
          %v3384 = vld [vmem:[#allocation2] sm:$0x3]
          %v3385 = vld [vmem:[#allocation2 + $0x2] sm:$0x3]
          %vm3386 = vcmask 254976
          %3387 = vst.msk [vmem:[#allocation13] sm:$0x3] %vm3386, %v3384
          %3388 = vst.msk [vmem:[#allocation13 + $0x2] sm:$0x3] %vm3386, %v3385
          %v3389 = vld [vmem:[#allocation3] sm:$0x3]
          %v3390 = vld [vmem:[#allocation3 + $0x2] sm:$0x3]
          %3391 = vst.msk [vmem:[#allocation15] sm:$0x3] %vm3386, %v3389
          %3392 = vst.msk [vmem:[#allocation15 + $0x2] sm:$0x3] %vm3386, %v3390
        $region68: #{tpu_custom_call.1} parent=39 // pred_fallthru
          _
        %s3393 = sand.u32 %s147, 1
        %s3394 = scalar_lea.sflag [#allocation8], %s3393
        %s3395 = sand.u32 %s147, 1
        %s3396 = smul.addr %s3395, 16
        %s3397 = scalar_lea.vmem [#allocation12], %s3396
        // Predicated region
        $region69: #{tpu_custom_call.1} parent=39 // pred_check
          %p3398 = pneg %p157
        $region70: #{tpu_custom_call.1} parent=39 // pred_check_branch
          %3400 = sbr.rel (%p3398) target = $region72
        $region71: #{tpu_custom_call.1} parent=39 // pred_region
          %s3402 = ssub.s32 256, 256
          %3403 = vsyncadd %s3394, %s3402
          %s3404 = smul.addr %s29, 128
          %s3405 = scalar_lea.hbm %s6, %s3404
          %s3406 = sshll.u32 %s3397, 4
          %s3407 = int_to_ptr.vmem [resolvable:$true] %s3406
          %3412 = dma.vmem_to_hbm [thread:$0]  %s3407, 256, %s3405, %s3394, 128, 384, 8
        $region72: #{tpu_custom_call.1} parent=39 // pred_fallthru
          _
        // Predicated region
        $region73: #{tpu_custom_call.1} parent=39 // pred_check
          %p3413 = pneg %p178
        $region74: #{tpu_custom_call.1} parent=39 // pred_check_branch
          %3415 = sbr.rel (%p3413) target = $region76
        $region75: #{tpu_custom_call.1} parent=39 // pred_region
          %s3417 = ssub.s32 64, 64
          %3418 = vsyncadd [#allocation14], %s3417
          %s3419 = sshll.u32 [#allocation13], 4
          %s3420 = int_to_ptr.vmem [resolvable:$true] %s3419
          %3425 = dma.vmem_to_hbm [thread:$0]  %s3420, 64, %s7, [#allocation14], 32, 32, 2
        $region76: #{tpu_custom_call.1} parent=39 // pred_fallthru
          _
        // Predicated region
        $region77: #{tpu_custom_call.1} parent=39 // pred_check
          %p3426 = pneg %p199
        $region78: #{tpu_custom_call.1} parent=39 // pred_check_branch
          %3428 = sbr.rel (%p3426) target = $region80
        $region79: #{tpu_custom_call.1} parent=39 // pred_region
          %s3430 = ssub.s32 64, 64
          %3431 = vsyncadd [#allocation14], %s3430
          %s3432 = sshll.u32 [#allocation15], 4
          %s3433 = int_to_ptr.vmem [resolvable:$true] %s3432
          %3438 = dma.vmem_to_hbm [thread:$0]  %s3433, 64, %s8, [#allocation14], 32, 32, 2
        $region80: #{tpu_custom_call.1} parent=39 // pred_fallthru
          _
        // Predicated region
        $region81: #{tpu_custom_call.1} parent=39 // pred_check
          %p3439 = pneg %p178
        $region82: #{tpu_custom_call.1} parent=39 // pred_check_branch
          %3441 = sbr.rel (%p3439) target = $region84
        $region83: #{tpu_custom_call.1} parent=39 // pred_region
          %3442 = dma.done [#allocation14], 64
        $region84: #{tpu_custom_call.1} parent=39 // pred_fallthru
          _
        // Predicated region
        $region85: #{tpu_custom_call.1} parent=39 // pred_check
          %p3443 = pneg %p199
        $region86: #{tpu_custom_call.1} parent=39 // pred_check_branch
          %3445 = sbr.rel (%p3443) target = $region88
        $region87: #{tpu_custom_call.1} parent=39 // pred_region
          %3446 = dma.done [#allocation14], 64
        $region88: #{tpu_custom_call.1} parent=39 // pred_fallthru
          _
      $region40: #{tpu_custom_call.1} parent=5 // pred_fallthru
        _
      %p3447 = scmp.le.s32.totalorder 2, %s24
      // Predicated region
      $region89: #{tpu_custom_call.1} parent=5 // pred_check
        %p3448 = pneg %p3447
      $region90: #{tpu_custom_call.1} parent=5 // pred_check_branch
        %3450 = sbr.rel (%p3448) target = $region92
      $region91: #{tpu_custom_call.1} parent=5 // pred_region
        %s3451 = ssub.s32 %s24, 2
        // Predicated region
        $region93: #{tpu_custom_call.1} parent=91 // pred_check
          %p3452 = pneg %p163
        $region94: #{tpu_custom_call.1} parent=91 // pred_check_branch
          %3454 = sbr.rel (%p3452) target = $region96
        $region95: #{tpu_custom_call.1} parent=91 // pred_region
          %s3455 = sand.u32 %s148, 1
          %s3456 = scalar_lea.sflag [#allocation8], %s3455
          %s3457 = sand.u32 %s148, 1
          %s3458 = smul.addr %s3457, 16
          %s3459 = scalar_lea.vmem [#allocation12], %s3458
          %3460 = dma.done %s3456, 256
        $region96: #{tpu_custom_call.1} parent=91 // pred_fallthru
          _
      $region92: #{tpu_custom_call.1} parent=5 // pred_fallthru
        _
    $region6: #{tpu_custom_call.1} parent=1 // loop_footer
      %s28 = sadd.s32 1, %s24
    $region7: #{tpu_custom_call.1} parent=1 // loop_footer_branch
      %23 = sbr.rel target = $region3
    $region8: #{tpu_custom_call.1} parent=1 // loop_exit
      _
    %3461 = vsyncpa [#allocation7], 1
    %s3462 = scalar_lea.sflag [#allocation7], 1
    %3463 = vsyncpa %s3462, 1
    %3464 = vsyncpa [#allocation10], 1
    %3465 = vsyncpa [#allocation8], 1
    %s3466 = scalar_lea.sflag [#allocation8], 1
    %3467 = vsyncpa %s3466, 1
    %3468 = vsyncpa [#allocation14], 1

</llo_original>
